<compile_context>
chip_gen: v7x
topology: tpu7x:2x2x1
jax: 0.10.0
libtpu: 0.0.40
codegen_flags: <defaults>
</compile_context>

<pallas_src>
import functools

import jax
import jax.numpy as jnp
from jax.experimental import pallas as pl
from jax.experimental.pallas import tpu as pltpu

LANE = 128
MLP_DTYPE = jnp.bfloat16  # MXU-native operand dtype for the MLP matmuls


def _round_up(n, m):
    return ((n + m - 1) // m) * m


def nfm_kernel(x_ref, emb_ref, w1_ref, b1_ref, w2_ref, b2_ref, w3_ref, bias_ref,
               out_ref, *, lin_col):
    x = x_ref[...]        # (TB, D) f32
    emb = emb_ref[...]    # (D, Ep) f32; column `lin_col` carries the linear weight

    # FM bilinear term: 0.5 * ((x E)^2 - (x^2)(E^2)).  Kept entirely in f32
    # (difference of near-equal quantities).  emb**2 is recomputed here from the
    # resident block instead of DMAing a second precomputed array.
    x_embed = jnp.dot(x, emb, preferred_element_type=jnp.float32)             # (TB, Ep)
    sq_embed = jnp.dot(x * x, emb * emb, preferred_element_type=jnp.float32)  # (TB, Ep)
    bi = 0.5 * (x_embed * x_embed - sq_embed)                                 # (TB, Ep)

    # Linear term rides along for free in padded column `lin_col` of x @ emb_p.
    linear_out = x_embed[:, lin_col:lin_col + 1]                              # (TB, 1)

    # MLP: Linear -> ReLU -> Dropout(identity) -> Linear -> ReLU -> Linear.
    # bf16 MXU operands, f32 accumulation; biases / ReLU in f32.
    # TODO(synk): training-mode dropout (p=0.5) not implemented; eval semantics.
    h1 = jnp.maximum(
        jnp.dot(bi.astype(w1_ref.dtype), w1_ref[...],
                preferred_element_type=jnp.float32) + b1_ref[...], 0.0)
    h2 = jnp.maximum(
        jnp.dot(h1.astype(w2_ref.dtype), w2_ref[...],
                preferred_element_type=jnp.float32) + b2_ref[...], 0.0)

    # Final 1-wide projection: VPU multiply + lane reduce (avoids an N=1 matmul).
    deep_out = jnp.sum(h2 * w3_ref[...], axis=-1, keepdims=True)              # (TB, 1)

    logits = linear_out + deep_out + bias_ref[0]   # bias_ref = blin + b3 (SMEM scalar)
    out_ref[...] = jax.nn.sigmoid(logits).astype(out_ref.dtype)


def _pick_tb(batch, input_dim, max_tile=2048, vmem_budget=40 * 2**20):
    """Batch tile: as big as possible (few grid steps), sized against the smallest
    VMEM (v7x: 64 MiB); keep >= 2 parallel grid steps only on dual-TC v7x."""
    bp = _round_up(max(batch, LANE), LANE)
    # per-row VMEM: double-buffered x rows + a handful of live (row, 128) f32 temps
    per_row = 2 * input_dim * 4 + 6 * LANE * 4
    cap = max(LANE, (vmem_budget // per_row) // LANE * LANE)
    tb = min(max_tile, bp, cap)
    try:
        kind = jax.devices()[0].device_kind.lower()
        dual_tc = ("v7" in kind) or ("7x" in kind)
    except Exception:
        dual_tc = False
    if dual_tc and bp >= 2 * LANE:
        tb = min(tb, max(LANE, (bp // 2 // LANE) * LANE))
    return tb


def _buffered_one_supported():
    """Probe whether this jax build accepts pipeline_mode=pl.Buffered(1)."""
    try:
        def _copy(x_ref, o_ref):
            o_ref[...] = x_ref[...]

        f = pl.pallas_call(
            _copy,
            out_shape=jax.ShapeDtypeStruct((8, LANE), jnp.float32),
            grid=(1,),
            in_specs=[pl.BlockSpec((8, LANE), lambda i: (0, 0),
                                   pipeline_mode=pl.Buffered(1))],
            out_specs=pl.BlockSpec((8, LANE), lambda i: (0, 0)),
        )
        jax.block_until_ready(f(jnp.zeros((8, LANE), jnp.float32)))
        return True
    except Exception:
        return False


@functools.partial(jax.jit, static_argnames=("tb", "single_buffer"))
def nfm_forward(x, params, tb=1024, single_buffer=True):
    assert tb % LANE == 0 and tb > 0, "tb must be a positive multiple of 128"
    emb, wlin, blin, w1, b1, w2, b2, w3, b3 = params
    B, D = x.shape
    E = emb.shape[1]
    H1 = w1.shape[1]
    H2 = w2.shape[1]

    Ep = _round_up(E + 1, LANE)   # +1: a spare padded column carries the linear weight
    H1p = _round_up(H1, LANE)
    H2p = _round_up(H2, LANE)
    lin_col = E

    # Zero-pad narrow feature dims to full 128-lane width (math-identical: padded
    # rows/cols are zero and stay zero through ReLU).  Column E of emb_p holds the
    # linear weight; row E of w1_p is zero so the junk bilinear value in that
    # column never reaches the MLP.
    emb_p = (jnp.zeros((D, Ep), jnp.float32)
             .at[:, :E].set(emb)
             .at[:, lin_col].set(wlin[:, 0]))
    w1_p = jnp.zeros((Ep, H1p), MLP_DTYPE).at[:E, :H1].set(w1.astype(MLP_DTYPE))
    b1_p = jnp.zeros((1, H1p), jnp.float32).at[:, :H1].set(b1)
    w2_p = jnp.zeros((H1p, H2p), MLP_DTYPE).at[:H1, :H2].set(w2.astype(MLP_DTYPE))
    b2_p = jnp.zeros((1, H2p), jnp.float32).at[:, :H2].set(b2)
    w3_row = jnp.zeros((1, H2p), jnp.float32).at[:, :H2].set(w3.T)
    # blin and b3 are both added to the logit right before the sigmoid: fuse into
    # one scalar and deliver it on the SMEM/scalar path.
    bias_scalar = jnp.reshape(blin[0, 0] + b3[0, 0], (1,)).astype(jnp.float32)

    # Pad batch to a multiple of the batch tile (padded rows are zeros; sliced off).
    Bp = _round_up(B, tb)
    x_p = x if Bp == B else jnp.zeros((Bp, D), x.dtype).at[:B].set(x)
    num_tiles = Bp // tb

    if single_buffer:
        def resident(shape):
            # Constant index_map -> fetched once; single-buffer to avoid a useless
            # second VMEM copy of every weight.
            return pl.BlockSpec(shape, lambda i: tuple(0 for _ in shape),
                                pipeline_mode=pl.Buffered(1))
    else:
        def resident(shape):
            return pl.BlockSpec(shape, lambda i: tuple(0 for _ in shape))

    # Explicit VMEM limit (scoped default must not silently cap the tile); sized
    # with headroom but kept under v7x's 64 MiB physical VMEM.
    weight_bytes = (D * Ep + Ep * H1p + H1p + H1p * H2p + H2p + H2p) * 4
    stream_bytes = 2 * (tb * D * 4 + tb * 4)
    live_bytes = 6 * tb * max(Ep, H1p, H2p) * 4
    vmem_limit = int(min(max(2 * (weight_bytes + stream_bytes + live_bytes),
                             16 * 2**20), 48 * 2**20))

    kernel = functools.partial(nfm_kernel, lin_col=lin_col)

    out = pl.pallas_call(
        kernel,
        out_shape=jax.ShapeDtypeStruct((Bp, 1), jnp.float32),
        grid_spec=pltpu.PrefetchScalarGridSpec(
            num_scalar_prefetch=0,
            grid=(num_tiles,),
            in_specs=[
                pl.BlockSpec((tb, D), lambda i: (i, 0)),        # x: tiled over batch
                resident((D, Ep)),                               # emb (+ folded wlin)
                resident((Ep, H1p)),                             # w1 (bf16)
                resident((1, H1p)),                              # b1
                resident((H1p, H2p)),                            # w2 (bf16)
                resident((1, H2p)),                              # b2
                resident((1, H2p)),                              # w3 as a row
                pl.BlockSpec(memory_space=pltpu.MemorySpace.SMEM),  # fused blin+b3
            ],
            out_specs=pl.BlockSpec((tb, 1), lambda i: (i, 0)),
        ),
        compiler_params=pltpu.CompilerParams(
            dimension_semantics=("parallel",),
            vmem_limit_bytes=vmem_limit,
        ),
    )(x_p, emb_p, w1_p, b1_p, w2_p, b2_p, w3_row, bias_scalar)

    return out[:B]


def init_params(key, input_dim, embedding_dim=10, hidden_dims=(64, 32)):
    """Deterministic parameter init matching the PyTorch module's shapes."""
    keys = jax.random.split(key, 10)

    emb = jax.random.normal(keys[0], (input_dim, embedding_dim), jnp.float32)

    def linear_init(kw, kb, fan_in, fan_out):
        # PyTorch nn.Linear default: U(-1/sqrt(fan_in), 1/sqrt(fan_in))
        bound = 1.0 / jnp.sqrt(jnp.float32(fan_in))
        w = jax.random.uniform(kw, (fan_in, fan_out), jnp.float32, -bound, bound)
        b = jax.random.uniform(kb, (1, fan_out), jnp.float32, -bound, bound)
        return w, b

    wlin, blin = linear_init(keys[1], keys[2], input_dim, 1)
    w1, b1 = linear_init(keys[3], keys[4], embedding_dim, hidden_dims[0])
    w2, b2 = linear_init(keys[5], keys[6], hidden_dims[0], hidden_dims[1])
    w3, b3 = linear_init(keys[7], keys[8], hidden_dims[1], 1)
    return (emb, wlin, blin, w1, b1, w2, b2, w3, b3)


def nfm_reference(x, params):
    """Pure-JAX (f32) reference mirroring the PyTorch forward."""
    emb, wlin, blin, w1, b1, w2, b2, w3, b3 = params
    linear_out = x @ wlin + blin
    x_embed = x @ emb
    bi = 0.5 * (x_embed ** 2 - (x * x) @ (emb ** 2))
    h1 = jnp.maximum(bi @ w1 + b1, 0.0)
    h2 = jnp.maximum(h1 @ w2 + b2, 0.0)
    deep = h2 @ w3 + b3
    return jax.nn.sigmoid(linear_out + deep)


if __name__ == "__main__":
    key = jax.random.PRNGKey(0)
    k_x, k_p = jax.random.split(key)

    B, INPUT_DIM, EMB_DIM = 512, 16, 10
    HIDDEN = (64, 32)

    x = jax.random.normal(k_x, (B, INPUT_DIM), jnp.float32)
    params = init_params(k_p, INPUT_DIM, EMB_DIM, HIDDEN)

    tb = _pick_tb(B, INPUT_DIM)                 # one tile on v5e/v6e, >=2 on v7x
    single_buffer = _buffered_one_supported()   # Buffered(1) probe with fallback

    out = nfm_forward(x, params, tb=tb, single_buffer=single_buffer)
    out = jax.block_until_ready(out)

    ref = nfm_reference(x, params)
    assert out.shape == (B, 1), out.shape
    # Tolerance loosened from 1e-5 because the MLP matmuls use bf16 MXU operands
    # (f32 accumulation); the FM difference-of-squares itself stays in f32.
    assert jnp.allclose(out, ref, atol=2e-2, rtol=2e-2), (
        f"max abs err {jnp.max(jnp.abs(out - ref))}"
    )

    print("KERNEL_OK")
</pallas_src>

<mosaic_0001>
module attributes {stable_mosaic.version = 11 : i64} {
  func.func @_copy(%arg0: i32, %arg1: memref<8x128xf32, #tpu.memory_space<vmem>>, %arg2: memref<8x128xf32, #tpu.memory_space<vmem>>) attributes {dimension_semantics = [#tpu.dimension_semantics<arbitrary>], iteration_bounds = array<i64: 1>, scalar_prefetch = 0 : i64, scratch_operands = 0 : i64, tpu.core_type = #tpu.core_type<tc>, window_params = [{pipeline_mode = #tpu.pipeline_mode<synchronous>, transform_indices = @transform_0, window_bounds = array<i64: 8, 128>}, {pipeline_mode = #tpu.pipeline_mode<synchronous>, transform_indices = @transform_1, window_bounds = array<i64: 8, 128>}]} {
    %c0 = arith.constant 0 : index
    %c0_0 = arith.constant 0 : index
    %0 = vector.load %arg1[%c0, %c0_0] : memref<8x128xf32, #tpu.memory_space<vmem>>, vector<8x128xf32>
    %c0_1 = arith.constant 0 : index
    %c0_2 = arith.constant 0 : index
    %1 = vector.load %arg2[%c0_1, %c0_2] : memref<8x128xf32, #tpu.memory_space<vmem>>, vector<8x128xf32>
    tpu.vector_store %arg2[%c0_1, %c0_2], %0 {strides = array<i32>} : memref<8x128xf32, #tpu.memory_space<vmem>>, vector<8x128xf32>,
    return
  }
  func.func @transform_0(%arg0: i32) -> (i32, i32) {
    %c0_i32 = arith.constant 0 : i32
    %c0_i32_0 = arith.constant 0 : i32
    %c0_i32_1 = arith.constant 0 : i32
    return %c0_i32, %c0_i32_0 : i32, i32
  }
  func.func @transform_1(%arg0: i32) -> (i32, i32) {
    %c0_i32 = arith.constant 0 : i32
    %c0_i32_0 = arith.constant 0 : i32
    %c0_i32_1 = arith.constant 0 : i32
    return %c0_i32, %c0_i32_0 : i32, i32
  }
}

module attributes {stable_mosaic.version = 11 : i64} {
  func.func @nfm_kernel(%arg0: i32, %arg1: memref<512x16xf32, #tpu.memory_space<vmem>>, %arg2: memref<16x128xf32, #tpu.memory_space<vmem>>, %arg3: memref<128x128xbf16, #tpu.memory_space<vmem>>, %arg4: memref<1x128xf32, #tpu.memory_space<vmem>>, %arg5: memref<128x128xbf16, #tpu.memory_space<vmem>>, %arg6: memref<1x128xf32, #tpu.memory_space<vmem>>, %arg7: memref<1x128xf32, #tpu.memory_space<vmem>>, %arg8: memref<1xf32, #tpu.memory_space<smem>>, %arg9: memref<512x1xf32, #tpu.memory_space<vmem>>) attributes {dimension_semantics = [#tpu.dimension_semantics<parallel>], iteration_bounds = array<i64: 1>, scalar_prefetch = 0 : i64, scratch_operands = 0 : i64, tpu.core_type = #tpu.core_type<tc>, window_params = [{transform_indices = @transform_0, window_bounds = array<i64: 512, 16>}, {pipeline_mode = #tpu.pipeline_mode<synchronous>, transform_indices = @transform_1, window_bounds = array<i64: 16, 128>}, {pipeline_mode = #tpu.pipeline_mode<synchronous>, transform_indices = @transform_2, window_bounds = array<i64: 128, 128>}, {pipeline_mode = #tpu.pipeline_mode<synchronous>, transform_indices = @transform_3, window_bounds = array<i64: 1, 128>}, {pipeline_mode = #tpu.pipeline_mode<synchronous>, transform_indices = @transform_4, window_bounds = array<i64: 128, 128>}, {pipeline_mode = #tpu.pipeline_mode<synchronous>, transform_indices = @transform_5, window_bounds = array<i64: 1, 128>}, {pipeline_mode = #tpu.pipeline_mode<synchronous>, transform_indices = @transform_6, window_bounds = array<i64: 1, 128>}, {transform_indices = @transform_7, window_bounds = array<i64: 1>}, {transform_indices = @transform_8, window_bounds = array<i64: 512, 1>}]} {
    %c0 = arith.constant 0 : index
    %c0_0 = arith.constant 0 : index
    %0 = vector.load %arg1[%c0, %c0_0] : memref<512x16xf32, #tpu.memory_space<vmem>>, vector<512x16xf32>
    %c0_1 = arith.constant 0 : index
    %c0_2 = arith.constant 0 : index
    %1 = vector.load %arg2[%c0_1, %c0_2] : memref<16x128xf32, #tpu.memory_space<vmem>>, vector<16x128xf32>
    %cst = arith.constant dense<0.000000e+00> : vector<512x128xf32>
    %2 = tpu.matmul %0, %1, %cst {dimension_numbers = #tpu.dot_dimension_numbers<[1], [0], [0], [1], [0, 0, 1, 1], [], []>} : vector<512x16xf32>, vector<16x128xf32>, vector<512x128xf32> -> vector<512x128xf32>
    %3 = arith.mulf %0, %0 : vector<512x16xf32>
    %4 = arith.mulf %1, %1 : vector<16x128xf32>
    %cst_3 = arith.constant dense<0.000000e+00> : vector<512x128xf32>
    %5 = tpu.matmul %3, %4, %cst_3 {dimension_numbers = #tpu.dot_dimension_numbers<[1], [0], [0], [1], [0, 0, 1, 1], [], []>} : vector<512x16xf32>, vector<16x128xf32>, vector<512x128xf32> -> vector<512x128xf32>
    %6 = arith.mulf %2, %2 : vector<512x128xf32>
    %7 = arith.subf %6, %5 : vector<512x128xf32>
    %cst_4 = arith.constant 5.000000e-01 : f32
    %8 = vector.broadcast %cst_4 : f32 to vector<512x128xf32>
    %9 = arith.mulf %8, %7 : vector<512x128xf32>
    %10 = vector.extract_strided_slice %2 {offsets = [0, 10], sizes = [512, 1], strides = [1, 1]} : vector<512x128xf32> to vector<512x1xf32>
    %11 = arith.truncf %9 : vector<512x128xf32> to vector<512x128xbf16>
    %c0_5 = arith.constant 0 : index
    %c0_6 = arith.constant 0 : index
    %12 = vector.load %arg3[%c0_5, %c0_6] : memref<128x128xbf16, #tpu.memory_space<vmem>>, vector<128x128xbf16>
    %cst_7 = arith.constant dense<0.000000e+00> : vector<512x128xf32>
    %13 = tpu.matmul %11, %12, %cst_7 {dimension_numbers = #tpu.dot_dimension_numbers<[1], [0], [0], [1], [0, 0, 1, 1], [], []>} : vector<512x128xbf16>, vector<128x128xbf16>, vector<512x128xf32> -> vector<512x128xf32>
    %c0_8 = arith.constant 0 : index
    %c0_9 = arith.constant 0 : index
    %14 = vector.load %arg4[%c0_8, %c0_9] : memref<1x128xf32, #tpu.memory_space<vmem>>, vector<1x128xf32>
    %15 = vector.broadcast %14 : vector<1x128xf32> to vector<512x128xf32>
    %16 = arith.addf %13, %15 : vector<512x128xf32>
    %cst_10 = arith.constant 0.000000e+00 : f32
    %17 = vector.broadcast %cst_10 : f32 to vector<512x128xf32>
    %18 = arith.maximumf %16, %17 : vector<512x128xf32>
    %19 = arith.truncf %18 : vector<512x128xf32> to vector<512x128xbf16>
    %c0_11 = arith.constant 0 : index
    %c0_12 = arith.constant 0 : index
    %20 = vector.load %arg5[%c0_11, %c0_12] : memref<128x128xbf16, #tpu.memory_space<vmem>>, vector<128x128xbf16>
    %cst_13 = arith.constant dense<0.000000e+00> : vector<512x128xf32>
    %21 = tpu.matmul %19, %20, %cst_13 {dimension_numbers = #tpu.dot_dimension_numbers<[1], [0], [0], [1], [0, 0, 1, 1], [], []>} : vector<512x128xbf16>, vector<128x128xbf16>, vector<512x128xf32> -> vector<512x128xf32>
    %c0_14 = arith.constant 0 : index
    %c0_15 = arith.constant 0 : index
    %22 = vector.load %arg6[%c0_14, %c0_15] : memref<1x128xf32, #tpu.memory_space<vmem>>, vector<1x128xf32>
    %23 = vector.broadcast %22 : vector<1x128xf32> to vector<512x128xf32>
    %24 = arith.addf %21, %23 : vector<512x128xf32>
    %cst_16 = arith.constant 0.000000e+00 : f32
    %25 = vector.broadcast %cst_16 : f32 to vector<512x128xf32>
    %26 = arith.maximumf %24, %25 : vector<512x128xf32>
    %c0_17 = arith.constant 0 : index
    %c0_18 = arith.constant 0 : index
    %27 = vector.load %arg7[%c0_17, %c0_18] : memref<1x128xf32, #tpu.memory_space<vmem>>, vector<1x128xf32>
    %28 = vector.broadcast %27 : vector<1x128xf32> to vector<512x128xf32>
    %29 = arith.mulf %26, %28 : vector<512x128xf32>
    %cst_19 = arith.constant dense<0.000000e+00> : vector<512xf32>
    %30 = vector.multi_reduction <add>, %29, %cst_19 [1] : vector<512x128xf32> to vector<512xf32>
    %31 = vector.shape_cast %30 : vector<512xf32> to vector<512x1xf32>
    %32 = arith.addf %10, %31 : vector<512x1xf32>
    %c0_20 = arith.constant 0 : index
    %33 = memref.load %arg8[%c0_20] : memref<1xf32, #tpu.memory_space<smem>>
    %34 = vector.broadcast %33 : f32 to vector<512x1xf32>
    %35 = arith.addf %32, %34 : vector<512x1xf32>
    %36 = arith.negf %35 : vector<512x1xf32>
    %37 = math.exp %36 : vector<512x1xf32>
    %cst_21 = arith.constant 1.000000e+00 : f32
    %38 = vector.broadcast %cst_21 : f32 to vector<512x1xf32>
    %39 = arith.addf %38, %37 : vector<512x1xf32>
    %40 = arith.divf %38, %39 : vector<512x1xf32>
    %c0_22 = arith.constant 0 : index
    %c0_23 = arith.constant 0 : index
    %41 = vector.load %arg9[%c0_22, %c0_23] : memref<512x1xf32, #tpu.memory_space<vmem>>, vector<512x1xf32>
    tpu.vector_store %arg9[%c0_22, %c0_23], %40 {strides = array<i32>} : memref<512x1xf32, #tpu.memory_space<vmem>>, vector<512x1xf32>,
    return
  }
  func.func @transform_0(%arg0: i32) -> (i32, i32) {
    %c0_i32 = arith.constant 0 : i32
    %c0_i32_0 = arith.constant 0 : i32
    return %arg0, %c0_i32 : i32, i32
  }
  func.func @transform_1(%arg0: i32) -> (i32, i32) {
    %c0_i32 = arith.constant 0 : i32
    %c0_i32_0 = arith.constant 0 : i32
    %c0_i32_1 = arith.constant 0 : i32
    return %c0_i32, %c0_i32_0 : i32, i32
  }
  func.func @transform_2(%arg0: i32) -> (i32, i32) {
    %c0_i32 = arith.constant 0 : i32
    %c0_i32_0 = arith.constant 0 : i32
    %c0_i32_1 = arith.constant 0 : i32
    return %c0_i32, %c0_i32_0 : i32, i32
  }
  func.func @transform_3(%arg0: i32) -> (i32, i32) {
    %c0_i32 = arith.constant 0 : i32
    %c0_i32_0 = arith.constant 0 : i32
    %c0_i32_1 = arith.constant 0 : i32
    return %c0_i32, %c0_i32_0 : i32, i32
  }
  func.func @transform_4(%arg0: i32) -> (i32, i32) {
    %c0_i32 = arith.constant 0 : i32
    %c0_i32_0 = arith.constant 0 : i32
    %c0_i32_1 = arith.constant 0 : i32
    return %c0_i32, %c0_i32_0 : i32, i32
  }
  func.func @transform_5(%arg0: i32) -> (i32, i32) {
    %c0_i32 = arith.constant 0 : i32
    %c0_i32_0 = arith.constant 0 : i32
    %c0_i32_1 = arith.constant 0 : i32
    return %c0_i32, %c0_i32_0 : i32, i32
  }
  func.func @transform_6(%arg0: i32) -> (i32, i32) {
    %c0_i32 = arith.constant 0 : i32
    %c0_i32_0 = arith.constant 0 : i32
    %c0_i32_1 = arith.constant 0 : i32
    return %c0_i32, %c0_i32_0 : i32, i32
  }
  func.func @transform_7(%arg0: i32) -> i32 {
    %c0_i32 = arith.constant 0 : i32
    %c0_i32_0 = arith.constant 0 : i32
    return %c0_i32 : i32
  }
  func.func @transform_8(%arg0: i32) -> (i32, i32) {
    %c0_i32 = arith.constant 0 : i32
    %c0_i32_0 = arith.constant 0 : i32
    return %arg0, %c0_i32 : i32, i32
  }
}

</mosaic_0001>

<llo_original>
// kernel: tpu_custom_call.1
$region0: #{tpu_custom_call.1}
  #allocation0 [shape = 'u32[]', space=smem, size = 0x4, offset = 0x4, fixed_abs, tag = 'smem constant byte address 0x4 - core index']
  #allocation1 [shape = 'u32[144,128]{1,0:T(1,128)}', space=vmem, size = 0x12000, scoped, tag = 'internal scratch']
  %s0 = inlined_call_operand.hbm [shape: f32[8,128], index: 0, kind: input, shape index: {}]
  %s1 = inlined_call_operand.hbm [shape: f32[8,128], index: 1, kind: output, shape index: {}]
  %s2 = sld [smem:[#allocation0]]
  $region18: #{tpu_custom_call.1} parent=0
    _
  %s4 = ssub.s32 1, %s2
  %s5 = scalar_select 0, %s4, %s2
  $region1: #{tpu_custom_call.1} parent=0
    #allocation2 [shape = 'u8[4096]{0}', space=vmem, size = 0x1000, scoped, tag = 'input window, operand 0, single buffered']
    #allocation3 [shape = 's32[1]{0}', space=sflag, size = 0x4, scoped, tag = 'scoped memory for tpu_custom_call.1']
    #allocation4 [shape = 's32[1]{0}', space=sflag, size = 0x4, scoped, tag = 'scoped memory for tpu_custom_call.1']
    #allocation5 [shape = 'u8[4096]{0}', space=vmem, size = 0x1000, scoped, tag = 'output window, operand 0, single buffered']
    %6 = vsyncpa [#allocation3], 0
    %7 = vsyncpa [#allocation4], 0
    // Predicated region
    $region2: #{tpu_custom_call.1} parent=1 // pred_check
      _
    $region3: #{tpu_custom_call.1} parent=1 // pred_check_branch
      %9 = sbr.rel (0) target = $region5
    $region4: #{tpu_custom_call.1} parent=1 // pred_region
      %s11 = ssub.s32 128, 128
      %12 = vsyncadd [#allocation3], %s11
      %s14 = sshll.u32 [#allocation2], 4
      %s15 = int_to_ptr.vmem [resolvable:$true] %s14
      %17 = dma.hbm_to_vmem [thread:$0]  %s0, 128, %s15, [#allocation3]
    $region5: #{tpu_custom_call.1} parent=1 // pred_fallthru
      _
    // Predicated region
    $region6: #{tpu_custom_call.1} parent=1 // pred_check
      _
    $region7: #{tpu_custom_call.1} parent=1 // pred_check_branch
      %19 = sbr.rel (0) target = $region9
    $region8: #{tpu_custom_call.1} parent=1 // pred_region
      %20 = dma.done [#allocation3], 128
    $region9: #{tpu_custom_call.1} parent=1 // pred_fallthru
      _
    %v21 = vld [vmem:[#allocation2] sm:$0xff]
    %22 = vst [vmem:[#allocation5] sm:$0xff] %v21
    // Predicated region
    $region10: #{tpu_custom_call.1} parent=1 // pred_check
      _
    $region11: #{tpu_custom_call.1} parent=1 // pred_check_branch
      %24 = sbr.rel (0) target = $region13
    $region12: #{tpu_custom_call.1} parent=1 // pred_region
      %s26 = ssub.s32 128, 128
      %27 = vsyncadd [#allocation4], %s26
      %s29 = sshll.u32 [#allocation5], 4
      %s30 = int_to_ptr.vmem [resolvable:$true] %s29
      %32 = dma.vmem_to_hbm [thread:$0]  %s30, 128, %s1, [#allocation4]
    $region13: #{tpu_custom_call.1} parent=1 // pred_fallthru
      _
    // Predicated region
    $region14: #{tpu_custom_call.1} parent=1 // pred_check
      _
    $region15: #{tpu_custom_call.1} parent=1 // pred_check_branch
      %34 = sbr.rel (0) target = $region17
    $region16: #{tpu_custom_call.1} parent=1 // pred_region
      %35 = dma.done [#allocation4], 128
    $region17: #{tpu_custom_call.1} parent=1 // pred_fallthru
      _
    %36 = vsyncpa [#allocation3], 1
    %37 = vsyncpa [#allocation4], 1

// kernel: nfm_forward.1
$region0: #{nfm_forward.1}
  #allocation0 [shape = 'u32[]', space=smem, size = 0x4, offset = 0x4, fixed_abs, tag = 'smem constant byte address 0x4 - core index']
  #allocation1 [shape = 'u32[144,128]{1,0:T(1,128)}', space=vmem, size = 0x12000, scoped, tag = 'internal scratch']
  #allocation2 [shape = 'f32[1]{0:T(128)S(6)}', space=smem, size = 0x200, scoped, tag = 'scoped memory for nfm_forward.1']
  %s0 = inlined_call_operand.vmem [shape: f32[512,16], index: 0, kind: input, shape index: {}]
  %s1 = inlined_call_operand.vmem [shape: f32[16,128], index: 1, kind: input, shape index: {}]
  %s2 = inlined_call_operand.vmem [shape: bf16[128,128], index: 2, kind: input, shape index: {}]
  %s3 = inlined_call_operand.vmem [shape: f32[1,128], index: 3, kind: input, shape index: {}]
  %s4 = inlined_call_operand.vmem [shape: bf16[128,128], index: 4, kind: input, shape index: {}]
  %s5 = inlined_call_operand.vmem [shape: f32[1,128], index: 5, kind: input, shape index: {}]
  %s6 = inlined_call_operand.vmem [shape: f32[1,128], index: 6, kind: input, shape index: {}]
  %s7 = inlined_call_operand.<no memory space> [shape: f32[1], index: 7, kind: input, shape index: {}]
  %s8 = inlined_call_operand.vmem [shape: f32[512,1], index: 8, kind: output, shape index: {}]
  %s9 = sld [smem:[#allocation0]]
  $region42: #{nfm_forward.1} parent=0
    _
  %s11 = ssub.s32 1, %s9
  %s12 = scalar_select 0, %s11, %s9
  %13 = sst [smem:[#allocation2]] %s7
  // Predicated region
  $region2: #{nfm_forward.1} parent=0 // pred_check
    _
  $region3: #{nfm_forward.1} parent=0 // pred_check_branch
    %15 = sbr.rel (0) target = $region5
  $region4: #{nfm_forward.1} parent=0 // pred_region
    _
  $region5: #{nfm_forward.1} parent=0 // pred_fallthru
    _
  // Predicated region
  $region6: #{nfm_forward.1} parent=0 // pred_check
    _
  $region7: #{nfm_forward.1} parent=0 // pred_check_branch
    %17 = sbr.rel (0) target = $region9
  $region8: #{nfm_forward.1} parent=0 // pred_region
    _
  $region9: #{nfm_forward.1} parent=0 // pred_fallthru
    _
  // Predicated region
  $region10: #{nfm_forward.1} parent=0 // pred_check
    _
  $region11: #{nfm_forward.1} parent=0 // pred_check_branch
    %19 = sbr.rel (0) target = $region13
  $region12: #{nfm_forward.1} parent=0 // pred_region
    _
  $region13: #{nfm_forward.1} parent=0 // pred_fallthru
    _
  // Predicated region
  $region14: #{nfm_forward.1} parent=0 // pred_check
    _
  $region15: #{nfm_forward.1} parent=0 // pred_check_branch
    %21 = sbr.rel (0) target = $region17
  $region16: #{nfm_forward.1} parent=0 // pred_region
    _
  $region17: #{nfm_forward.1} parent=0 // pred_fallthru
    _
  // Predicated region
  $region18: #{nfm_forward.1} parent=0 // pred_check
    _
  $region19: #{nfm_forward.1} parent=0 // pred_check_branch
    %23 = sbr.rel (0) target = $region21
  $region20: #{nfm_forward.1} parent=0 // pred_region
    _
  $region21: #{nfm_forward.1} parent=0 // pred_fallthru
    _
  // Predicated region
  $region22: #{nfm_forward.1} parent=0 // pred_check
    _
  $region23: #{nfm_forward.1} parent=0 // pred_check_branch
    %25 = sbr.rel (0) target = $region25
  $region24: #{nfm_forward.1} parent=0 // pred_region
    _
  $region25: #{nfm_forward.1} parent=0 // pred_fallthru
    _
  // Predicated region
  $region26: #{nfm_forward.1} parent=0 // pred_check
    _
  $region27: #{nfm_forward.1} parent=0 // pred_check_branch
    %27 = sbr.rel (0) target = $region29
  $region28: #{nfm_forward.1} parent=0 // pred_region
    _
  $region29: #{nfm_forward.1} parent=0 // pred_fallthru
    _
  // Predicated region
  $region30: #{nfm_forward.1} parent=0 // pred_check
    _
  $region31: #{nfm_forward.1} parent=0 // pred_check_branch
    %29 = sbr.rel (0) target = $region33
  $region32: #{nfm_forward.1} parent=0 // pred_region
    _
  $region33: #{nfm_forward.1} parent=0 // pred_fallthru
    _
  %v31 = vld [vmem:[%s0] sm:$0xff]
  %v32 = vld [vmem:[%s0 + $0x8] sm:$0xff]
  %v33 = vld [vmem:[%s0 + $0x10] sm:$0xff]
  %v34 = vld [vmem:[%s0 + $0x18] sm:$0xff]
  %v35 = vld [vmem:[%s0 + $0x20] sm:$0xff]
  %v36 = vld [vmem:[%s0 + $0x28] sm:$0xff]
  %v37 = vld [vmem:[%s0 + $0x30] sm:$0xff]
  %v38 = vld [vmem:[%s0 + $0x38] sm:$0xff]
  %v39 = vld [vmem:[%s0 + $0x40] sm:$0xff]
  %v40 = vld [vmem:[%s0 + $0x48] sm:$0xff]
  %v41 = vld [vmem:[%s0 + $0x50] sm:$0xff]
  %v42 = vld [vmem:[%s0 + $0x58] sm:$0xff]
  %v43 = vld [vmem:[%s0 + $0x60] sm:$0xff]
  %v44 = vld [vmem:[%s0 + $0x68] sm:$0xff]
  %v45 = vld [vmem:[%s0 + $0x70] sm:$0xff]
  %v46 = vld [vmem:[%s0 + $0x78] sm:$0xff]
  %v47 = vld [vmem:[%s0 + $0x80] sm:$0xff]
  %v48 = vld [vmem:[%s0 + $0x88] sm:$0xff]
  %v49 = vld [vmem:[%s0 + $0x90] sm:$0xff]
  %v50 = vld [vmem:[%s0 + $0x98] sm:$0xff]
  %v51 = vld [vmem:[%s0 + $0xa0] sm:$0xff]
  %v52 = vld [vmem:[%s0 + $0xa8] sm:$0xff]
  %v53 = vld [vmem:[%s0 + $0xb0] sm:$0xff]
  %v54 = vld [vmem:[%s0 + $0xb8] sm:$0xff]
  %v55 = vld [vmem:[%s0 + $0xc0] sm:$0xff]
  %v56 = vld [vmem:[%s0 + $0xc8] sm:$0xff]
  %v57 = vld [vmem:[%s0 + $0xd0] sm:$0xff]
  %v58 = vld [vmem:[%s0 + $0xd8] sm:$0xff]
  %v59 = vld [vmem:[%s0 + $0xe0] sm:$0xff]
  %v60 = vld [vmem:[%s0 + $0xe8] sm:$0xff]
  %v61 = vld [vmem:[%s0 + $0xf0] sm:$0xff]
  %v62 = vld [vmem:[%s0 + $0xf8] sm:$0xff]
  %v63 = vld [vmem:[%s0 + $0x100] sm:$0xff]
  %v64 = vld [vmem:[%s0 + $0x108] sm:$0xff]
  %v65 = vld [vmem:[%s0 + $0x110] sm:$0xff]
  %v66 = vld [vmem:[%s0 + $0x118] sm:$0xff]
  %v67 = vld [vmem:[%s0 + $0x120] sm:$0xff]
  %v68 = vld [vmem:[%s0 + $0x128] sm:$0xff]
  %v69 = vld [vmem:[%s0 + $0x130] sm:$0xff]
  %v70 = vld [vmem:[%s0 + $0x138] sm:$0xff]
  %v71 = vld [vmem:[%s0 + $0x140] sm:$0xff]
  %v72 = vld [vmem:[%s0 + $0x148] sm:$0xff]
  %v73 = vld [vmem:[%s0 + $0x150] sm:$0xff]
  %v74 = vld [vmem:[%s0 + $0x158] sm:$0xff]
  %v75 = vld [vmem:[%s0 + $0x160] sm:$0xff]
  %v76 = vld [vmem:[%s0 + $0x168] sm:$0xff]
  %v77 = vld [vmem:[%s0 + $0x170] sm:$0xff]
  %v78 = vld [vmem:[%s0 + $0x178] sm:$0xff]
  %v79 = vld [vmem:[%s0 + $0x180] sm:$0xff]
  %v80 = vld [vmem:[%s0 + $0x188] sm:$0xff]
  %v81 = vld [vmem:[%s0 + $0x190] sm:$0xff]
  %v82 = vld [vmem:[%s0 + $0x198] sm:$0xff]
  %v83 = vld [vmem:[%s0 + $0x1a0] sm:$0xff]
  %v84 = vld [vmem:[%s0 + $0x1a8] sm:$0xff]
  %v85 = vld [vmem:[%s0 + $0x1b0] sm:$0xff]
  %v86 = vld [vmem:[%s0 + $0x1b8] sm:$0xff]
  %v87 = vld [vmem:[%s0 + $0x1c0] sm:$0xff]
  %v88 = vld [vmem:[%s0 + $0x1c8] sm:$0xff]
  %v89 = vld [vmem:[%s0 + $0x1d0] sm:$0xff]
  %v90 = vld [vmem:[%s0 + $0x1d8] sm:$0xff]
  %v91 = vld [vmem:[%s0 + $0x1e0] sm:$0xff]
  %v92 = vld [vmem:[%s0 + $0x1e8] sm:$0xff]
  %v93 = vld [vmem:[%s0 + $0x1f0] sm:$0xff]
  %v94 = vld [vmem:[%s0 + $0x1f8] sm:$0xff]
  %v95 = vld [vmem:[%s1] sm:$0xff]
  %v96 = vld [vmem:[%s1 + $0x8] sm:$0xff]
  %vm97 = vcmask 130048
  %v99 = vsel %vm97, %v31, 0
  %v102 = vsel %vm97, %v32, 0
  %v105 = vsel %vm97, %v33, 0
  %v108 = vsel %vm97, %v34, 0
  %v111 = vsel %vm97, %v35, 0
  %v114 = vsel %vm97, %v36, 0
  %v117 = vsel %vm97, %v37, 0
  %v120 = vsel %vm97, %v38, 0
  %v123 = vsel %vm97, %v39, 0
  %v126 = vsel %vm97, %v40, 0
  %v129 = vsel %vm97, %v41, 0
  %v132 = vsel %vm97, %v42, 0
  %v135 = vsel %vm97, %v43, 0
  %v138 = vsel %vm97, %v44, 0
  %v141 = vsel %vm97, %v45, 0
  %v144 = vsel %vm97, %v46, 0
  %v147 = vsel %vm97, %v47, 0
  %v150 = vsel %vm97, %v48, 0
  %v153 = vsel %vm97, %v49, 0
  %v156 = vsel %vm97, %v50, 0
  %v159 = vsel %vm97, %v51, 0
  %v162 = vsel %vm97, %v52, 0
  %v165 = vsel %vm97, %v53, 0
  %v168 = vsel %vm97, %v54, 0
  %v171 = vsel %vm97, %v55, 0
  %v174 = vsel %vm97, %v56, 0
  %v177 = vsel %vm97, %v57, 0
  %v180 = vsel %vm97, %v58, 0
  %v183 = vsel %vm97, %v59, 0
  %v186 = vsel %vm97, %v60, 0
  %v189 = vsel %vm97, %v61, 0
  %v192 = vsel %vm97, %v62, 0
  %v195 = vsel %vm97, %v63, 0
  %v198 = vsel %vm97, %v64, 0
  %v201 = vsel %vm97, %v65, 0
  %v204 = vsel %vm97, %v66, 0
  %v207 = vsel %vm97, %v67, 0
  %v210 = vsel %vm97, %v68, 0
  %v213 = vsel %vm97, %v69, 0
  %v216 = vsel %vm97, %v70, 0
  %v219 = vsel %vm97, %v71, 0
  %v222 = vsel %vm97, %v72, 0
  %v225 = vsel %vm97, %v73, 0
  %v228 = vsel %vm97, %v74, 0
  %v231 = vsel %vm97, %v75, 0
  %v234 = vsel %vm97, %v76, 0
  %v237 = vsel %vm97, %v77, 0
  %v240 = vsel %vm97, %v78, 0
  %v243 = vsel %vm97, %v79, 0
  %v246 = vsel %vm97, %v80, 0
  %v249 = vsel %vm97, %v81, 0
  %v252 = vsel %vm97, %v82, 0
  %v255 = vsel %vm97, %v83, 0
  %v258 = vsel %vm97, %v84, 0
  %v261 = vsel %vm97, %v85, 0
  %v264 = vsel %vm97, %v86, 0
  %v267 = vsel %vm97, %v87, 0
  %v270 = vsel %vm97, %v88, 0
  %v273 = vsel %vm97, %v89, 0
  %v276 = vsel %vm97, %v90, 0
  %v279 = vsel %vm97, %v91, 0
  %v282 = vsel %vm97, %v92, 0
  %v285 = vsel %vm97, %v93, 0
  %v288 = vsel %vm97, %v94, 0
  %290 = vmatprep.subr.mxu0 0.0
  %291 = vmatpush1.msra.mxu0 %v95
  %292 = vmatprep.subr.mxu0 0.0
  %293 = vmatpush1.msra.mxu0 %v96
  %294 = vmatprep.subr.mxu0 0.0
  %295 = vmatpush1.msra.mxu0 0.0
  %296 = vmatprep.subr.mxu0 0.0
  %297 = vmatpush1.msra.mxu0 0.0
  %298 = vmatprep.subr.mxu0 0.0
  %299 = vmatpush1.msra.mxu0 0.0
  %300 = vmatprep.subr.mxu0 0.0
  %301 = vmatpush1.msra.mxu0 0.0
  %302 = vmatprep.subr.mxu0 0.0
  %303 = vmatpush1.msra.mxu0 0.0
  %304 = vmatprep.subr.mxu0 0.0
  %305 = vmatpush1.msra.mxu0 0.0
  %306 = vmatprep.subr.mxu0 0.0
  %307 = vmatpush1.msra.mxu0 0.0
  %308 = vmatprep.subr.mxu0 0.0
  %309 = vmatpush1.msra.mxu0 0.0
  %310 = vmatprep.subr.mxu0 0.0
  %311 = vmatpush1.msra.mxu0 0.0
  %312 = vmatprep.subr.mxu0 0.0
  %313 = vmatpush1.msra.mxu0 0.0
  %314 = vmatprep.subr.mxu0 0.0
  %315 = vmatpush1.msra.mxu0 0.0
  %316 = vmatprep.subr.mxu0 0.0
  %317 = vmatpush1.msra.mxu0 0.0
  %318 = vmatprep.subr.mxu0 0.0
  %319 = vmatpush1.msra.mxu0 0.0
  %320 = vmatprep.subr.mxu0 0.0
  %321 = vmatpush1.msra.mxu0 0.0
  %322 = vmatprep.subr.mxu0 0.0
  %323 = vmatpush1.msra.mxu0 0.0
  %324 = vmatprep.subr.mxu0 0.0
  %325 = vmatpush1.msra.mxu0 0.0
  %326 = vmatprep.subr.mxu0 0.0
  %327 = vmatpush1.msra.mxu0 0.0
  %328 = vmatprep.subr.mxu0 0.0
  %329 = vmatpush1.msra.mxu0 0.0
  %330 = vmatprep.subr.mxu0 0.0
  %331 = vmatpush1.msra.mxu0 0.0
  %332 = vmatprep.subr.mxu0 0.0
  %333 = vmatpush1.msra.mxu0 0.0
  %334 = vmatprep.subr.mxu0 0.0
  %335 = vmatpush1.msra.mxu0 0.0
  %336 = vmatprep.subr.mxu0 0.0
  %337 = vmatpush1.msra.mxu0 0.0
  %338 = vmatprep.subr.mxu0 0.0
  %339 = vmatpush1.msra.mxu0 0.0
  %340 = vmatprep.subr.mxu0 0.0
  %341 = vmatpush1.msra.mxu0 0.0
  %342 = vmatprep.subr.mxu0 0.0
  %343 = vmatpush1.msra.mxu0 0.0
  %344 = vmatprep.subr.mxu0 0.0
  %345 = vmatpush1.msra.mxu0 0.0
  %346 = vmatprep.subr.mxu0 0.0
  %347 = vmatpush1.msra.mxu0 0.0
  %348 = vmatprep.subr.mxu0 0.0
  %349 = vmatpush1.msra.mxu0 0.0
  %350 = vmatprep.subr.mxu0 0.0
  %351 = vmatpush1.msra.mxu0 0.0
  %352 = vmatprep.subr.mxu0 0.0
  %353 = vmatpush1.msra.mxu0 0.0
  %354 = vmatprep.mubr.f32.mxu0 0.0
  %355 = vmatmul.mubr.f32.gmra.mrb[0].mxu0 %v99
  %v356 = vpop.f32.mrb[0].mxu0
  %v357 = vadd.f32 0.0, %v356
  %v358 = vpop.f32.mrb[0].mxu0
  %359 = vmatprep.mubr.f32.mxu0 0.0
  %360 = vmatmul.mubr.f32.gmra.mrb[0].mxu0 %v102
  %v361 = vpop.f32.mrb[0].mxu0
  %v362 = vadd.f32 0.0, %v361
  %v363 = vpop.f32.mrb[0].mxu0
  %364 = vmatprep.mubr.f32.mxu0 0.0
  %365 = vmatmul.mubr.f32.gmra.mrb[0].mxu0 %v105
  %v366 = vpop.f32.mrb[0].mxu0
  %v367 = vadd.f32 0.0, %v366
  %v368 = vpop.f32.mrb[0].mxu0
  %369 = vmatprep.mubr.f32.mxu0 0.0
  %370 = vmatmul.mubr.f32.gmra.mrb[0].mxu0 %v108
  %v371 = vpop.f32.mrb[0].mxu0
  %v372 = vadd.f32 0.0, %v371
  %v373 = vpop.f32.mrb[0].mxu0
  %374 = vmatprep.mubr.f32.mxu0 0.0
  %375 = vmatmul.mubr.f32.gmra.mrb[0].mxu0 %v111
  %v376 = vpop.f32.mrb[0].mxu0
  %v377 = vadd.f32 0.0, %v376
  %v378 = vpop.f32.mrb[0].mxu0
  %379 = vmatprep.mubr.f32.mxu0 0.0
  %380 = vmatmul.mubr.f32.gmra.mrb[0].mxu0 %v114
  %v381 = vpop.f32.mrb[0].mxu0
  %v382 = vadd.f32 0.0, %v381
  %v383 = vpop.f32.mrb[0].mxu0
  %384 = vmatprep.mubr.f32.mxu0 0.0
  %385 = vmatmul.mubr.f32.gmra.mrb[0].mxu0 %v117
  %v386 = vpop.f32.mrb[0].mxu0
  %v387 = vadd.f32 0.0, %v386
  %v388 = vpop.f32.mrb[0].mxu0
  %389 = vmatprep.mubr.f32.mxu0 0.0
  %390 = vmatmul.mubr.f32.gmra.mrb[0].mxu0 %v120
  %v391 = vpop.f32.mrb[0].mxu0
  %v392 = vadd.f32 0.0, %v391
  %v393 = vpop.f32.mrb[0].mxu0
  %394 = vmatprep.mubr.f32.mxu0 0.0
  %395 = vmatmul.mubr.f32.gmra.mrb[0].mxu0 %v123
  %v396 = vpop.f32.mrb[0].mxu0
  %v397 = vadd.f32 0.0, %v396
  %v398 = vpop.f32.mrb[0].mxu0
  %399 = vmatprep.mubr.f32.mxu0 0.0
  %400 = vmatmul.mubr.f32.gmra.mrb[0].mxu0 %v126
  %v401 = vpop.f32.mrb[0].mxu0
  %v402 = vadd.f32 0.0, %v401
  %v403 = vpop.f32.mrb[0].mxu0
  %404 = vmatprep.mubr.f32.mxu0 0.0
  %405 = vmatmul.mubr.f32.gmra.mrb[0].mxu0 %v129
  %v406 = vpop.f32.mrb[0].mxu0
  %v407 = vadd.f32 0.0, %v406
  %v408 = vpop.f32.mrb[0].mxu0
  %409 = vmatprep.mubr.f32.mxu0 0.0
  %410 = vmatmul.mubr.f32.gmra.mrb[0].mxu0 %v132
  %v411 = vpop.f32.mrb[0].mxu0
  %v412 = vadd.f32 0.0, %v411
  %v413 = vpop.f32.mrb[0].mxu0
  %414 = vmatprep.mubr.f32.mxu0 0.0
  %415 = vmatmul.mubr.f32.gmra.mrb[0].mxu0 %v135
  %v416 = vpop.f32.mrb[0].mxu0
  %v417 = vadd.f32 0.0, %v416
  %v418 = vpop.f32.mrb[0].mxu0
  %419 = vmatprep.mubr.f32.mxu0 0.0
  %420 = vmatmul.mubr.f32.gmra.mrb[0].mxu0 %v138
  %v421 = vpop.f32.mrb[0].mxu0
  %v422 = vadd.f32 0.0, %v421
  %v423 = vpop.f32.mrb[0].mxu0
  %424 = vmatprep.mubr.f32.mxu0 0.0
  %425 = vmatmul.mubr.f32.gmra.mrb[0].mxu0 %v141
  %v426 = vpop.f32.mrb[0].mxu0
  %v427 = vadd.f32 0.0, %v426
  %v428 = vpop.f32.mrb[0].mxu0
  %429 = vmatprep.mubr.f32.mxu0 0.0
  %430 = vmatmul.mubr.f32.gmra.mrb[0].mxu0 %v144
  %v431 = vpop.f32.mrb[0].mxu0
  %v432 = vadd.f32 0.0, %v431
  %v433 = vpop.f32.mrb[0].mxu0
  %434 = vmatprep.mubr.f32.mxu0 0.0
  %435 = vmatmul.mubr.f32.gmra.mrb[0].mxu0 %v147
  %v436 = vpop.f32.mrb[0].mxu0
  %v437 = vadd.f32 0.0, %v436
  %v438 = vpop.f32.mrb[0].mxu0
  %439 = vmatprep.mubr.f32.mxu0 0.0
  %440 = vmatmul.mubr.f32.gmra.mrb[0].mxu0 %v150
  %v441 = vpop.f32.mrb[0].mxu0
  %v442 = vadd.f32 0.0, %v441
  %v443 = vpop.f32.mrb[0].mxu0
  %444 = vmatprep.mubr.f32.mxu0 0.0
  %445 = vmatmul.mubr.f32.gmra.mrb[0].mxu0 %v153
  %v446 = vpop.f32.mrb[0].mxu0
  %v447 = vadd.f32 0.0, %v446
  %v448 = vpop.f32.mrb[0].mxu0
  %449 = vmatprep.mubr.f32.mxu0 0.0
  %450 = vmatmul.mubr.f32.gmra.mrb[0].mxu0 %v156
  %v451 = vpop.f32.mrb[0].mxu0
  %v452 = vadd.f32 0.0, %v451
  %v453 = vpop.f32.mrb[0].mxu0
  %454 = vmatprep.mubr.f32.mxu0 0.0
  %455 = vmatmul.mubr.f32.gmra.mrb[0].mxu0 %v159
  %v456 = vpop.f32.mrb[0].mxu0
  %v457 = vadd.f32 0.0, %v456
  %v458 = vpop.f32.mrb[0].mxu0
  %459 = vmatprep.mubr.f32.mxu0 0.0
  %460 = vmatmul.mubr.f32.gmra.mrb[0].mxu0 %v162
  %v461 = vpop.f32.mrb[0].mxu0
  %v462 = vadd.f32 0.0, %v461
  %v463 = vpop.f32.mrb[0].mxu0
  %464 = vmatprep.mubr.f32.mxu0 0.0
  %465 = vmatmul.mubr.f32.gmra.mrb[0].mxu0 %v165
  %v466 = vpop.f32.mrb[0].mxu0
  %v467 = vadd.f32 0.0, %v466
  %v468 = vpop.f32.mrb[0].mxu0
  %469 = vmatprep.mubr.f32.mxu0 0.0
  %470 = vmatmul.mubr.f32.gmra.mrb[0].mxu0 %v168
  %v471 = vpop.f32.mrb[0].mxu0
  %v472 = vadd.f32 0.0, %v471
  %v473 = vpop.f32.mrb[0].mxu0
  %474 = vmatprep.mubr.f32.mxu0 0.0
  %475 = vmatmul.mubr.f32.gmra.mrb[0].mxu0 %v171
  %v476 = vpop.f32.mrb[0].mxu0
  %v477 = vadd.f32 0.0, %v476
  %v478 = vpop.f32.mrb[0].mxu0
  %479 = vmatprep.mubr.f32.mxu0 0.0
  %480 = vmatmul.mubr.f32.gmra.mrb[0].mxu0 %v174
  %v481 = vpop.f32.mrb[0].mxu0
  %v482 = vadd.f32 0.0, %v481
  %v483 = vpop.f32.mrb[0].mxu0
  %484 = vmatprep.mubr.f32.mxu0 0.0
  %485 = vmatmul.mubr.f32.gmra.mrb[0].mxu0 %v177
  %v486 = vpop.f32.mrb[0].mxu0
  %v487 = vadd.f32 0.0, %v486
  %v488 = vpop.f32.mrb[0].mxu0
  %489 = vmatprep.mubr.f32.mxu0 0.0
  %490 = vmatmul.mubr.f32.gmra.mrb[0].mxu0 %v180
  %v491 = vpop.f32.mrb[0].mxu0
  %v492 = vadd.f32 0.0, %v491
  %v493 = vpop.f32.mrb[0].mxu0
  %494 = vmatprep.mubr.f32.mxu0 0.0
  %495 = vmatmul.mubr.f32.gmra.mrb[0].mxu0 %v183
  %v496 = vpop.f32.mrb[0].mxu0
  %v497 = vadd.f32 0.0, %v496
  %v498 = vpop.f32.mrb[0].mxu0
  %499 = vmatprep.mubr.f32.mxu0 0.0
  %500 = vmatmul.mubr.f32.gmra.mrb[0].mxu0 %v186
  %v501 = vpop.f32.mrb[0].mxu0
  %v502 = vadd.f32 0.0, %v501
  %v503 = vpop.f32.mrb[0].mxu0
  %504 = vmatprep.mubr.f32.mxu0 0.0
  %505 = vmatmul.mubr.f32.gmra.mrb[0].mxu0 %v189
  %v506 = vpop.f32.mrb[0].mxu0
  %v507 = vadd.f32 0.0, %v506
  %v508 = vpop.f32.mrb[0].mxu0
  %509 = vmatprep.mubr.f32.mxu0 0.0
  %510 = vmatmul.mubr.f32.gmra.mrb[0].mxu0 %v192
  %v511 = vpop.f32.mrb[0].mxu0
  %v512 = vadd.f32 0.0, %v511
  %v513 = vpop.f32.mrb[0].mxu0
  %514 = vmatprep.mubr.f32.mxu0 0.0
  %515 = vmatmul.mubr.f32.gmra.mrb[0].mxu0 %v195
  %v516 = vpop.f32.mrb[0].mxu0
  %v517 = vadd.f32 0.0, %v516
  %v518 = vpop.f32.mrb[0].mxu0
  %519 = vmatprep.mubr.f32.mxu0 0.0
  %520 = vmatmul.mubr.f32.gmra.mrb[0].mxu0 %v198
  %v521 = vpop.f32.mrb[0].mxu0
  %v522 = vadd.f32 0.0, %v521
  %v523 = vpop.f32.mrb[0].mxu0
  %524 = vmatprep.mubr.f32.mxu0 0.0
  %525 = vmatmul.mubr.f32.gmra.mrb[0].mxu0 %v201
  %v526 = vpop.f32.mrb[0].mxu0
  %v527 = vadd.f32 0.0, %v526
  %v528 = vpop.f32.mrb[0].mxu0
  %529 = vmatprep.mubr.f32.mxu0 0.0
  %530 = vmatmul.mubr.f32.gmra.mrb[0].mxu0 %v204
  %v531 = vpop.f32.mrb[0].mxu0
  %v532 = vadd.f32 0.0, %v531
  %v533 = vpop.f32.mrb[0].mxu0
  %534 = vmatprep.mubr.f32.mxu0 0.0
  %535 = vmatmul.mubr.f32.gmra.mrb[0].mxu0 %v207
  %v536 = vpop.f32.mrb[0].mxu0
  %v537 = vadd.f32 0.0, %v536
  %v538 = vpop.f32.mrb[0].mxu0
  %539 = vmatprep.mubr.f32.mxu0 0.0
  %540 = vmatmul.mubr.f32.gmra.mrb[0].mxu0 %v210
  %v541 = vpop.f32.mrb[0].mxu0
  %v542 = vadd.f32 0.0, %v541
  %v543 = vpop.f32.mrb[0].mxu0
  %544 = vmatprep.mubr.f32.mxu0 0.0
  %545 = vmatmul.mubr.f32.gmra.mrb[0].mxu0 %v213
  %v546 = vpop.f32.mrb[0].mxu0
  %v547 = vadd.f32 0.0, %v546
  %v548 = vpop.f32.mrb[0].mxu0
  %549 = vmatprep.mubr.f32.mxu0 0.0
  %550 = vmatmul.mubr.f32.gmra.mrb[0].mxu0 %v216
  %v551 = vpop.f32.mrb[0].mxu0
  %v552 = vadd.f32 0.0, %v551
  %v553 = vpop.f32.mrb[0].mxu0
  %554 = vmatprep.mubr.f32.mxu0 0.0
  %555 = vmatmul.mubr.f32.gmra.mrb[0].mxu0 %v219
  %v556 = vpop.f32.mrb[0].mxu0
  %v557 = vadd.f32 0.0, %v556
  %v558 = vpop.f32.mrb[0].mxu0
  %559 = vmatprep.mubr.f32.mxu0 0.0
  %560 = vmatmul.mubr.f32.gmra.mrb[0].mxu0 %v222
  %v561 = vpop.f32.mrb[0].mxu0
  %v562 = vadd.f32 0.0, %v561
  %v563 = vpop.f32.mrb[0].mxu0
  %564 = vmatprep.mubr.f32.mxu0 0.0
  %565 = vmatmul.mubr.f32.gmra.mrb[0].mxu0 %v225
  %v566 = vpop.f32.mrb[0].mxu0
  %v567 = vadd.f32 0.0, %v566
  %v568 = vpop.f32.mrb[0].mxu0
  %569 = vmatprep.mubr.f32.mxu0 0.0
  %570 = vmatmul.mubr.f32.gmra.mrb[0].mxu0 %v228
  %v571 = vpop.f32.mrb[0].mxu0
  %v572 = vadd.f32 0.0, %v571
  %v573 = vpop.f32.mrb[0].mxu0
  %574 = vmatprep.mubr.f32.mxu0 0.0
  %575 = vmatmul.mubr.f32.gmra.mrb[0].mxu0 %v231
  %v576 = vpop.f32.mrb[0].mxu0
  %v577 = vadd.f32 0.0, %v576
  %v578 = vpop.f32.mrb[0].mxu0
  %579 = vmatprep.mubr.f32.mxu0 0.0
  %580 = vmatmul.mubr.f32.gmra.mrb[0].mxu0 %v234
  %v581 = vpop.f32.mrb[0].mxu0
  %v582 = vadd.f32 0.0, %v581
  %v583 = vpop.f32.mrb[0].mxu0
  %584 = vmatprep.mubr.f32.mxu0 0.0
  %585 = vmatmul.mubr.f32.gmra.mrb[0].mxu0 %v237
  %v586 = vpop.f32.mrb[0].mxu0
  %v587 = vadd.f32 0.0, %v586
  %v588 = vpop.f32.mrb[0].mxu0
  %589 = vmatprep.mubr.f32.mxu0 0.0
  %590 = vmatmul.mubr.f32.gmra.mrb[0].mxu0 %v240
  %v591 = vpop.f32.mrb[0].mxu0
  %v592 = vadd.f32 0.0, %v591
  %v593 = vpop.f32.mrb[0].mxu0
  %594 = vmatprep.mubr.f32.mxu0 0.0
  %595 = vmatmul.mubr.f32.gmra.mrb[0].mxu0 %v243
  %v596 = vpop.f32.mrb[0].mxu0
  %v597 = vadd.f32 0.0, %v596
  %v598 = vpop.f32.mrb[0].mxu0
  %599 = vmatprep.mubr.f32.mxu0 0.0
  %600 = vmatmul.mubr.f32.gmra.mrb[0].mxu0 %v246
  %v601 = vpop.f32.mrb[0].mxu0
  %v602 = vadd.f32 0.0, %v601
  %v603 = vpop.f32.mrb[0].mxu0
  %604 = vmatprep.mubr.f32.mxu0 0.0
  %605 = vmatmul.mubr.f32.gmra.mrb[0].mxu0 %v249
  %v606 = vpop.f32.mrb[0].mxu0
  %v607 = vadd.f32 0.0, %v606
  %v608 = vpop.f32.mrb[0].mxu0
  %609 = vmatprep.mubr.f32.mxu0 0.0
  %610 = vmatmul.mubr.f32.gmra.mrb[0].mxu0 %v252
  %v611 = vpop.f32.mrb[0].mxu0
  %v612 = vadd.f32 0.0, %v611
  %v613 = vpop.f32.mrb[0].mxu0
  %614 = vmatprep.mubr.f32.mxu0 0.0
  %615 = vmatmul.mubr.f32.gmra.mrb[0].mxu0 %v255
  %v616 = vpop.f32.mrb[0].mxu0
  %v617 = vadd.f32 0.0, %v616
  %v618 = vpop.f32.mrb[0].mxu0
  %619 = vmatprep.mubr.f32.mxu0 0.0
  %620 = vmatmul.mubr.f32.gmra.mrb[0].mxu0 %v258
  %v621 = vpop.f32.mrb[0].mxu0
  %v622 = vadd.f32 0.0, %v621
  %v623 = vpop.f32.mrb[0].mxu0
  %624 = vmatprep.mubr.f32.mxu0 0.0
  %625 = vmatmul.mubr.f32.gmra.mrb[0].mxu0 %v261
  %v626 = vpop.f32.mrb[0].mxu0
  %v627 = vadd.f32 0.0, %v626
  %v628 = vpop.f32.mrb[0].mxu0
  %629 = vmatprep.mubr.f32.mxu0 0.0
  %630 = vmatmul.mubr.f32.gmra.mrb[0].mxu0 %v264
  %v631 = vpop.f32.mrb[0].mxu0
  %v632 = vadd.f32 0.0, %v631
  %v633 = vpop.f32.mrb[0].mxu0
  %634 = vmatprep.mubr.f32.mxu0 0.0
  %635 = vmatmul.mubr.f32.gmra.mrb[0].mxu0 %v267
  %v636 = vpop.f32.mrb[0].mxu0
  %v637 = vadd.f32 0.0, %v636
  %v638 = vpop.f32.mrb[0].mxu0
  %639 = vmatprep.mubr.f32.mxu0 0.0
  %640 = vmatmul.mubr.f32.gmra.mrb[0].mxu0 %v270
  %v641 = vpop.f32.mrb[0].mxu0
  %v642 = vadd.f32 0.0, %v641
  %v643 = vpop.f32.mrb[0].mxu0
  %644 = vmatprep.mubr.f32.mxu0 0.0
  %645 = vmatmul.mubr.f32.gmra.mrb[0].mxu0 %v273
  %v646 = vpop.f32.mrb[0].mxu0
  %v647 = vadd.f32 0.0, %v646
  %v648 = vpop.f32.mrb[0].mxu0
  %649 = vmatprep.mubr.f32.mxu0 0.0
  %650 = vmatmul.mubr.f32.gmra.mrb[0].mxu0 %v276
  %v651 = vpop.f32.mrb[0].mxu0
  %v652 = vadd.f32 0.0, %v651
  %v653 = vpop.f32.mrb[0].mxu0
  %654 = vmatprep.mubr.f32.mxu0 0.0
  %655 = vmatmul.mubr.f32.gmra.mrb[0].mxu0 %v279
  %v656 = vpop.f32.mrb[0].mxu0
  %v657 = vadd.f32 0.0, %v656
  %v658 = vpop.f32.mrb[0].mxu0
  %659 = vmatprep.mubr.f32.mxu0 0.0
  %660 = vmatmul.mubr.f32.gmra.mrb[0].mxu0 %v282
  %v661 = vpop.f32.mrb[0].mxu0
  %v662 = vadd.f32 0.0, %v661
  %v663 = vpop.f32.mrb[0].mxu0
  %664 = vmatprep.mubr.f32.mxu0 0.0
  %665 = vmatmul.mubr.f32.gmra.mrb[0].mxu0 %v285
  %v666 = vpop.f32.mrb[0].mxu0
  %v667 = vadd.f32 0.0, %v666
  %v668 = vpop.f32.mrb[0].mxu0
  %669 = vmatprep.mubr.f32.mxu0 0.0
  %670 = vmatmul.mubr.f32.gmra.mrb[0].mxu0 %v288
  %v671 = vpop.f32.mrb[0].mxu0
  %v672 = vadd.f32 0.0, %v671
  %v673 = vpop.f32.mrb[0].mxu0
  %674 = vdwg.mxu0
  %v675 = vmul.f32 %v31, %v31
  %v676 = vmul.f32 %v32, %v32
  %v677 = vmul.f32 %v33, %v33
  %v678 = vmul.f32 %v34, %v34
  %v679 = vmul.f32 %v35, %v35
  %v680 = vmul.f32 %v36, %v36
  %v681 = vmul.f32 %v37, %v37
  %v682 = vmul.f32 %v38, %v38
  %v683 = vmul.f32 %v39, %v39
  %v684 = vmul.f32 %v40, %v40
  %v685 = vmul.f32 %v41, %v41
  %v686 = vmul.f32 %v42, %v42
  %v687 = vmul.f32 %v43, %v43
  %v688 = vmul.f32 %v44, %v44
  %v689 = vmul.f32 %v45, %v45
  %v690 = vmul.f32 %v46, %v46
  %v691 = vmul.f32 %v47, %v47
  %v692 = vmul.f32 %v48, %v48
  %v693 = vmul.f32 %v49, %v49
  %v694 = vmul.f32 %v50, %v50
  %v695 = vmul.f32 %v51, %v51
  %v696 = vmul.f32 %v52, %v52
  %v697 = vmul.f32 %v53, %v53
  %v698 = vmul.f32 %v54, %v54
  %v699 = vmul.f32 %v55, %v55
  %v700 = vmul.f32 %v56, %v56
  %v701 = vmul.f32 %v57, %v57
  %v702 = vmul.f32 %v58, %v58
  %v703 = vmul.f32 %v59, %v59
  %v704 = vmul.f32 %v60, %v60
  %v705 = vmul.f32 %v61, %v61
  %v706 = vmul.f32 %v62, %v62
  %v707 = vmul.f32 %v63, %v63
  %v708 = vmul.f32 %v64, %v64
  %v709 = vmul.f32 %v65, %v65
  %v710 = vmul.f32 %v66, %v66
  %v711 = vmul.f32 %v67, %v67
  %v712 = vmul.f32 %v68, %v68
  %v713 = vmul.f32 %v69, %v69
  %v714 = vmul.f32 %v70, %v70
  %v715 = vmul.f32 %v71, %v71
  %v716 = vmul.f32 %v72, %v72
  %v717 = vmul.f32 %v73, %v73
  %v718 = vmul.f32 %v74, %v74
  %v719 = vmul.f32 %v75, %v75
  %v720 = vmul.f32 %v76, %v76
  %v721 = vmul.f32 %v77, %v77
  %v722 = vmul.f32 %v78, %v78
  %v723 = vmul.f32 %v79, %v79
  %v724 = vmul.f32 %v80, %v80
  %v725 = vmul.f32 %v81, %v81
  %v726 = vmul.f32 %v82, %v82
  %v727 = vmul.f32 %v83, %v83
  %v728 = vmul.f32 %v84, %v84
  %v729 = vmul.f32 %v85, %v85
  %v730 = vmul.f32 %v86, %v86
  %v731 = vmul.f32 %v87, %v87
  %v732 = vmul.f32 %v88, %v88
  %v733 = vmul.f32 %v89, %v89
  %v734 = vmul.f32 %v90, %v90
  %v735 = vmul.f32 %v91, %v91
  %v736 = vmul.f32 %v92, %v92
  %v737 = vmul.f32 %v93, %v93
  %v738 = vmul.f32 %v94, %v94
  %v739 = vmul.f32 %v95, %v95
  %v740 = vmul.f32 %v96, %v96
  %v742 = vsel %vm97, %v675, 0
  %v745 = vsel %vm97, %v676, 0
  %v748 = vsel %vm97, %v677, 0
  %v751 = vsel %vm97, %v678, 0
  %v754 = vsel %vm97, %v679, 0
  %v757 = vsel %vm97, %v680, 0
  %v760 = vsel %vm97, %v681, 0
  %v763 = vsel %vm97, %v682, 0
  %v766 = vsel %vm97, %v683, 0
  %v769 = vsel %vm97, %v684, 0
  %v772 = vsel %vm97, %v685, 0
  %v775 = vsel %vm97, %v686, 0
  %v778 = vsel %vm97, %v687, 0
  %v781 = vsel %vm97, %v688, 0
  %v784 = vsel %vm97, %v689, 0
  %v787 = vsel %vm97, %v690, 0
  %v790 = vsel %vm97, %v691, 0
  %v793 = vsel %vm97, %v692, 0
  %v796 = vsel %vm97, %v693, 0
  %v799 = vsel %vm97, %v694, 0
  %v802 = vsel %vm97, %v695, 0
  %v805 = vsel %vm97, %v696, 0
  %v808 = vsel %vm97, %v697, 0
  %v811 = vsel %vm97, %v698, 0
  %v814 = vsel %vm97, %v699, 0
  %v817 = vsel %vm97, %v700, 0
  %v820 = vsel %vm97, %v701, 0
  %v823 = vsel %vm97, %v702, 0
  %v826 = vsel %vm97, %v703, 0
  %v829 = vsel %vm97, %v704, 0
  %v832 = vsel %vm97, %v705, 0
  %v835 = vsel %vm97, %v706, 0
  %v838 = vsel %vm97, %v707, 0
  %v841 = vsel %vm97, %v708, 0
  %v844 = vsel %vm97, %v709, 0
  %v847 = vsel %vm97, %v710, 0
  %v850 = vsel %vm97, %v711, 0
  %v853 = vsel %vm97, %v712, 0
  %v856 = vsel %vm97, %v713, 0
  %v859 = vsel %vm97, %v714, 0
  %v862 = vsel %vm97, %v715, 0
  %v865 = vsel %vm97, %v716, 0
  %v868 = vsel %vm97, %v717, 0
  %v871 = vsel %vm97, %v718, 0
  %v874 = vsel %vm97, %v719, 0
  %v877 = vsel %vm97, %v720, 0
  %v880 = vsel %vm97, %v721, 0
  %v883 = vsel %vm97, %v722, 0
  %v886 = vsel %vm97, %v723, 0
  %v889 = vsel %vm97, %v724, 0
  %v892 = vsel %vm97, %v725, 0
  %v895 = vsel %vm97, %v726, 0
  %v898 = vsel %vm97, %v727, 0
  %v901 = vsel %vm97, %v728, 0
  %v904 = vsel %vm97, %v729, 0
  %v907 = vsel %vm97, %v730, 0
  %v910 = vsel %vm97, %v731, 0
  %v913 = vsel %vm97, %v732, 0
  %v916 = vsel %vm97, %v733, 0
  %v919 = vsel %vm97, %v734, 0
  %v922 = vsel %vm97, %v735, 0
  %v925 = vsel %vm97, %v736, 0
  %v928 = vsel %vm97, %v737, 0
  %v931 = vsel %vm97, %v738, 0
  %933 = vmatprep.subr.mxu0 0.0
  %934 = vmatpush1.msra.mxu0 %v739
  %935 = vmatprep.subr.mxu0 0.0
  %936 = vmatpush1.msra.mxu0 %v740
  %937 = vmatprep.subr.mxu0 0.0
  %938 = vmatpush1.msra.mxu0 0.0
  %939 = vmatprep.subr.mxu0 0.0
  %940 = vmatpush1.msra.mxu0 0.0
  %941 = vmatprep.subr.mxu0 0.0
  %942 = vmatpush1.msra.mxu0 0.0
  %943 = vmatprep.subr.mxu0 0.0
  %944 = vmatpush1.msra.mxu0 0.0
  %945 = vmatprep.subr.mxu0 0.0
  %946 = vmatpush1.msra.mxu0 0.0
  %947 = vmatprep.subr.mxu0 0.0
  %948 = vmatpush1.msra.mxu0 0.0
  %949 = vmatprep.subr.mxu0 0.0
  %950 = vmatpush1.msra.mxu0 0.0
  %951 = vmatprep.subr.mxu0 0.0
  %952 = vmatpush1.msra.mxu0 0.0
  %953 = vmatprep.subr.mxu0 0.0
  %954 = vmatpush1.msra.mxu0 0.0
  %955 = vmatprep.subr.mxu0 0.0
  %956 = vmatpush1.msra.mxu0 0.0
  %957 = vmatprep.subr.mxu0 0.0
  %958 = vmatpush1.msra.mxu0 0.0
  %959 = vmatprep.subr.mxu0 0.0
  %960 = vmatpush1.msra.mxu0 0.0
  %961 = vmatprep.subr.mxu0 0.0
  %962 = vmatpush1.msra.mxu0 0.0
  %963 = vmatprep.subr.mxu0 0.0
  %964 = vmatpush1.msra.mxu0 0.0
  %965 = vmatprep.subr.mxu0 0.0
  %966 = vmatpush1.msra.mxu0 0.0
  %967 = vmatprep.subr.mxu0 0.0
  %968 = vmatpush1.msra.mxu0 0.0
  %969 = vmatprep.subr.mxu0 0.0
  %970 = vmatpush1.msra.mxu0 0.0
  %971 = vmatprep.subr.mxu0 0.0
  %972 = vmatpush1.msra.mxu0 0.0
  %973 = vmatprep.subr.mxu0 0.0
  %974 = vmatpush1.msra.mxu0 0.0
  %975 = vmatprep.subr.mxu0 0.0
  %976 = vmatpush1.msra.mxu0 0.0
  %977 = vmatprep.subr.mxu0 0.0
  %978 = vmatpush1.msra.mxu0 0.0
  %979 = vmatprep.subr.mxu0 0.0
  %980 = vmatpush1.msra.mxu0 0.0
  %981 = vmatprep.subr.mxu0 0.0
  %982 = vmatpush1.msra.mxu0 0.0
  %983 = vmatprep.subr.mxu0 0.0
  %984 = vmatpush1.msra.mxu0 0.0
  %985 = vmatprep.subr.mxu0 0.0
  %986 = vmatpush1.msra.mxu0 0.0
  %987 = vmatprep.subr.mxu0 0.0
  %988 = vmatpush1.msra.mxu0 0.0
  %989 = vmatprep.subr.mxu0 0.0
  %990 = vmatpush1.msra.mxu0 0.0
  %991 = vmatprep.subr.mxu0 0.0
  %992 = vmatpush1.msra.mxu0 0.0
  %993 = vmatprep.subr.mxu0 0.0
  %994 = vmatpush1.msra.mxu0 0.0
  %995 = vmatprep.subr.mxu0 0.0
  %996 = vmatpush1.msra.mxu0 0.0
  %997 = vmatprep.mubr.f32.mxu0 0.0
  %998 = vmatmul.mubr.f32.gmra.mrb[0].mxu0 %v742
  %v999 = vpop.f32.mrb[0].mxu0
  %v1000 = vadd.f32 0.0, %v999
  %v1001 = vpop.f32.mrb[0].mxu0
  %1002 = vmatprep.mubr.f32.mxu0 0.0
  %1003 = vmatmul.mubr.f32.gmra.mrb[0].mxu0 %v745
  %v1004 = vpop.f32.mrb[0].mxu0
  %v1005 = vadd.f32 0.0, %v1004
  %v1006 = vpop.f32.mrb[0].mxu0
  %1007 = vmatprep.mubr.f32.mxu0 0.0
  %1008 = vmatmul.mubr.f32.gmra.mrb[0].mxu0 %v748
  %v1009 = vpop.f32.mrb[0].mxu0
  %v1010 = vadd.f32 0.0, %v1009
  %v1011 = vpop.f32.mrb[0].mxu0
  %1012 = vmatprep.mubr.f32.mxu0 0.0
  %1013 = vmatmul.mubr.f32.gmra.mrb[0].mxu0 %v751
  %v1014 = vpop.f32.mrb[0].mxu0
  %v1015 = vadd.f32 0.0, %v1014
  %v1016 = vpop.f32.mrb[0].mxu0
  %1017 = vmatprep.mubr.f32.mxu0 0.0
  %1018 = vmatmul.mubr.f32.gmra.mrb[0].mxu0 %v754
  %v1019 = vpop.f32.mrb[0].mxu0
  %v1020 = vadd.f32 0.0, %v1019
  %v1021 = vpop.f32.mrb[0].mxu0
  %1022 = vmatprep.mubr.f32.mxu0 0.0
  %1023 = vmatmul.mubr.f32.gmra.mrb[0].mxu0 %v757
  %v1024 = vpop.f32.mrb[0].mxu0
  %v1025 = vadd.f32 0.0, %v1024
  %v1026 = vpop.f32.mrb[0].mxu0
  %1027 = vmatprep.mubr.f32.mxu0 0.0
  %1028 = vmatmul.mubr.f32.gmra.mrb[0].mxu0 %v760
  %v1029 = vpop.f32.mrb[0].mxu0
  %v1030 = vadd.f32 0.0, %v1029
  %v1031 = vpop.f32.mrb[0].mxu0
  %1032 = vmatprep.mubr.f32.mxu0 0.0
  %1033 = vmatmul.mubr.f32.gmra.mrb[0].mxu0 %v763
  %v1034 = vpop.f32.mrb[0].mxu0
  %v1035 = vadd.f32 0.0, %v1034
  %v1036 = vpop.f32.mrb[0].mxu0
  %1037 = vmatprep.mubr.f32.mxu0 0.0
  %1038 = vmatmul.mubr.f32.gmra.mrb[0].mxu0 %v766
  %v1039 = vpop.f32.mrb[0].mxu0
  %v1040 = vadd.f32 0.0, %v1039
  %v1041 = vpop.f32.mrb[0].mxu0
  %1042 = vmatprep.mubr.f32.mxu0 0.0
  %1043 = vmatmul.mubr.f32.gmra.mrb[0].mxu0 %v769
  %v1044 = vpop.f32.mrb[0].mxu0
  %v1045 = vadd.f32 0.0, %v1044
  %v1046 = vpop.f32.mrb[0].mxu0
  %1047 = vmatprep.mubr.f32.mxu0 0.0
  %1048 = vmatmul.mubr.f32.gmra.mrb[0].mxu0 %v772
  %v1049 = vpop.f32.mrb[0].mxu0
  %v1050 = vadd.f32 0.0, %v1049
  %v1051 = vpop.f32.mrb[0].mxu0
  %1052 = vmatprep.mubr.f32.mxu0 0.0
  %1053 = vmatmul.mubr.f32.gmra.mrb[0].mxu0 %v775
  %v1054 = vpop.f32.mrb[0].mxu0
  %v1055 = vadd.f32 0.0, %v1054
  %v1056 = vpop.f32.mrb[0].mxu0
  %1057 = vmatprep.mubr.f32.mxu0 0.0
  %1058 = vmatmul.mubr.f32.gmra.mrb[0].mxu0 %v778
  %v1059 = vpop.f32.mrb[0].mxu0
  %v1060 = vadd.f32 0.0, %v1059
  %v1061 = vpop.f32.mrb[0].mxu0
  %1062 = vmatprep.mubr.f32.mxu0 0.0
  %1063 = vmatmul.mubr.f32.gmra.mrb[0].mxu0 %v781
  %v1064 = vpop.f32.mrb[0].mxu0
  %v1065 = vadd.f32 0.0, %v1064
  %v1066 = vpop.f32.mrb[0].mxu0
  %1067 = vmatprep.mubr.f32.mxu0 0.0
  %1068 = vmatmul.mubr.f32.gmra.mrb[0].mxu0 %v784
  %v1069 = vpop.f32.mrb[0].mxu0
  %v1070 = vadd.f32 0.0, %v1069
  %v1071 = vpop.f32.mrb[0].mxu0
  %1072 = vmatprep.mubr.f32.mxu0 0.0
  %1073 = vmatmul.mubr.f32.gmra.mrb[0].mxu0 %v787
  %v1074 = vpop.f32.mrb[0].mxu0
  %v1075 = vadd.f32 0.0, %v1074
  %v1076 = vpop.f32.mrb[0].mxu0
  %1077 = vmatprep.mubr.f32.mxu0 0.0
  %1078 = vmatmul.mubr.f32.gmra.mrb[0].mxu0 %v790
  %v1079 = vpop.f32.mrb[0].mxu0
  %v1080 = vadd.f32 0.0, %v1079
  %v1081 = vpop.f32.mrb[0].mxu0
  %1082 = vmatprep.mubr.f32.mxu0 0.0
  %1083 = vmatmul.mubr.f32.gmra.mrb[0].mxu0 %v793
  %v1084 = vpop.f32.mrb[0].mxu0
  %v1085 = vadd.f32 0.0, %v1084
  %v1086 = vpop.f32.mrb[0].mxu0
  %1087 = vmatprep.mubr.f32.mxu0 0.0
  %1088 = vmatmul.mubr.f32.gmra.mrb[0].mxu0 %v796
  %v1089 = vpop.f32.mrb[0].mxu0
  %v1090 = vadd.f32 0.0, %v1089
  %v1091 = vpop.f32.mrb[0].mxu0
  %1092 = vmatprep.mubr.f32.mxu0 0.0
  %1093 = vmatmul.mubr.f32.gmra.mrb[0].mxu0 %v799
  %v1094 = vpop.f32.mrb[0].mxu0
  %v1095 = vadd.f32 0.0, %v1094
  %v1096 = vpop.f32.mrb[0].mxu0
  %1097 = vmatprep.mubr.f32.mxu0 0.0
  %1098 = vmatmul.mubr.f32.gmra.mrb[0].mxu0 %v802
  %v1099 = vpop.f32.mrb[0].mxu0
  %v1100 = vadd.f32 0.0, %v1099
  %v1101 = vpop.f32.mrb[0].mxu0
  %1102 = vmatprep.mubr.f32.mxu0 0.0
  %1103 = vmatmul.mubr.f32.gmra.mrb[0].mxu0 %v805
  %v1104 = vpop.f32.mrb[0].mxu0
  %v1105 = vadd.f32 0.0, %v1104
  %v1106 = vpop.f32.mrb[0].mxu0
  %1107 = vmatprep.mubr.f32.mxu0 0.0
  %1108 = vmatmul.mubr.f32.gmra.mrb[0].mxu0 %v808
  %v1109 = vpop.f32.mrb[0].mxu0
  %v1110 = vadd.f32 0.0, %v1109
  %v1111 = vpop.f32.mrb[0].mxu0
  %1112 = vmatprep.mubr.f32.mxu0 0.0
  %1113 = vmatmul.mubr.f32.gmra.mrb[0].mxu0 %v811
  %v1114 = vpop.f32.mrb[0].mxu0
  %v1115 = vadd.f32 0.0, %v1114
  %v1116 = vpop.f32.mrb[0].mxu0
  %1117 = vmatprep.mubr.f32.mxu0 0.0
  %1118 = vmatmul.mubr.f32.gmra.mrb[0].mxu0 %v814
  %v1119 = vpop.f32.mrb[0].mxu0
  %v1120 = vadd.f32 0.0, %v1119
  %v1121 = vpop.f32.mrb[0].mxu0
  %1122 = vmatprep.mubr.f32.mxu0 0.0
  %1123 = vmatmul.mubr.f32.gmra.mrb[0].mxu0 %v817
  %v1124 = vpop.f32.mrb[0].mxu0
  %v1125 = vadd.f32 0.0, %v1124
  %v1126 = vpop.f32.mrb[0].mxu0
  %1127 = vmatprep.mubr.f32.mxu0 0.0
  %1128 = vmatmul.mubr.f32.gmra.mrb[0].mxu0 %v820
  %v1129 = vpop.f32.mrb[0].mxu0
  %v1130 = vadd.f32 0.0, %v1129
  %v1131 = vpop.f32.mrb[0].mxu0
  %1132 = vmatprep.mubr.f32.mxu0 0.0
  %1133 = vmatmul.mubr.f32.gmra.mrb[0].mxu0 %v823
  %v1134 = vpop.f32.mrb[0].mxu0
  %v1135 = vadd.f32 0.0, %v1134
  %v1136 = vpop.f32.mrb[0].mxu0
  %1137 = vmatprep.mubr.f32.mxu0 0.0
  %1138 = vmatmul.mubr.f32.gmra.mrb[0].mxu0 %v826
  %v1139 = vpop.f32.mrb[0].mxu0
  %v1140 = vadd.f32 0.0, %v1139
  %v1141 = vpop.f32.mrb[0].mxu0
  %1142 = vmatprep.mubr.f32.mxu0 0.0
  %1143 = vmatmul.mubr.f32.gmra.mrb[0].mxu0 %v829
  %v1144 = vpop.f32.mrb[0].mxu0
  %v1145 = vadd.f32 0.0, %v1144
  %v1146 = vpop.f32.mrb[0].mxu0
  %1147 = vmatprep.mubr.f32.mxu0 0.0
  %1148 = vmatmul.mubr.f32.gmra.mrb[0].mxu0 %v832
  %v1149 = vpop.f32.mrb[0].mxu0
  %v1150 = vadd.f32 0.0, %v1149
  %v1151 = vpop.f32.mrb[0].mxu0
  %1152 = vmatprep.mubr.f32.mxu0 0.0
  %1153 = vmatmul.mubr.f32.gmra.mrb[0].mxu0 %v835
  %v1154 = vpop.f32.mrb[0].mxu0
  %v1155 = vadd.f32 0.0, %v1154
  %v1156 = vpop.f32.mrb[0].mxu0
  %1157 = vmatprep.mubr.f32.mxu0 0.0
  %1158 = vmatmul.mubr.f32.gmra.mrb[0].mxu0 %v838
  %v1159 = vpop.f32.mrb[0].mxu0
  %v1160 = vadd.f32 0.0, %v1159
  %v1161 = vpop.f32.mrb[0].mxu0
  %1162 = vmatprep.mubr.f32.mxu0 0.0
  %1163 = vmatmul.mubr.f32.gmra.mrb[0].mxu0 %v841
  %v1164 = vpop.f32.mrb[0].mxu0
  %v1165 = vadd.f32 0.0, %v1164
  %v1166 = vpop.f32.mrb[0].mxu0
  %1167 = vmatprep.mubr.f32.mxu0 0.0
  %1168 = vmatmul.mubr.f32.gmra.mrb[0].mxu0 %v844
  %v1169 = vpop.f32.mrb[0].mxu0
  %v1170 = vadd.f32 0.0, %v1169
  %v1171 = vpop.f32.mrb[0].mxu0
  %1172 = vmatprep.mubr.f32.mxu0 0.0
  %1173 = vmatmul.mubr.f32.gmra.mrb[0].mxu0 %v847
  %v1174 = vpop.f32.mrb[0].mxu0
  %v1175 = vadd.f32 0.0, %v1174
  %v1176 = vpop.f32.mrb[0].mxu0
  %1177 = vmatprep.mubr.f32.mxu0 0.0
  %1178 = vmatmul.mubr.f32.gmra.mrb[0].mxu0 %v850
  %v1179 = vpop.f32.mrb[0].mxu0
  %v1180 = vadd.f32 0.0, %v1179
  %v1181 = vpop.f32.mrb[0].mxu0
  %1182 = vmatprep.mubr.f32.mxu0 0.0
  %1183 = vmatmul.mubr.f32.gmra.mrb[0].mxu0 %v853
  %v1184 = vpop.f32.mrb[0].mxu0
  %v1185 = vadd.f32 0.0, %v1184
  %v1186 = vpop.f32.mrb[0].mxu0
  %1187 = vmatprep.mubr.f32.mxu0 0.0
  %1188 = vmatmul.mubr.f32.gmra.mrb[0].mxu0 %v856
  %v1189 = vpop.f32.mrb[0].mxu0
  %v1190 = vadd.f32 0.0, %v1189
  %v1191 = vpop.f32.mrb[0].mxu0
  %1192 = vmatprep.mubr.f32.mxu0 0.0
  %1193 = vmatmul.mubr.f32.gmra.mrb[0].mxu0 %v859
  %v1194 = vpop.f32.mrb[0].mxu0
  %v1195 = vadd.f32 0.0, %v1194
  %v1196 = vpop.f32.mrb[0].mxu0
  %1197 = vmatprep.mubr.f32.mxu0 0.0
  %1198 = vmatmul.mubr.f32.gmra.mrb[0].mxu0 %v862
  %v1199 = vpop.f32.mrb[0].mxu0
  %v1200 = vadd.f32 0.0, %v1199
  %v1201 = vpop.f32.mrb[0].mxu0
  %1202 = vmatprep.mubr.f32.mxu0 0.0
  %1203 = vmatmul.mubr.f32.gmra.mrb[0].mxu0 %v865
  %v1204 = vpop.f32.mrb[0].mxu0
  %v1205 = vadd.f32 0.0, %v1204
  %v1206 = vpop.f32.mrb[0].mxu0
  %1207 = vmatprep.mubr.f32.mxu0 0.0
  %1208 = vmatmul.mubr.f32.gmra.mrb[0].mxu0 %v868
  %v1209 = vpop.f32.mrb[0].mxu0
  %v1210 = vadd.f32 0.0, %v1209
  %v1211 = vpop.f32.mrb[0].mxu0
  %1212 = vmatprep.mubr.f32.mxu0 0.0
  %1213 = vmatmul.mubr.f32.gmra.mrb[0].mxu0 %v871
  %v1214 = vpop.f32.mrb[0].mxu0
  %v1215 = vadd.f32 0.0, %v1214
  %v1216 = vpop.f32.mrb[0].mxu0
  %1217 = vmatprep.mubr.f32.mxu0 0.0
  %1218 = vmatmul.mubr.f32.gmra.mrb[0].mxu0 %v874
  %v1219 = vpop.f32.mrb[0].mxu0
  %v1220 = vadd.f32 0.0, %v1219
  %v1221 = vpop.f32.mrb[0].mxu0
  %1222 = vmatprep.mubr.f32.mxu0 0.0
  %1223 = vmatmul.mubr.f32.gmra.mrb[0].mxu0 %v877
  %v1224 = vpop.f32.mrb[0].mxu0
  %v1225 = vadd.f32 0.0, %v1224
  %v1226 = vpop.f32.mrb[0].mxu0
  %1227 = vmatprep.mubr.f32.mxu0 0.0
  %1228 = vmatmul.mubr.f32.gmra.mrb[0].mxu0 %v880
  %v1229 = vpop.f32.mrb[0].mxu0
  %v1230 = vadd.f32 0.0, %v1229
  %v1231 = vpop.f32.mrb[0].mxu0
  %1232 = vmatprep.mubr.f32.mxu0 0.0
  %1233 = vmatmul.mubr.f32.gmra.mrb[0].mxu0 %v883
  %v1234 = vpop.f32.mrb[0].mxu0
  %v1235 = vadd.f32 0.0, %v1234
  %v1236 = vpop.f32.mrb[0].mxu0
  %1237 = vmatprep.mubr.f32.mxu0 0.0
  %1238 = vmatmul.mubr.f32.gmra.mrb[0].mxu0 %v886
  %v1239 = vpop.f32.mrb[0].mxu0
  %v1240 = vadd.f32 0.0, %v1239
  %v1241 = vpop.f32.mrb[0].mxu0
  %1242 = vmatprep.mubr.f32.mxu0 0.0
  %1243 = vmatmul.mubr.f32.gmra.mrb[0].mxu0 %v889
  %v1244 = vpop.f32.mrb[0].mxu0
  %v1245 = vadd.f32 0.0, %v1244
  %v1246 = vpop.f32.mrb[0].mxu0
  %1247 = vmatprep.mubr.f32.mxu0 0.0
  %1248 = vmatmul.mubr.f32.gmra.mrb[0].mxu0 %v892
  %v1249 = vpop.f32.mrb[0].mxu0
  %v1250 = vadd.f32 0.0, %v1249
  %v1251 = vpop.f32.mrb[0].mxu0
  %1252 = vmatprep.mubr.f32.mxu0 0.0
  %1253 = vmatmul.mubr.f32.gmra.mrb[0].mxu0 %v895
  %v1254 = vpop.f32.mrb[0].mxu0
  %v1255 = vadd.f32 0.0, %v1254
  %v1256 = vpop.f32.mrb[0].mxu0
  %1257 = vmatprep.mubr.f32.mxu0 0.0
  %1258 = vmatmul.mubr.f32.gmra.mrb[0].mxu0 %v898
  %v1259 = vpop.f32.mrb[0].mxu0
  %v1260 = vadd.f32 0.0, %v1259
  %v1261 = vpop.f32.mrb[0].mxu0
  %1262 = vmatprep.mubr.f32.mxu0 0.0
  %1263 = vmatmul.mubr.f32.gmra.mrb[0].mxu0 %v901
  %v1264 = vpop.f32.mrb[0].mxu0
  %v1265 = vadd.f32 0.0, %v1264
  %v1266 = vpop.f32.mrb[0].mxu0
  %1267 = vmatprep.mubr.f32.mxu0 0.0
  %1268 = vmatmul.mubr.f32.gmra.mrb[0].mxu0 %v904
  %v1269 = vpop.f32.mrb[0].mxu0
  %v1270 = vadd.f32 0.0, %v1269
  %v1271 = vpop.f32.mrb[0].mxu0
  %1272 = vmatprep.mubr.f32.mxu0 0.0
  %1273 = vmatmul.mubr.f32.gmra.mrb[0].mxu0 %v907
  %v1274 = vpop.f32.mrb[0].mxu0
  %v1275 = vadd.f32 0.0, %v1274
  %v1276 = vpop.f32.mrb[0].mxu0
  %1277 = vmatprep.mubr.f32.mxu0 0.0
  %1278 = vmatmul.mubr.f32.gmra.mrb[0].mxu0 %v910
  %v1279 = vpop.f32.mrb[0].mxu0
  %v1280 = vadd.f32 0.0, %v1279
  %v1281 = vpop.f32.mrb[0].mxu0
  %1282 = vmatprep.mubr.f32.mxu0 0.0
  %1283 = vmatmul.mubr.f32.gmra.mrb[0].mxu0 %v913
  %v1284 = vpop.f32.mrb[0].mxu0
  %v1285 = vadd.f32 0.0, %v1284
  %v1286 = vpop.f32.mrb[0].mxu0
  %1287 = vmatprep.mubr.f32.mxu0 0.0
  %1288 = vmatmul.mubr.f32.gmra.mrb[0].mxu0 %v916
  %v1289 = vpop.f32.mrb[0].mxu0
  %v1290 = vadd.f32 0.0, %v1289
  %v1291 = vpop.f32.mrb[0].mxu0
  %1292 = vmatprep.mubr.f32.mxu0 0.0
  %1293 = vmatmul.mubr.f32.gmra.mrb[0].mxu0 %v919
  %v1294 = vpop.f32.mrb[0].mxu0
  %v1295 = vadd.f32 0.0, %v1294
  %v1296 = vpop.f32.mrb[0].mxu0
  %1297 = vmatprep.mubr.f32.mxu0 0.0
  %1298 = vmatmul.mubr.f32.gmra.mrb[0].mxu0 %v922
  %v1299 = vpop.f32.mrb[0].mxu0
  %v1300 = vadd.f32 0.0, %v1299
  %v1301 = vpop.f32.mrb[0].mxu0
  %1302 = vmatprep.mubr.f32.mxu0 0.0
  %1303 = vmatmul.mubr.f32.gmra.mrb[0].mxu0 %v925
  %v1304 = vpop.f32.mrb[0].mxu0
  %v1305 = vadd.f32 0.0, %v1304
  %v1306 = vpop.f32.mrb[0].mxu0
  %1307 = vmatprep.mubr.f32.mxu0 0.0
  %1308 = vmatmul.mubr.f32.gmra.mrb[0].mxu0 %v928
  %v1309 = vpop.f32.mrb[0].mxu0
  %v1310 = vadd.f32 0.0, %v1309
  %v1311 = vpop.f32.mrb[0].mxu0
  %1312 = vmatprep.mubr.f32.mxu0 0.0
  %1313 = vmatmul.mubr.f32.gmra.mrb[0].mxu0 %v931
  %v1314 = vpop.f32.mrb[0].mxu0
  %v1315 = vadd.f32 0.0, %v1314
  %v1316 = vpop.f32.mrb[0].mxu0
  %1317 = vdwg.mxu0
  %v1318 = vmul.f32 %v357, %v357
  %v1319 = vmul.f32 %v362, %v362
  %v1320 = vmul.f32 %v367, %v367
  %v1321 = vmul.f32 %v372, %v372
  %v1322 = vmul.f32 %v377, %v377
  %v1323 = vmul.f32 %v382, %v382
  %v1324 = vmul.f32 %v387, %v387
  %v1325 = vmul.f32 %v392, %v392
  %v1326 = vmul.f32 %v397, %v397
  %v1327 = vmul.f32 %v402, %v402
  %v1328 = vmul.f32 %v407, %v407
  %v1329 = vmul.f32 %v412, %v412
  %v1330 = vmul.f32 %v417, %v417
  %v1331 = vmul.f32 %v422, %v422
  %v1332 = vmul.f32 %v427, %v427
  %v1333 = vmul.f32 %v432, %v432
  %v1334 = vmul.f32 %v437, %v437
  %v1335 = vmul.f32 %v442, %v442
  %v1336 = vmul.f32 %v447, %v447
  %v1337 = vmul.f32 %v452, %v452
  %v1338 = vmul.f32 %v457, %v457
  %v1339 = vmul.f32 %v462, %v462
  %v1340 = vmul.f32 %v467, %v467
  %v1341 = vmul.f32 %v472, %v472
  %v1342 = vmul.f32 %v477, %v477
  %v1343 = vmul.f32 %v482, %v482
  %v1344 = vmul.f32 %v487, %v487
  %v1345 = vmul.f32 %v492, %v492
  %v1346 = vmul.f32 %v497, %v497
  %v1347 = vmul.f32 %v502, %v502
  %v1348 = vmul.f32 %v507, %v507
  %v1349 = vmul.f32 %v512, %v512
  %v1350 = vmul.f32 %v517, %v517
  %v1351 = vmul.f32 %v522, %v522
  %v1352 = vmul.f32 %v527, %v527
  %v1353 = vmul.f32 %v532, %v532
  %v1354 = vmul.f32 %v537, %v537
  %v1355 = vmul.f32 %v542, %v542
  %v1356 = vmul.f32 %v547, %v547
  %v1357 = vmul.f32 %v552, %v552
  %v1358 = vmul.f32 %v557, %v557
  %v1359 = vmul.f32 %v562, %v562
  %v1360 = vmul.f32 %v567, %v567
  %v1361 = vmul.f32 %v572, %v572
  %v1362 = vmul.f32 %v577, %v577
  %v1363 = vmul.f32 %v582, %v582
  %v1364 = vmul.f32 %v587, %v587
  %v1365 = vmul.f32 %v592, %v592
  %v1366 = vmul.f32 %v597, %v597
  %v1367 = vmul.f32 %v602, %v602
  %v1368 = vmul.f32 %v607, %v607
  %v1369 = vmul.f32 %v612, %v612
  %v1370 = vmul.f32 %v617, %v617
  %v1371 = vmul.f32 %v622, %v622
  %v1372 = vmul.f32 %v627, %v627
  %v1373 = vmul.f32 %v632, %v632
  %v1374 = vmul.f32 %v637, %v637
  %v1375 = vmul.f32 %v642, %v642
  %v1376 = vmul.f32 %v647, %v647
  %v1377 = vmul.f32 %v652, %v652
  %v1378 = vmul.f32 %v657, %v657
  %v1379 = vmul.f32 %v662, %v662
  %v1380 = vmul.f32 %v667, %v667
  %v1381 = vmul.f32 %v672, %v672
  %v1382 = vsub.f32 %v1318, %v1000
  %v1383 = vsub.f32 %v1319, %v1005
  %v1384 = vsub.f32 %v1320, %v1010
  %v1385 = vsub.f32 %v1321, %v1015
  %v1386 = vsub.f32 %v1322, %v1020
  %v1387 = vsub.f32 %v1323, %v1025
  %v1388 = vsub.f32 %v1324, %v1030
  %v1389 = vsub.f32 %v1325, %v1035
  %v1390 = vsub.f32 %v1326, %v1040
  %v1391 = vsub.f32 %v1327, %v1045
  %v1392 = vsub.f32 %v1328, %v1050
  %v1393 = vsub.f32 %v1329, %v1055
  %v1394 = vsub.f32 %v1330, %v1060
  %v1395 = vsub.f32 %v1331, %v1065
  %v1396 = vsub.f32 %v1332, %v1070
  %v1397 = vsub.f32 %v1333, %v1075
  %v1398 = vsub.f32 %v1334, %v1080
  %v1399 = vsub.f32 %v1335, %v1085
  %v1400 = vsub.f32 %v1336, %v1090
  %v1401 = vsub.f32 %v1337, %v1095
  %v1402 = vsub.f32 %v1338, %v1100
  %v1403 = vsub.f32 %v1339, %v1105
  %v1404 = vsub.f32 %v1340, %v1110
  %v1405 = vsub.f32 %v1341, %v1115
  %v1406 = vsub.f32 %v1342, %v1120
  %v1407 = vsub.f32 %v1343, %v1125
  %v1408 = vsub.f32 %v1344, %v1130
  %v1409 = vsub.f32 %v1345, %v1135
  %v1410 = vsub.f32 %v1346, %v1140
  %v1411 = vsub.f32 %v1347, %v1145
  %v1412 = vsub.f32 %v1348, %v1150
  %v1413 = vsub.f32 %v1349, %v1155
  %v1414 = vsub.f32 %v1350, %v1160
  %v1415 = vsub.f32 %v1351, %v1165
  %v1416 = vsub.f32 %v1352, %v1170
  %v1417 = vsub.f32 %v1353, %v1175
  %v1418 = vsub.f32 %v1354, %v1180
  %v1419 = vsub.f32 %v1355, %v1185
  %v1420 = vsub.f32 %v1356, %v1190
  %v1421 = vsub.f32 %v1357, %v1195
  %v1422 = vsub.f32 %v1358, %v1200
  %v1423 = vsub.f32 %v1359, %v1205
  %v1424 = vsub.f32 %v1360, %v1210
  %v1425 = vsub.f32 %v1361, %v1215
  %v1426 = vsub.f32 %v1362, %v1220
  %v1427 = vsub.f32 %v1363, %v1225
  %v1428 = vsub.f32 %v1364, %v1230
  %v1429 = vsub.f32 %v1365, %v1235
  %v1430 = vsub.f32 %v1366, %v1240
  %v1431 = vsub.f32 %v1367, %v1245
  %v1432 = vsub.f32 %v1368, %v1250
  %v1433 = vsub.f32 %v1369, %v1255
  %v1434 = vsub.f32 %v1370, %v1260
  %v1435 = vsub.f32 %v1371, %v1265
  %v1436 = vsub.f32 %v1372, %v1270
  %v1437 = vsub.f32 %v1373, %v1275
  %v1438 = vsub.f32 %v1374, %v1280
  %v1439 = vsub.f32 %v1375, %v1285
  %v1440 = vsub.f32 %v1376, %v1290
  %v1441 = vsub.f32 %v1377, %v1295
  %v1442 = vsub.f32 %v1378, %v1300
  %v1443 = vsub.f32 %v1379, %v1305
  %v1444 = vsub.f32 %v1380, %v1310
  %v1445 = vsub.f32 %v1381, %v1315
  %v1446 = vmul.f32 %v1382, 0.5
  %v1447 = vmul.f32 %v1383, 0.5
  %v1448 = vmul.f32 %v1384, 0.5
  %v1449 = vmul.f32 %v1385, 0.5
  %v1450 = vmul.f32 %v1386, 0.5
  %v1451 = vmul.f32 %v1387, 0.5
  %v1452 = vmul.f32 %v1388, 0.5
  %v1453 = vmul.f32 %v1389, 0.5
  %v1454 = vmul.f32 %v1390, 0.5
  %v1455 = vmul.f32 %v1391, 0.5
  %v1456 = vmul.f32 %v1392, 0.5
  %v1457 = vmul.f32 %v1393, 0.5
  %v1458 = vmul.f32 %v1394, 0.5
  %v1459 = vmul.f32 %v1395, 0.5
  %v1460 = vmul.f32 %v1396, 0.5
  %v1461 = vmul.f32 %v1397, 0.5
  %v1462 = vmul.f32 %v1398, 0.5
  %v1463 = vmul.f32 %v1399, 0.5
  %v1464 = vmul.f32 %v1400, 0.5
  %v1465 = vmul.f32 %v1401, 0.5
  %v1466 = vmul.f32 %v1402, 0.5
  %v1467 = vmul.f32 %v1403, 0.5
  %v1468 = vmul.f32 %v1404, 0.5
  %v1469 = vmul.f32 %v1405, 0.5
  %v1470 = vmul.f32 %v1406, 0.5
  %v1471 = vmul.f32 %v1407, 0.5
  %v1472 = vmul.f32 %v1408, 0.5
  %v1473 = vmul.f32 %v1409, 0.5
  %v1474 = vmul.f32 %v1410, 0.5
  %v1475 = vmul.f32 %v1411, 0.5
  %v1476 = vmul.f32 %v1412, 0.5
  %v1477 = vmul.f32 %v1413, 0.5
  %v1478 = vmul.f32 %v1414, 0.5
  %v1479 = vmul.f32 %v1415, 0.5
  %v1480 = vmul.f32 %v1416, 0.5
  %v1481 = vmul.f32 %v1417, 0.5
  %v1482 = vmul.f32 %v1418, 0.5
  %v1483 = vmul.f32 %v1419, 0.5
  %v1484 = vmul.f32 %v1420, 0.5
  %v1485 = vmul.f32 %v1421, 0.5
  %v1486 = vmul.f32 %v1422, 0.5
  %v1487 = vmul.f32 %v1423, 0.5
  %v1488 = vmul.f32 %v1424, 0.5
  %v1489 = vmul.f32 %v1425, 0.5
  %v1490 = vmul.f32 %v1426, 0.5
  %v1491 = vmul.f32 %v1427, 0.5
  %v1492 = vmul.f32 %v1428, 0.5
  %v1493 = vmul.f32 %v1429, 0.5
  %v1494 = vmul.f32 %v1430, 0.5
  %v1495 = vmul.f32 %v1431, 0.5
  %v1496 = vmul.f32 %v1432, 0.5
  %v1497 = vmul.f32 %v1433, 0.5
  %v1498 = vmul.f32 %v1434, 0.5
  %v1499 = vmul.f32 %v1435, 0.5
  %v1500 = vmul.f32 %v1436, 0.5
  %v1501 = vmul.f32 %v1437, 0.5
  %v1502 = vmul.f32 %v1438, 0.5
  %v1503 = vmul.f32 %v1439, 0.5
  %v1504 = vmul.f32 %v1440, 0.5
  %v1505 = vmul.f32 %v1441, 0.5
  %v1506 = vmul.f32 %v1442, 0.5
  %v1507 = vmul.f32 %v1443, 0.5
  %v1508 = vmul.f32 %v1444, 0.5
  %v1509 = vmul.f32 %v1445, 0.5
  %v1510 = vpack.c.bf16 %v1447, %v1446
  %v1511 = vpack.c.bf16 %v1449, %v1448
  %v1512 = vpack.c.bf16 %v1451, %v1450
  %v1513 = vpack.c.bf16 %v1453, %v1452
  %v1514 = vpack.c.bf16 %v1455, %v1454
  %v1515 = vpack.c.bf16 %v1457, %v1456
  %v1516 = vpack.c.bf16 %v1459, %v1458
  %v1517 = vpack.c.bf16 %v1461, %v1460
  %v1518 = vpack.c.bf16 %v1463, %v1462
  %v1519 = vpack.c.bf16 %v1465, %v1464
  %v1520 = vpack.c.bf16 %v1467, %v1466
  %v1521 = vpack.c.bf16 %v1469, %v1468
  %v1522 = vpack.c.bf16 %v1471, %v1470
  %v1523 = vpack.c.bf16 %v1473, %v1472
  %v1524 = vpack.c.bf16 %v1475, %v1474
  %v1525 = vpack.c.bf16 %v1477, %v1476
  %v1526 = vpack.c.bf16 %v1479, %v1478
  %v1527 = vpack.c.bf16 %v1481, %v1480
  %v1528 = vpack.c.bf16 %v1483, %v1482
  %v1529 = vpack.c.bf16 %v1485, %v1484
  %v1530 = vpack.c.bf16 %v1487, %v1486
  %v1531 = vpack.c.bf16 %v1489, %v1488
  %v1532 = vpack.c.bf16 %v1491, %v1490
  %v1533 = vpack.c.bf16 %v1493, %v1492
  %v1534 = vpack.c.bf16 %v1495, %v1494
  %v1535 = vpack.c.bf16 %v1497, %v1496
  %v1536 = vpack.c.bf16 %v1499, %v1498
  %v1537 = vpack.c.bf16 %v1501, %v1500
  %v1538 = vpack.c.bf16 %v1503, %v1502
  %v1539 = vpack.c.bf16 %v1505, %v1504
  %v1540 = vpack.c.bf16 %v1507, %v1506
  %v1541 = vpack.c.bf16 %v1509, %v1508
  %v1542 = vld [vmem:[%s2] sm:$0xf]
  %v1543 = vld [vmem:[%s2 + $0x4] sm:$0xf]
  %v1544 = vld [vmem:[%s2 + $0x8] sm:$0xf]
  %v1545 = vld [vmem:[%s2 + $0xc] sm:$0xf]
  %v1546 = vld [vmem:[%s2 + $0x10] sm:$0xf]
  %v1547 = vld [vmem:[%s2 + $0x14] sm:$0xf]
  %v1548 = vld [vmem:[%s2 + $0x18] sm:$0xf]
  %v1549 = vld [vmem:[%s2 + $0x1c] sm:$0xf]
  %v1550 = vld [vmem:[%s2 + $0x20] sm:$0xf]
  %v1551 = vld [vmem:[%s2 + $0x24] sm:$0xf]
  %v1552 = vld [vmem:[%s2 + $0x28] sm:$0xf]
  %v1553 = vld [vmem:[%s2 + $0x2c] sm:$0xf]
  %v1554 = vld [vmem:[%s2 + $0x30] sm:$0xf]
  %v1555 = vld [vmem:[%s2 + $0x34] sm:$0xf]
  %v1556 = vld [vmem:[%s2 + $0x38] sm:$0xf]
  %v1557 = vld [vmem:[%s2 + $0x3c] sm:$0xf]
  %v1558 = vld [vmem:[%s3] sm:$0x1]
  %v1560 = vlaneseq
  %v1561 = vshrl.u32 %v1560, 7
  %v1562 = vsub.s32 0, %v1561
  %v1563 = vrot.slane %v1558, %v1562
  %v1581 = vunpack.c.l.b16 %v1542
  %v1582 = vunpack.c.l.b16 %v1543
  %v1583 = vunpack.c.l.b16 %v1544
  %v1584 = vunpack.c.l.b16 %v1545
  %v1585 = vunpack.c.l.b16 %v1546
  %v1586 = vunpack.c.l.b16 %v1547
  %v1587 = vunpack.c.l.b16 %v1548
  %v1588 = vunpack.c.l.b16 %v1549
  %v1589 = vunpack.c.l.b16 %v1550
  %v1590 = vunpack.c.l.b16 %v1551
  %v1591 = vunpack.c.l.b16 %v1552
  %v1592 = vunpack.c.l.b16 %v1553
  %v1593 = vunpack.c.l.b16 %v1554
  %v1594 = vunpack.c.l.b16 %v1555
  %v1595 = vunpack.c.l.b16 %v1556
  %v1596 = vunpack.c.l.b16 %v1557
  %v1597 = vpack.c.b16 %v1582, %v1581
  %v1598 = vpack.c.b16 %v1584, %v1583
  %v1599 = vpack.c.b16 %v1586, %v1585
  %v1600 = vpack.c.b16 %v1588, %v1587
  %v1601 = vpack.c.b16 %v1590, %v1589
  %v1602 = vpack.c.b16 %v1592, %v1591
  %v1603 = vpack.c.b16 %v1594, %v1593
  %v1604 = vpack.c.b16 %v1596, %v1595
  %1613 = vmatprep.subr.bf16.mxu0 0
  %1614 = vmatpush1.bf16.msra.mxu0 %v1597
  %1615 = vmatprep.subr.bf16.mxu0 0
  %1616 = vmatpush1.bf16.msra.mxu0 %v1598
  %1617 = vmatprep.subr.bf16.mxu0 0
  %1618 = vmatpush1.bf16.msra.mxu0 %v1599
  %1619 = vmatprep.subr.bf16.mxu0 0
  %1620 = vmatpush1.bf16.msra.mxu0 %v1600
  %1621 = vmatprep.subr.bf16.mxu0 0
  %1622 = vmatpush1.bf16.msra.mxu0 %v1601
  %1623 = vmatprep.subr.bf16.mxu0 0
  %1624 = vmatpush1.bf16.msra.mxu0 %v1602
  %1625 = vmatprep.subr.bf16.mxu0 0
  %1626 = vmatpush1.bf16.msra.mxu0 %v1603
  %1627 = vmatprep.subr.bf16.mxu0 0
  %1628 = vmatpush1.bf16.msra.mxu0 %v1604
  %1629 = vmatprep.subr.bf16.mxu0 0
  %1630 = vmatpush1.bf16.msra.mxu0 0
  %1631 = vmatprep.subr.bf16.mxu0 0
  %1632 = vmatpush1.bf16.msra.mxu0 0
  %1633 = vmatprep.subr.bf16.mxu0 0
  %1634 = vmatpush1.bf16.msra.mxu0 0
  %1635 = vmatprep.subr.bf16.mxu0 0
  %1636 = vmatpush1.bf16.msra.mxu0 0
  %1637 = vmatprep.subr.bf16.mxu0 0
  %1638 = vmatpush1.bf16.msra.mxu0 0
  %1639 = vmatprep.subr.bf16.mxu0 0
  %1640 = vmatpush1.bf16.msra.mxu0 0
  %1641 = vmatprep.subr.bf16.mxu0 0
  %1642 = vmatpush1.bf16.msra.mxu0 0
  %1643 = vmatprep.subr.bf16.mxu0 0
  %1644 = vmatpush1.bf16.msra.mxu0 0
  %1645 = vmatprep.mubr.bf16.mxu0 0
  %1646 = vmatmul.mubr.bf16.gmra.mrb[0].mxu0 %v1510
  %v1647 = vpop.f32.mrb[0].mxu0
  %v1648 = vadd.f32 %v1563, %v1647
  %v1649 = vpop.f32.mrb[0].mxu0
  %v1650 = vpop.f32.mrb[0].mxu0
  %v1651 = vadd.f32 %v1563, %v1650
  %v1652 = vpop.f32.mrb[0].mxu0
  %1653 = vmatprep.mubr.bf16.mxu0 0
  %1654 = vmatmul.mubr.bf16.gmra.mrb[0].mxu0 %v1511
  %v1655 = vpop.f32.mrb[0].mxu0
  %v1656 = vadd.f32 %v1563, %v1655
  %v1657 = vpop.f32.mrb[0].mxu0
  %v1658 = vpop.f32.mrb[0].mxu0
  %v1659 = vadd.f32 %v1563, %v1658
  %v1660 = vpop.f32.mrb[0].mxu0
  %1661 = vmatprep.mubr.bf16.mxu0 0
  %1662 = vmatmul.mubr.bf16.gmra.mrb[0].mxu0 %v1512
  %v1663 = vpop.f32.mrb[0].mxu0
  %v1664 = vadd.f32 %v1563, %v1663
  %v1665 = vpop.f32.mrb[0].mxu0
  %v1666 = vpop.f32.mrb[0].mxu0
  %v1667 = vadd.f32 %v1563, %v1666
  %v1668 = vpop.f32.mrb[0].mxu0
  %1669 = vmatprep.mubr.bf16.mxu0 0
  %1670 = vmatmul.mubr.bf16.gmra.mrb[0].mxu0 %v1513
  %v1671 = vpop.f32.mrb[0].mxu0
  %v1672 = vadd.f32 %v1563, %v1671
  %v1673 = vpop.f32.mrb[0].mxu0
  %v1674 = vpop.f32.mrb[0].mxu0
  %v1675 = vadd.f32 %v1563, %v1674
  %v1676 = vpop.f32.mrb[0].mxu0
  %1677 = vmatprep.mubr.bf16.mxu0 0
  %1678 = vmatmul.mubr.bf16.gmra.mrb[0].mxu0 %v1514
  %v1679 = vpop.f32.mrb[0].mxu0
  %v1680 = vadd.f32 %v1563, %v1679
  %v1681 = vpop.f32.mrb[0].mxu0
  %v1682 = vpop.f32.mrb[0].mxu0
  %v1683 = vadd.f32 %v1563, %v1682
  %v1684 = vpop.f32.mrb[0].mxu0
  %1685 = vmatprep.mubr.bf16.mxu0 0
  %1686 = vmatmul.mubr.bf16.gmra.mrb[0].mxu0 %v1515
  %v1687 = vpop.f32.mrb[0].mxu0
  %v1688 = vadd.f32 %v1563, %v1687
  %v1689 = vpop.f32.mrb[0].mxu0
  %v1690 = vpop.f32.mrb[0].mxu0
  %v1691 = vadd.f32 %v1563, %v1690
  %v1692 = vpop.f32.mrb[0].mxu0
  %1693 = vmatprep.mubr.bf16.mxu0 0
  %1694 = vmatmul.mubr.bf16.gmra.mrb[0].mxu0 %v1516
  %v1695 = vpop.f32.mrb[0].mxu0
  %v1696 = vadd.f32 %v1563, %v1695
  %v1697 = vpop.f32.mrb[0].mxu0
  %v1698 = vpop.f32.mrb[0].mxu0
  %v1699 = vadd.f32 %v1563, %v1698
  %v1700 = vpop.f32.mrb[0].mxu0
  %1701 = vmatprep.mubr.bf16.mxu0 0
  %1702 = vmatmul.mubr.bf16.gmra.mrb[0].mxu0 %v1517
  %v1703 = vpop.f32.mrb[0].mxu0
  %v1704 = vadd.f32 %v1563, %v1703
  %v1705 = vpop.f32.mrb[0].mxu0
  %v1706 = vpop.f32.mrb[0].mxu0
  %v1707 = vadd.f32 %v1563, %v1706
  %v1708 = vpop.f32.mrb[0].mxu0
  %1709 = vmatprep.mubr.bf16.mxu0 0
  %1710 = vmatmul.mubr.bf16.gmra.mrb[0].mxu0 %v1518
  %v1711 = vpop.f32.mrb[0].mxu0
  %v1712 = vadd.f32 %v1563, %v1711
  %v1713 = vpop.f32.mrb[0].mxu0
  %v1714 = vpop.f32.mrb[0].mxu0
  %v1715 = vadd.f32 %v1563, %v1714
  %v1716 = vpop.f32.mrb[0].mxu0
  %1717 = vmatprep.mubr.bf16.mxu0 0
  %1718 = vmatmul.mubr.bf16.gmra.mrb[0].mxu0 %v1519
  %v1719 = vpop.f32.mrb[0].mxu0
  %v1720 = vadd.f32 %v1563, %v1719
  %v1721 = vpop.f32.mrb[0].mxu0
  %v1722 = vpop.f32.mrb[0].mxu0
  %v1723 = vadd.f32 %v1563, %v1722
  %v1724 = vpop.f32.mrb[0].mxu0
  %1725 = vmatprep.mubr.bf16.mxu0 0
  %1726 = vmatmul.mubr.bf16.gmra.mrb[0].mxu0 %v1520
  %v1727 = vpop.f32.mrb[0].mxu0
  %v1728 = vadd.f32 %v1563, %v1727
  %v1729 = vpop.f32.mrb[0].mxu0
  %v1730 = vpop.f32.mrb[0].mxu0
  %v1731 = vadd.f32 %v1563, %v1730
  %v1732 = vpop.f32.mrb[0].mxu0
  %1733 = vmatprep.mubr.bf16.mxu0 0
  %1734 = vmatmul.mubr.bf16.gmra.mrb[0].mxu0 %v1521
  %v1735 = vpop.f32.mrb[0].mxu0
  %v1736 = vadd.f32 %v1563, %v1735
  %v1737 = vpop.f32.mrb[0].mxu0
  %v1738 = vpop.f32.mrb[0].mxu0
  %v1739 = vadd.f32 %v1563, %v1738
  %v1740 = vpop.f32.mrb[0].mxu0
  %1741 = vmatprep.mubr.bf16.mxu0 0
  %1742 = vmatmul.mubr.bf16.gmra.mrb[0].mxu0 %v1522
  %v1743 = vpop.f32.mrb[0].mxu0
  %v1744 = vadd.f32 %v1563, %v1743
  %v1745 = vpop.f32.mrb[0].mxu0
  %v1746 = vpop.f32.mrb[0].mxu0
  %v1747 = vadd.f32 %v1563, %v1746
  %v1748 = vpop.f32.mrb[0].mxu0
  %1749 = vmatprep.mubr.bf16.mxu0 0
  %1750 = vmatmul.mubr.bf16.gmra.mrb[0].mxu0 %v1523
  %v1751 = vpop.f32.mrb[0].mxu0
  %v1752 = vadd.f32 %v1563, %v1751
  %v1753 = vpop.f32.mrb[0].mxu0
  %v1754 = vpop.f32.mrb[0].mxu0
  %v1755 = vadd.f32 %v1563, %v1754
  %v1756 = vpop.f32.mrb[0].mxu0
  %1757 = vmatprep.mubr.bf16.mxu0 0
  %1758 = vmatmul.mubr.bf16.gmra.mrb[0].mxu0 %v1524
  %v1759 = vpop.f32.mrb[0].mxu0
  %v1760 = vadd.f32 %v1563, %v1759
  %v1761 = vpop.f32.mrb[0].mxu0
  %v1762 = vpop.f32.mrb[0].mxu0
  %v1763 = vadd.f32 %v1563, %v1762
  %v1764 = vpop.f32.mrb[0].mxu0
  %1765 = vmatprep.mubr.bf16.mxu0 0
  %1766 = vmatmul.mubr.bf16.gmra.mrb[0].mxu0 %v1525
  %v1767 = vpop.f32.mrb[0].mxu0
  %v1768 = vadd.f32 %v1563, %v1767
  %v1769 = vpop.f32.mrb[0].mxu0
  %v1770 = vpop.f32.mrb[0].mxu0
  %v1771 = vadd.f32 %v1563, %v1770
  %v1772 = vpop.f32.mrb[0].mxu0
  %1773 = vmatprep.mubr.bf16.mxu0 0
  %1774 = vmatmul.mubr.bf16.gmra.mrb[0].mxu0 %v1526
  %v1775 = vpop.f32.mrb[0].mxu0
  %v1776 = vadd.f32 %v1563, %v1775
  %v1777 = vpop.f32.mrb[0].mxu0
  %v1778 = vpop.f32.mrb[0].mxu0
  %v1779 = vadd.f32 %v1563, %v1778
  %v1780 = vpop.f32.mrb[0].mxu0
  %1781 = vmatprep.mubr.bf16.mxu0 0
  %1782 = vmatmul.mubr.bf16.gmra.mrb[0].mxu0 %v1527
  %v1783 = vpop.f32.mrb[0].mxu0
  %v1784 = vadd.f32 %v1563, %v1783
  %v1785 = vpop.f32.mrb[0].mxu0
  %v1786 = vpop.f32.mrb[0].mxu0
  %v1787 = vadd.f32 %v1563, %v1786
  %v1788 = vpop.f32.mrb[0].mxu0
  %1789 = vmatprep.mubr.bf16.mxu0 0
  %1790 = vmatmul.mubr.bf16.gmra.mrb[0].mxu0 %v1528
  %v1791 = vpop.f32.mrb[0].mxu0
  %v1792 = vadd.f32 %v1563, %v1791
  %v1793 = vpop.f32.mrb[0].mxu0
  %v1794 = vpop.f32.mrb[0].mxu0
  %v1795 = vadd.f32 %v1563, %v1794
  %v1796 = vpop.f32.mrb[0].mxu0
  %1797 = vmatprep.mubr.bf16.mxu0 0
  %1798 = vmatmul.mubr.bf16.gmra.mrb[0].mxu0 %v1529
  %v1799 = vpop.f32.mrb[0].mxu0
  %v1800 = vadd.f32 %v1563, %v1799
  %v1801 = vpop.f32.mrb[0].mxu0
  %v1802 = vpop.f32.mrb[0].mxu0
  %v1803 = vadd.f32 %v1563, %v1802
  %v1804 = vpop.f32.mrb[0].mxu0
  %1805 = vmatprep.mubr.bf16.mxu0 0
  %1806 = vmatmul.mubr.bf16.gmra.mrb[0].mxu0 %v1530
  %v1807 = vpop.f32.mrb[0].mxu0
  %v1808 = vadd.f32 %v1563, %v1807
  %v1809 = vpop.f32.mrb[0].mxu0
  %v1810 = vpop.f32.mrb[0].mxu0
  %v1811 = vadd.f32 %v1563, %v1810
  %v1812 = vpop.f32.mrb[0].mxu0
  %1813 = vmatprep.mubr.bf16.mxu0 0
  %1814 = vmatmul.mubr.bf16.gmra.mrb[0].mxu0 %v1531
  %v1815 = vpop.f32.mrb[0].mxu0
  %v1816 = vadd.f32 %v1563, %v1815
  %v1817 = vpop.f32.mrb[0].mxu0
  %v1818 = vpop.f32.mrb[0].mxu0
  %v1819 = vadd.f32 %v1563, %v1818
  %v1820 = vpop.f32.mrb[0].mxu0
  %1821 = vmatprep.mubr.bf16.mxu0 0
  %1822 = vmatmul.mubr.bf16.gmra.mrb[0].mxu0 %v1532
  %v1823 = vpop.f32.mrb[0].mxu0
  %v1824 = vadd.f32 %v1563, %v1823
  %v1825 = vpop.f32.mrb[0].mxu0
  %v1826 = vpop.f32.mrb[0].mxu0
  %v1827 = vadd.f32 %v1563, %v1826
  %v1828 = vpop.f32.mrb[0].mxu0
  %1829 = vmatprep.mubr.bf16.mxu0 0
  %1830 = vmatmul.mubr.bf16.gmra.mrb[0].mxu0 %v1533
  %v1831 = vpop.f32.mrb[0].mxu0
  %v1832 = vadd.f32 %v1563, %v1831
  %v1833 = vpop.f32.mrb[0].mxu0
  %v1834 = vpop.f32.mrb[0].mxu0
  %v1835 = vadd.f32 %v1563, %v1834
  %v1836 = vpop.f32.mrb[0].mxu0
  %1837 = vmatprep.mubr.bf16.mxu0 0
  %1838 = vmatmul.mubr.bf16.gmra.mrb[0].mxu0 %v1534
  %v1839 = vpop.f32.mrb[0].mxu0
  %v1840 = vadd.f32 %v1563, %v1839
  %v1841 = vpop.f32.mrb[0].mxu0
  %v1842 = vpop.f32.mrb[0].mxu0
  %v1843 = vadd.f32 %v1563, %v1842
  %v1844 = vpop.f32.mrb[0].mxu0
  %1845 = vmatprep.mubr.bf16.mxu0 0
  %1846 = vmatmul.mubr.bf16.gmra.mrb[0].mxu0 %v1535
  %v1847 = vpop.f32.mrb[0].mxu0
  %v1848 = vadd.f32 %v1563, %v1847
  %v1849 = vpop.f32.mrb[0].mxu0
  %v1850 = vpop.f32.mrb[0].mxu0
  %v1851 = vadd.f32 %v1563, %v1850
  %v1852 = vpop.f32.mrb[0].mxu0
  %1853 = vmatprep.mubr.bf16.mxu0 0
  %1854 = vmatmul.mubr.bf16.gmra.mrb[0].mxu0 %v1536
  %v1855 = vpop.f32.mrb[0].mxu0
  %v1856 = vadd.f32 %v1563, %v1855
  %v1857 = vpop.f32.mrb[0].mxu0
  %v1858 = vpop.f32.mrb[0].mxu0
  %v1859 = vadd.f32 %v1563, %v1858
  %v1860 = vpop.f32.mrb[0].mxu0
  %1861 = vmatprep.mubr.bf16.mxu0 0
  %1862 = vmatmul.mubr.bf16.gmra.mrb[0].mxu0 %v1537
  %v1863 = vpop.f32.mrb[0].mxu0
  %v1864 = vadd.f32 %v1563, %v1863
  %v1865 = vpop.f32.mrb[0].mxu0
  %v1866 = vpop.f32.mrb[0].mxu0
  %v1867 = vadd.f32 %v1563, %v1866
  %v1868 = vpop.f32.mrb[0].mxu0
  %1869 = vmatprep.mubr.bf16.mxu0 0
  %1870 = vmatmul.mubr.bf16.gmra.mrb[0].mxu0 %v1538
  %v1871 = vpop.f32.mrb[0].mxu0
  %v1872 = vadd.f32 %v1563, %v1871
  %v1873 = vpop.f32.mrb[0].mxu0
  %v1874 = vpop.f32.mrb[0].mxu0
  %v1875 = vadd.f32 %v1563, %v1874
  %v1876 = vpop.f32.mrb[0].mxu0
  %1877 = vmatprep.mubr.bf16.mxu0 0
  %1878 = vmatmul.mubr.bf16.gmra.mrb[0].mxu0 %v1539
  %v1879 = vpop.f32.mrb[0].mxu0
  %v1880 = vadd.f32 %v1563, %v1879
  %v1881 = vpop.f32.mrb[0].mxu0
  %v1882 = vpop.f32.mrb[0].mxu0
  %v1883 = vadd.f32 %v1563, %v1882
  %v1884 = vpop.f32.mrb[0].mxu0
  %1885 = vmatprep.mubr.bf16.mxu0 0
  %1886 = vmatmul.mubr.bf16.gmra.mrb[0].mxu0 %v1540
  %v1887 = vpop.f32.mrb[0].mxu0
  %v1888 = vadd.f32 %v1563, %v1887
  %v1889 = vpop.f32.mrb[0].mxu0
  %v1890 = vpop.f32.mrb[0].mxu0
  %v1891 = vadd.f32 %v1563, %v1890
  %v1892 = vpop.f32.mrb[0].mxu0
  %1893 = vmatprep.mubr.bf16.mxu0 0
  %1894 = vmatmul.mubr.bf16.gmra.mrb[0].mxu0 %v1541
  %v1895 = vpop.f32.mrb[0].mxu0
  %v1896 = vadd.f32 %v1563, %v1895
  %v1897 = vpop.f32.mrb[0].mxu0
  %v1898 = vpop.f32.mrb[0].mxu0
  %v1899 = vadd.f32 %v1563, %v1898
  %v1900 = vpop.f32.mrb[0].mxu0
  %1901 = vdwg.mxu0
  %v1902 = vmax.f32 %v1648, 0.0
  %v1903 = vmax.f32 %v1651, 0.0
  %v1904 = vmax.f32 %v1656, 0.0
  %v1905 = vmax.f32 %v1659, 0.0
  %v1906 = vmax.f32 %v1664, 0.0
  %v1907 = vmax.f32 %v1667, 0.0
  %v1908 = vmax.f32 %v1672, 0.0
  %v1909 = vmax.f32 %v1675, 0.0
  %v1910 = vmax.f32 %v1680, 0.0
  %v1911 = vmax.f32 %v1683, 0.0
  %v1912 = vmax.f32 %v1688, 0.0
  %v1913 = vmax.f32 %v1691, 0.0
  %v1914 = vmax.f32 %v1696, 0.0
  %v1915 = vmax.f32 %v1699, 0.0
  %v1916 = vmax.f32 %v1704, 0.0
  %v1917 = vmax.f32 %v1707, 0.0
  %v1918 = vmax.f32 %v1712, 0.0
  %v1919 = vmax.f32 %v1715, 0.0
  %v1920 = vmax.f32 %v1720, 0.0
  %v1921 = vmax.f32 %v1723, 0.0
  %v1922 = vmax.f32 %v1728, 0.0
  %v1923 = vmax.f32 %v1731, 0.0
  %v1924 = vmax.f32 %v1736, 0.0
  %v1925 = vmax.f32 %v1739, 0.0
  %v1926 = vmax.f32 %v1744, 0.0
  %v1927 = vmax.f32 %v1747, 0.0
  %v1928 = vmax.f32 %v1752, 0.0
  %v1929 = vmax.f32 %v1755, 0.0
  %v1930 = vmax.f32 %v1760, 0.0
  %v1931 = vmax.f32 %v1763, 0.0
  %v1932 = vmax.f32 %v1768, 0.0
  %v1933 = vmax.f32 %v1771, 0.0
  %v1934 = vmax.f32 %v1776, 0.0
  %v1935 = vmax.f32 %v1779, 0.0
  %v1936 = vmax.f32 %v1784, 0.0
  %v1937 = vmax.f32 %v1787, 0.0
  %v1938 = vmax.f32 %v1792, 0.0
  %v1939 = vmax.f32 %v1795, 0.0
  %v1940 = vmax.f32 %v1800, 0.0
  %v1941 = vmax.f32 %v1803, 0.0
  %v1942 = vmax.f32 %v1808, 0.0
  %v1943 = vmax.f32 %v1811, 0.0
  %v1944 = vmax.f32 %v1816, 0.0
  %v1945 = vmax.f32 %v1819, 0.0
  %v1946 = vmax.f32 %v1824, 0.0
  %v1947 = vmax.f32 %v1827, 0.0
  %v1948 = vmax.f32 %v1832, 0.0
  %v1949 = vmax.f32 %v1835, 0.0
  %v1950 = vmax.f32 %v1840, 0.0
  %v1951 = vmax.f32 %v1843, 0.0
  %v1952 = vmax.f32 %v1848, 0.0
  %v1953 = vmax.f32 %v1851, 0.0
  %v1954 = vmax.f32 %v1856, 0.0
  %v1955 = vmax.f32 %v1859, 0.0
  %v1956 = vmax.f32 %v1864, 0.0
  %v1957 = vmax.f32 %v1867, 0.0
  %v1958 = vmax.f32 %v1872, 0.0
  %v1959 = vmax.f32 %v1875, 0.0
  %v1960 = vmax.f32 %v1880, 0.0
  %v1961 = vmax.f32 %v1883, 0.0
  %v1962 = vmax.f32 %v1888, 0.0
  %v1963 = vmax.f32 %v1891, 0.0
  %v1964 = vmax.f32 %v1896, 0.0
  %v1965 = vmax.f32 %v1899, 0.0
  %v1966 = vpack.c.bf16 %v1903, %v1902
  %v1967 = vpack.c.bf16 %v1905, %v1904
  %v1968 = vpack.c.bf16 %v1907, %v1906
  %v1969 = vpack.c.bf16 %v1909, %v1908
  %v1970 = vpack.c.bf16 %v1911, %v1910
  %v1971 = vpack.c.bf16 %v1913, %v1912
  %v1972 = vpack.c.bf16 %v1915, %v1914
  %v1973 = vpack.c.bf16 %v1917, %v1916
  %v1974 = vpack.c.bf16 %v1919, %v1918
  %v1975 = vpack.c.bf16 %v1921, %v1920
  %v1976 = vpack.c.bf16 %v1923, %v1922
  %v1977 = vpack.c.bf16 %v1925, %v1924
  %v1978 = vpack.c.bf16 %v1927, %v1926
  %v1979 = vpack.c.bf16 %v1929, %v1928
  %v1980 = vpack.c.bf16 %v1931, %v1930
  %v1981 = vpack.c.bf16 %v1933, %v1932
  %v1982 = vpack.c.bf16 %v1935, %v1934
  %v1983 = vpack.c.bf16 %v1937, %v1936
  %v1984 = vpack.c.bf16 %v1939, %v1938
  %v1985 = vpack.c.bf16 %v1941, %v1940
  %v1986 = vpack.c.bf16 %v1943, %v1942
  %v1987 = vpack.c.bf16 %v1945, %v1944
  %v1988 = vpack.c.bf16 %v1947, %v1946
  %v1989 = vpack.c.bf16 %v1949, %v1948
  %v1990 = vpack.c.bf16 %v1951, %v1950
  %v1991 = vpack.c.bf16 %v1953, %v1952
  %v1992 = vpack.c.bf16 %v1955, %v1954
  %v1993 = vpack.c.bf16 %v1957, %v1956
  %v1994 = vpack.c.bf16 %v1959, %v1958
  %v1995 = vpack.c.bf16 %v1961, %v1960
  %v1996 = vpack.c.bf16 %v1963, %v1962
  %v1997 = vpack.c.bf16 %v1965, %v1964
  %v1998 = vld [vmem:[%s4] sm:$0xf]
  %v1999 = vld [vmem:[%s4 + $0x4] sm:$0xf]
  %v2000 = vld [vmem:[%s4 + $0x8] sm:$0xf]
  %v2001 = vld [vmem:[%s4 + $0xc] sm:$0xf]
  %v2002 = vld [vmem:[%s4 + $0x10] sm:$0xf]
  %v2003 = vld [vmem:[%s4 + $0x14] sm:$0xf]
  %v2004 = vld [vmem:[%s4 + $0x18] sm:$0xf]
  %v2005 = vld [vmem:[%s4 + $0x1c] sm:$0xf]
  %v2006 = vld [vmem:[%s4 + $0x20] sm:$0xf]
  %v2007 = vld [vmem:[%s4 + $0x24] sm:$0xf]
  %v2008 = vld [vmem:[%s4 + $0x28] sm:$0xf]
  %v2009 = vld [vmem:[%s4 + $0x2c] sm:$0xf]
  %v2010 = vld [vmem:[%s4 + $0x30] sm:$0xf]
  %v2011 = vld [vmem:[%s4 + $0x34] sm:$0xf]
  %v2012 = vld [vmem:[%s4 + $0x38] sm:$0xf]
  %v2013 = vld [vmem:[%s4 + $0x3c] sm:$0xf]
  %v2014 = vld [vmem:[%s5] sm:$0x1]
  %v2016 = vlaneseq
  %v2017 = vshrl.u32 %v2016, 7
  %v2018 = vsub.s32 0, %v2017
  %v2019 = vrot.slane %v2014, %v2018
  %v2037 = vunpack.c.l.b16 %v1998
  %v2038 = vunpack.c.l.b16 %v1999
  %v2039 = vunpack.c.l.b16 %v2000
  %v2040 = vunpack.c.l.b16 %v2001
  %v2041 = vunpack.c.l.b16 %v2002
  %v2042 = vunpack.c.l.b16 %v2003
  %v2043 = vunpack.c.l.b16 %v2004
  %v2044 = vunpack.c.l.b16 %v2005
  %v2045 = vunpack.c.l.b16 %v2006
  %v2046 = vunpack.c.l.b16 %v2007
  %v2047 = vunpack.c.l.b16 %v2008
  %v2048 = vunpack.c.l.b16 %v2009
  %v2049 = vunpack.c.l.b16 %v2010
  %v2050 = vunpack.c.l.b16 %v2011
  %v2051 = vunpack.c.l.b16 %v2012
  %v2052 = vunpack.c.l.b16 %v2013
  %v2053 = vpack.c.b16 %v2038, %v2037
  %v2054 = vpack.c.b16 %v2040, %v2039
  %v2055 = vpack.c.b16 %v2042, %v2041
  %v2056 = vpack.c.b16 %v2044, %v2043
  %v2057 = vpack.c.b16 %v2046, %v2045
  %v2058 = vpack.c.b16 %v2048, %v2047
  %v2059 = vpack.c.b16 %v2050, %v2049
  %v2060 = vpack.c.b16 %v2052, %v2051
  %2069 = vmatprep.subr.bf16.mxu0 0
  %2070 = vmatpush1.bf16.msra.mxu0 %v2053
  %2071 = vmatprep.subr.bf16.mxu0 0
  %2072 = vmatpush1.bf16.msra.mxu0 %v2054
  %2073 = vmatprep.subr.bf16.mxu0 0
  %2074 = vmatpush1.bf16.msra.mxu0 %v2055
  %2075 = vmatprep.subr.bf16.mxu0 0
  %2076 = vmatpush1.bf16.msra.mxu0 %v2056
  %2077 = vmatprep.subr.bf16.mxu0 0
  %2078 = vmatpush1.bf16.msra.mxu0 %v2057
  %2079 = vmatprep.subr.bf16.mxu0 0
  %2080 = vmatpush1.bf16.msra.mxu0 %v2058
  %2081 = vmatprep.subr.bf16.mxu0 0
  %2082 = vmatpush1.bf16.msra.mxu0 %v2059
  %2083 = vmatprep.subr.bf16.mxu0 0
  %2084 = vmatpush1.bf16.msra.mxu0 %v2060
  %2085 = vmatprep.subr.bf16.mxu0 0
  %2086 = vmatpush1.bf16.msra.mxu0 0
  %2087 = vmatprep.subr.bf16.mxu0 0
  %2088 = vmatpush1.bf16.msra.mxu0 0
  %2089 = vmatprep.subr.bf16.mxu0 0
  %2090 = vmatpush1.bf16.msra.mxu0 0
  %2091 = vmatprep.subr.bf16.mxu0 0
  %2092 = vmatpush1.bf16.msra.mxu0 0
  %2093 = vmatprep.subr.bf16.mxu0 0
  %2094 = vmatpush1.bf16.msra.mxu0 0
  %2095 = vmatprep.subr.bf16.mxu0 0
  %2096 = vmatpush1.bf16.msra.mxu0 0
  %2097 = vmatprep.subr.bf16.mxu0 0
  %2098 = vmatpush1.bf16.msra.mxu0 0
  %2099 = vmatprep.subr.bf16.mxu0 0
  %2100 = vmatpush1.bf16.msra.mxu0 0
  %2101 = vmatprep.mubr.bf16.mxu0 0
  %2102 = vmatmul.mubr.bf16.gmra.mrb[0].mxu0 %v1966
  %v2103 = vpop.f32.mrb[0].mxu0
  %v2104 = vadd.f32 %v2019, %v2103
  %v2105 = vpop.f32.mrb[0].mxu0
  %v2106 = vpop.f32.mrb[0].mxu0
  %v2107 = vadd.f32 %v2019, %v2106
  %v2108 = vpop.f32.mrb[0].mxu0
  %2109 = vmatprep.mubr.bf16.mxu0 0
  %2110 = vmatmul.mubr.bf16.gmra.mrb[0].mxu0 %v1967
  %v2111 = vpop.f32.mrb[0].mxu0
  %v2112 = vadd.f32 %v2019, %v2111
  %v2113 = vpop.f32.mrb[0].mxu0
  %v2114 = vpop.f32.mrb[0].mxu0
  %v2115 = vadd.f32 %v2019, %v2114
  %v2116 = vpop.f32.mrb[0].mxu0
  %2117 = vmatprep.mubr.bf16.mxu0 0
  %2118 = vmatmul.mubr.bf16.gmra.mrb[0].mxu0 %v1968
  %v2119 = vpop.f32.mrb[0].mxu0
  %v2120 = vadd.f32 %v2019, %v2119
  %v2121 = vpop.f32.mrb[0].mxu0
  %v2122 = vpop.f32.mrb[0].mxu0
  %v2123 = vadd.f32 %v2019, %v2122
  %v2124 = vpop.f32.mrb[0].mxu0
  %2125 = vmatprep.mubr.bf16.mxu0 0
  %2126 = vmatmul.mubr.bf16.gmra.mrb[0].mxu0 %v1969
  %v2127 = vpop.f32.mrb[0].mxu0
  %v2128 = vadd.f32 %v2019, %v2127
  %v2129 = vpop.f32.mrb[0].mxu0
  %v2130 = vpop.f32.mrb[0].mxu0
  %v2131 = vadd.f32 %v2019, %v2130
  %v2132 = vpop.f32.mrb[0].mxu0
  %2133 = vmatprep.mubr.bf16.mxu0 0
  %2134 = vmatmul.mubr.bf16.gmra.mrb[0].mxu0 %v1970
  %v2135 = vpop.f32.mrb[0].mxu0
  %v2136 = vadd.f32 %v2019, %v2135
  %v2137 = vpop.f32.mrb[0].mxu0
  %v2138 = vpop.f32.mrb[0].mxu0
  %v2139 = vadd.f32 %v2019, %v2138
  %v2140 = vpop.f32.mrb[0].mxu0
  %2141 = vmatprep.mubr.bf16.mxu0 0
  %2142 = vmatmul.mubr.bf16.gmra.mrb[0].mxu0 %v1971
  %v2143 = vpop.f32.mrb[0].mxu0
  %v2144 = vadd.f32 %v2019, %v2143
  %v2145 = vpop.f32.mrb[0].mxu0
  %v2146 = vpop.f32.mrb[0].mxu0
  %v2147 = vadd.f32 %v2019, %v2146
  %v2148 = vpop.f32.mrb[0].mxu0
  %2149 = vmatprep.mubr.bf16.mxu0 0
  %2150 = vmatmul.mubr.bf16.gmra.mrb[0].mxu0 %v1972
  %v2151 = vpop.f32.mrb[0].mxu0
  %v2152 = vadd.f32 %v2019, %v2151
  %v2153 = vpop.f32.mrb[0].mxu0
  %v2154 = vpop.f32.mrb[0].mxu0
  %v2155 = vadd.f32 %v2019, %v2154
  %v2156 = vpop.f32.mrb[0].mxu0
  %2157 = vmatprep.mubr.bf16.mxu0 0
  %2158 = vmatmul.mubr.bf16.gmra.mrb[0].mxu0 %v1973
  %v2159 = vpop.f32.mrb[0].mxu0
  %v2160 = vadd.f32 %v2019, %v2159
  %v2161 = vpop.f32.mrb[0].mxu0
  %v2162 = vpop.f32.mrb[0].mxu0
  %v2163 = vadd.f32 %v2019, %v2162
  %v2164 = vpop.f32.mrb[0].mxu0
  %2165 = vmatprep.mubr.bf16.mxu0 0
  %2166 = vmatmul.mubr.bf16.gmra.mrb[0].mxu0 %v1974
  %v2167 = vpop.f32.mrb[0].mxu0
  %v2168 = vadd.f32 %v2019, %v2167
  %v2169 = vpop.f32.mrb[0].mxu0
  %v2170 = vpop.f32.mrb[0].mxu0
  %v2171 = vadd.f32 %v2019, %v2170
  %v2172 = vpop.f32.mrb[0].mxu0
  %2173 = vmatprep.mubr.bf16.mxu0 0
  %2174 = vmatmul.mubr.bf16.gmra.mrb[0].mxu0 %v1975
  %v2175 = vpop.f32.mrb[0].mxu0
  %v2176 = vadd.f32 %v2019, %v2175
  %v2177 = vpop.f32.mrb[0].mxu0
  %v2178 = vpop.f32.mrb[0].mxu0
  %v2179 = vadd.f32 %v2019, %v2178
  %v2180 = vpop.f32.mrb[0].mxu0
  %2181 = vmatprep.mubr.bf16.mxu0 0
  %2182 = vmatmul.mubr.bf16.gmra.mrb[0].mxu0 %v1976
  %v2183 = vpop.f32.mrb[0].mxu0
  %v2184 = vadd.f32 %v2019, %v2183
  %v2185 = vpop.f32.mrb[0].mxu0
  %v2186 = vpop.f32.mrb[0].mxu0
  %v2187 = vadd.f32 %v2019, %v2186
  %v2188 = vpop.f32.mrb[0].mxu0
  %2189 = vmatprep.mubr.bf16.mxu0 0
  %2190 = vmatmul.mubr.bf16.gmra.mrb[0].mxu0 %v1977
  %v2191 = vpop.f32.mrb[0].mxu0
  %v2192 = vadd.f32 %v2019, %v2191
  %v2193 = vpop.f32.mrb[0].mxu0
  %v2194 = vpop.f32.mrb[0].mxu0
  %v2195 = vadd.f32 %v2019, %v2194
  %v2196 = vpop.f32.mrb[0].mxu0
  %2197 = vmatprep.mubr.bf16.mxu0 0
  %2198 = vmatmul.mubr.bf16.gmra.mrb[0].mxu0 %v1978
  %v2199 = vpop.f32.mrb[0].mxu0
  %v2200 = vadd.f32 %v2019, %v2199
  %v2201 = vpop.f32.mrb[0].mxu0
  %v2202 = vpop.f32.mrb[0].mxu0
  %v2203 = vadd.f32 %v2019, %v2202
  %v2204 = vpop.f32.mrb[0].mxu0
  %2205 = vmatprep.mubr.bf16.mxu0 0
  %2206 = vmatmul.mubr.bf16.gmra.mrb[0].mxu0 %v1979
  %v2207 = vpop.f32.mrb[0].mxu0
  %v2208 = vadd.f32 %v2019, %v2207
  %v2209 = vpop.f32.mrb[0].mxu0
  %v2210 = vpop.f32.mrb[0].mxu0
  %v2211 = vadd.f32 %v2019, %v2210
  %v2212 = vpop.f32.mrb[0].mxu0
  %2213 = vmatprep.mubr.bf16.mxu0 0
  %2214 = vmatmul.mubr.bf16.gmra.mrb[0].mxu0 %v1980
  %v2215 = vpop.f32.mrb[0].mxu0
  %v2216 = vadd.f32 %v2019, %v2215
  %v2217 = vpop.f32.mrb[0].mxu0
  %v2218 = vpop.f32.mrb[0].mxu0
  %v2219 = vadd.f32 %v2019, %v2218
  %v2220 = vpop.f32.mrb[0].mxu0
  %2221 = vmatprep.mubr.bf16.mxu0 0
  %2222 = vmatmul.mubr.bf16.gmra.mrb[0].mxu0 %v1981
  %v2223 = vpop.f32.mrb[0].mxu0
  %v2224 = vadd.f32 %v2019, %v2223
  %v2225 = vpop.f32.mrb[0].mxu0
  %v2226 = vpop.f32.mrb[0].mxu0
  %v2227 = vadd.f32 %v2019, %v2226
  %v2228 = vpop.f32.mrb[0].mxu0
  %2229 = vmatprep.mubr.bf16.mxu0 0
  %2230 = vmatmul.mubr.bf16.gmra.mrb[0].mxu0 %v1982
  %v2231 = vpop.f32.mrb[0].mxu0
  %v2232 = vadd.f32 %v2019, %v2231
  %v2233 = vpop.f32.mrb[0].mxu0
  %v2234 = vpop.f32.mrb[0].mxu0
  %v2235 = vadd.f32 %v2019, %v2234
  %v2236 = vpop.f32.mrb[0].mxu0
  %2237 = vmatprep.mubr.bf16.mxu0 0
  %2238 = vmatmul.mubr.bf16.gmra.mrb[0].mxu0 %v1983
  %v2239 = vpop.f32.mrb[0].mxu0
  %v2240 = vadd.f32 %v2019, %v2239
  %v2241 = vpop.f32.mrb[0].mxu0
  %v2242 = vpop.f32.mrb[0].mxu0
  %v2243 = vadd.f32 %v2019, %v2242
  %v2244 = vpop.f32.mrb[0].mxu0
  %2245 = vmatprep.mubr.bf16.mxu0 0
  %2246 = vmatmul.mubr.bf16.gmra.mrb[0].mxu0 %v1984
  %v2247 = vpop.f32.mrb[0].mxu0
  %v2248 = vadd.f32 %v2019, %v2247
  %v2249 = vpop.f32.mrb[0].mxu0
  %v2250 = vpop.f32.mrb[0].mxu0
  %v2251 = vadd.f32 %v2019, %v2250
  %v2252 = vpop.f32.mrb[0].mxu0
  %2253 = vmatprep.mubr.bf16.mxu0 0
  %2254 = vmatmul.mubr.bf16.gmra.mrb[0].mxu0 %v1985
  %v2255 = vpop.f32.mrb[0].mxu0
  %v2256 = vadd.f32 %v2019, %v2255
  %v2257 = vpop.f32.mrb[0].mxu0
  %v2258 = vpop.f32.mrb[0].mxu0
  %v2259 = vadd.f32 %v2019, %v2258
  %v2260 = vpop.f32.mrb[0].mxu0
  %2261 = vmatprep.mubr.bf16.mxu0 0
  %2262 = vmatmul.mubr.bf16.gmra.mrb[0].mxu0 %v1986
  %v2263 = vpop.f32.mrb[0].mxu0
  %v2264 = vadd.f32 %v2019, %v2263
  %v2265 = vpop.f32.mrb[0].mxu0
  %v2266 = vpop.f32.mrb[0].mxu0
  %v2267 = vadd.f32 %v2019, %v2266
  %v2268 = vpop.f32.mrb[0].mxu0
  %2269 = vmatprep.mubr.bf16.mxu0 0
  %2270 = vmatmul.mubr.bf16.gmra.mrb[0].mxu0 %v1987
  %v2271 = vpop.f32.mrb[0].mxu0
  %v2272 = vadd.f32 %v2019, %v2271
  %v2273 = vpop.f32.mrb[0].mxu0
  %v2274 = vpop.f32.mrb[0].mxu0
  %v2275 = vadd.f32 %v2019, %v2274
  %v2276 = vpop.f32.mrb[0].mxu0
  %2277 = vmatprep.mubr.bf16.mxu0 0
  %2278 = vmatmul.mubr.bf16.gmra.mrb[0].mxu0 %v1988
  %v2279 = vpop.f32.mrb[0].mxu0
  %v2280 = vadd.f32 %v2019, %v2279
  %v2281 = vpop.f32.mrb[0].mxu0
  %v2282 = vpop.f32.mrb[0].mxu0
  %v2283 = vadd.f32 %v2019, %v2282
  %v2284 = vpop.f32.mrb[0].mxu0
  %2285 = vmatprep.mubr.bf16.mxu0 0
  %2286 = vmatmul.mubr.bf16.gmra.mrb[0].mxu0 %v1989
  %v2287 = vpop.f32.mrb[0].mxu0
  %v2288 = vadd.f32 %v2019, %v2287
  %v2289 = vpop.f32.mrb[0].mxu0
  %v2290 = vpop.f32.mrb[0].mxu0
  %v2291 = vadd.f32 %v2019, %v2290
  %v2292 = vpop.f32.mrb[0].mxu0
  %2293 = vmatprep.mubr.bf16.mxu0 0
  %2294 = vmatmul.mubr.bf16.gmra.mrb[0].mxu0 %v1990
  %v2295 = vpop.f32.mrb[0].mxu0
  %v2296 = vadd.f32 %v2019, %v2295
  %v2297 = vpop.f32.mrb[0].mxu0
  %v2298 = vpop.f32.mrb[0].mxu0
  %v2299 = vadd.f32 %v2019, %v2298
  %v2300 = vpop.f32.mrb[0].mxu0
  %2301 = vmatprep.mubr.bf16.mxu0 0
  %2302 = vmatmul.mubr.bf16.gmra.mrb[0].mxu0 %v1991
  %v2303 = vpop.f32.mrb[0].mxu0
  %v2304 = vadd.f32 %v2019, %v2303
  %v2305 = vpop.f32.mrb[0].mxu0
  %v2306 = vpop.f32.mrb[0].mxu0
  %v2307 = vadd.f32 %v2019, %v2306
  %v2308 = vpop.f32.mrb[0].mxu0
  %2309 = vmatprep.mubr.bf16.mxu0 0
  %2310 = vmatmul.mubr.bf16.gmra.mrb[0].mxu0 %v1992
  %v2311 = vpop.f32.mrb[0].mxu0
  %v2312 = vadd.f32 %v2019, %v2311
  %v2313 = vpop.f32.mrb[0].mxu0
  %v2314 = vpop.f32.mrb[0].mxu0
  %v2315 = vadd.f32 %v2019, %v2314
  %v2316 = vpop.f32.mrb[0].mxu0
  %2317 = vmatprep.mubr.bf16.mxu0 0
  %2318 = vmatmul.mubr.bf16.gmra.mrb[0].mxu0 %v1993
  %v2319 = vpop.f32.mrb[0].mxu0
  %v2320 = vadd.f32 %v2019, %v2319
  %v2321 = vpop.f32.mrb[0].mxu0
  %v2322 = vpop.f32.mrb[0].mxu0
  %v2323 = vadd.f32 %v2019, %v2322
  %v2324 = vpop.f32.mrb[0].mxu0
  %2325 = vmatprep.mubr.bf16.mxu0 0
  %2326 = vmatmul.mubr.bf16.gmra.mrb[0].mxu0 %v1994
  %v2327 = vpop.f32.mrb[0].mxu0
  %v2328 = vadd.f32 %v2019, %v2327
  %v2329 = vpop.f32.mrb[0].mxu0
  %v2330 = vpop.f32.mrb[0].mxu0
  %v2331 = vadd.f32 %v2019, %v2330
  %v2332 = vpop.f32.mrb[0].mxu0
  %2333 = vmatprep.mubr.bf16.mxu0 0
  %2334 = vmatmul.mubr.bf16.gmra.mrb[0].mxu0 %v1995
  %v2335 = vpop.f32.mrb[0].mxu0
  %v2336 = vadd.f32 %v2019, %v2335
  %v2337 = vpop.f32.mrb[0].mxu0
  %v2338 = vpop.f32.mrb[0].mxu0
  %v2339 = vadd.f32 %v2019, %v2338
  %v2340 = vpop.f32.mrb[0].mxu0
  %2341 = vmatprep.mubr.bf16.mxu0 0
  %2342 = vmatmul.mubr.bf16.gmra.mrb[0].mxu0 %v1996
  %v2343 = vpop.f32.mrb[0].mxu0
  %v2344 = vadd.f32 %v2019, %v2343
  %v2345 = vpop.f32.mrb[0].mxu0
  %v2346 = vpop.f32.mrb[0].mxu0
  %v2347 = vadd.f32 %v2019, %v2346
  %v2348 = vpop.f32.mrb[0].mxu0
  %2349 = vmatprep.mubr.bf16.mxu0 0
  %2350 = vmatmul.mubr.bf16.gmra.mrb[0].mxu0 %v1997
  %v2351 = vpop.f32.mrb[0].mxu0
  %v2352 = vadd.f32 %v2019, %v2351
  %v2353 = vpop.f32.mrb[0].mxu0
  %v2354 = vpop.f32.mrb[0].mxu0
  %v2355 = vadd.f32 %v2019, %v2354
  %v2356 = vpop.f32.mrb[0].mxu0
  %2357 = vdwg.mxu0
  %v2358 = vmax.f32 %v2104, 0.0
  %v2359 = vmax.f32 %v2107, 0.0
  %v2360 = vmax.f32 %v2112, 0.0
  %v2361 = vmax.f32 %v2115, 0.0
  %v2362 = vmax.f32 %v2120, 0.0
  %v2363 = vmax.f32 %v2123, 0.0
  %v2364 = vmax.f32 %v2128, 0.0
  %v2365 = vmax.f32 %v2131, 0.0
  %v2366 = vmax.f32 %v2136, 0.0
  %v2367 = vmax.f32 %v2139, 0.0
  %v2368 = vmax.f32 %v2144, 0.0
  %v2369 = vmax.f32 %v2147, 0.0
  %v2370 = vmax.f32 %v2152, 0.0
  %v2371 = vmax.f32 %v2155, 0.0
  %v2372 = vmax.f32 %v2160, 0.0
  %v2373 = vmax.f32 %v2163, 0.0
  %v2374 = vmax.f32 %v2168, 0.0
  %v2375 = vmax.f32 %v2171, 0.0
  %v2376 = vmax.f32 %v2176, 0.0
  %v2377 = vmax.f32 %v2179, 0.0
  %v2378 = vmax.f32 %v2184, 0.0
  %v2379 = vmax.f32 %v2187, 0.0
  %v2380 = vmax.f32 %v2192, 0.0
  %v2381 = vmax.f32 %v2195, 0.0
  %v2382 = vmax.f32 %v2200, 0.0
  %v2383 = vmax.f32 %v2203, 0.0
  %v2384 = vmax.f32 %v2208, 0.0
  %v2385 = vmax.f32 %v2211, 0.0
  %v2386 = vmax.f32 %v2216, 0.0
  %v2387 = vmax.f32 %v2219, 0.0
  %v2388 = vmax.f32 %v2224, 0.0
  %v2389 = vmax.f32 %v2227, 0.0
  %v2390 = vmax.f32 %v2232, 0.0
  %v2391 = vmax.f32 %v2235, 0.0
  %v2392 = vmax.f32 %v2240, 0.0
  %v2393 = vmax.f32 %v2243, 0.0
  %v2394 = vmax.f32 %v2248, 0.0
  %v2395 = vmax.f32 %v2251, 0.0
  %v2396 = vmax.f32 %v2256, 0.0
  %v2397 = vmax.f32 %v2259, 0.0
  %v2398 = vmax.f32 %v2264, 0.0
  %v2399 = vmax.f32 %v2267, 0.0
  %v2400 = vmax.f32 %v2272, 0.0
  %v2401 = vmax.f32 %v2275, 0.0
  %v2402 = vmax.f32 %v2280, 0.0
  %v2403 = vmax.f32 %v2283, 0.0
  %v2404 = vmax.f32 %v2288, 0.0
  %v2405 = vmax.f32 %v2291, 0.0
  %v2406 = vmax.f32 %v2296, 0.0
  %v2407 = vmax.f32 %v2299, 0.0
  %v2408 = vmax.f32 %v2304, 0.0
  %v2409 = vmax.f32 %v2307, 0.0
  %v2410 = vmax.f32 %v2312, 0.0
  %v2411 = vmax.f32 %v2315, 0.0
  %v2412 = vmax.f32 %v2320, 0.0
  %v2413 = vmax.f32 %v2323, 0.0
  %v2414 = vmax.f32 %v2328, 0.0
  %v2415 = vmax.f32 %v2331, 0.0
  %v2416 = vmax.f32 %v2336, 0.0
  %v2417 = vmax.f32 %v2339, 0.0
  %v2418 = vmax.f32 %v2344, 0.0
  %v2419 = vmax.f32 %v2347, 0.0
  %v2420 = vmax.f32 %v2352, 0.0
  %v2421 = vmax.f32 %v2355, 0.0
  %v2422 = vld [vmem:[%s6] sm:$0x1]
  %v2424 = vlaneseq
  %v2425 = vshrl.u32 %v2424, 7
  %v2426 = vsub.s32 0, %v2425
  %v2427 = vrot.slane %v2422, %v2426
  %v2429 = vmul.f32 %v2358, %v2427
  %v2430 = vmul.f32 %v2359, %v2427
  %v2431 = vmul.f32 %v2360, %v2427
  %v2432 = vmul.f32 %v2361, %v2427
  %v2433 = vmul.f32 %v2362, %v2427
  %v2434 = vmul.f32 %v2363, %v2427
  %v2435 = vmul.f32 %v2364, %v2427
  %v2436 = vmul.f32 %v2365, %v2427
  %v2437 = vmul.f32 %v2366, %v2427
  %v2438 = vmul.f32 %v2367, %v2427
  %v2439 = vmul.f32 %v2368, %v2427
  %v2440 = vmul.f32 %v2369, %v2427
  %v2441 = vmul.f32 %v2370, %v2427
  %v2442 = vmul.f32 %v2371, %v2427
  %v2443 = vmul.f32 %v2372, %v2427
  %v2444 = vmul.f32 %v2373, %v2427
  %v2445 = vmul.f32 %v2374, %v2427
  %v2446 = vmul.f32 %v2375, %v2427
  %v2447 = vmul.f32 %v2376, %v2427
  %v2448 = vmul.f32 %v2377, %v2427
  %v2449 = vmul.f32 %v2378, %v2427
  %v2450 = vmul.f32 %v2379, %v2427
  %v2451 = vmul.f32 %v2380, %v2427
  %v2452 = vmul.f32 %v2381, %v2427
  %v2453 = vmul.f32 %v2382, %v2427
  %v2454 = vmul.f32 %v2383, %v2427
  %v2455 = vmul.f32 %v2384, %v2427
  %v2456 = vmul.f32 %v2385, %v2427
  %v2457 = vmul.f32 %v2386, %v2427
  %v2458 = vmul.f32 %v2387, %v2427
  %v2459 = vmul.f32 %v2388, %v2427
  %v2460 = vmul.f32 %v2389, %v2427
  %v2461 = vmul.f32 %v2390, %v2427
  %v2462 = vmul.f32 %v2391, %v2427
  %v2463 = vmul.f32 %v2392, %v2427
  %v2464 = vmul.f32 %v2393, %v2427
  %v2465 = vmul.f32 %v2394, %v2427
  %v2466 = vmul.f32 %v2395, %v2427
  %v2467 = vmul.f32 %v2396, %v2427
  %v2468 = vmul.f32 %v2397, %v2427
  %v2469 = vmul.f32 %v2398, %v2427
  %v2470 = vmul.f32 %v2399, %v2427
  %v2471 = vmul.f32 %v2400, %v2427
  %v2472 = vmul.f32 %v2401, %v2427
  %v2473 = vmul.f32 %v2402, %v2427
  %v2474 = vmul.f32 %v2403, %v2427
  %v2475 = vmul.f32 %v2404, %v2427
  %v2476 = vmul.f32 %v2405, %v2427
  %v2477 = vmul.f32 %v2406, %v2427
  %v2478 = vmul.f32 %v2407, %v2427
  %v2479 = vmul.f32 %v2408, %v2427
  %v2480 = vmul.f32 %v2409, %v2427
  %v2481 = vmul.f32 %v2410, %v2427
  %v2482 = vmul.f32 %v2411, %v2427
  %v2483 = vmul.f32 %v2412, %v2427
  %v2484 = vmul.f32 %v2413, %v2427
  %v2485 = vmul.f32 %v2414, %v2427
  %v2486 = vmul.f32 %v2415, %v2427
  %v2487 = vmul.f32 %v2416, %v2427
  %v2488 = vmul.f32 %v2417, %v2427
  %v2489 = vmul.f32 %v2418, %v2427
  %v2490 = vmul.f32 %v2419, %v2427
  %v2491 = vmul.f32 %v2420, %v2427
  %v2492 = vmul.f32 %v2421, %v2427
  %2493 = vadd.xlane.f32.xlu0 %v2429
  %v2494 = vpop.xlane.xlu0 %2493
  %2495 = vadd.xlane.f32.xlu0 %v2430
  %v2496 = vpop.xlane.xlu0 %2495
  %2497 = vadd.xlane.f32.xlu0 %v2431
  %v2498 = vpop.xlane.xlu0 %2497
  %2499 = vadd.xlane.f32.xlu0 %v2432
  %v2500 = vpop.xlane.xlu0 %2499
  %2501 = vadd.xlane.f32.xlu0 %v2433
  %v2502 = vpop.xlane.xlu0 %2501
  %2503 = vadd.xlane.f32.xlu0 %v2434
  %v2504 = vpop.xlane.xlu0 %2503
  %2505 = vadd.xlane.f32.xlu0 %v2435
  %v2506 = vpop.xlane.xlu0 %2505
  %2507 = vadd.xlane.f32.xlu0 %v2436
  %v2508 = vpop.xlane.xlu0 %2507
  %2509 = vadd.xlane.f32.xlu0 %v2437
  %v2510 = vpop.xlane.xlu0 %2509
  %2511 = vadd.xlane.f32.xlu0 %v2438
  %v2512 = vpop.xlane.xlu0 %2511
  %2513 = vadd.xlane.f32.xlu0 %v2439
  %v2514 = vpop.xlane.xlu0 %2513
  %2515 = vadd.xlane.f32.xlu0 %v2440
  %v2516 = vpop.xlane.xlu0 %2515
  %2517 = vadd.xlane.f32.xlu0 %v2441
  %v2518 = vpop.xlane.xlu0 %2517
  %2519 = vadd.xlane.f32.xlu0 %v2442
  %v2520 = vpop.xlane.xlu0 %2519
  %2521 = vadd.xlane.f32.xlu0 %v2443
  %v2522 = vpop.xlane.xlu0 %2521
  %2523 = vadd.xlane.f32.xlu0 %v2444
  %v2524 = vpop.xlane.xlu0 %2523
  %2525 = vadd.xlane.f32.xlu0 %v2445
  %v2526 = vpop.xlane.xlu0 %2525
  %2527 = vadd.xlane.f32.xlu0 %v2446
  %v2528 = vpop.xlane.xlu0 %2527
  %2529 = vadd.xlane.f32.xlu0 %v2447
  %v2530 = vpop.xlane.xlu0 %2529
  %2531 = vadd.xlane.f32.xlu0 %v2448
  %v2532 = vpop.xlane.xlu0 %2531
  %2533 = vadd.xlane.f32.xlu0 %v2449
  %v2534 = vpop.xlane.xlu0 %2533
  %2535 = vadd.xlane.f32.xlu0 %v2450
  %v2536 = vpop.xlane.xlu0 %2535
  %2537 = vadd.xlane.f32.xlu0 %v2451
  %v2538 = vpop.xlane.xlu0 %2537
  %2539 = vadd.xlane.f32.xlu0 %v2452
  %v2540 = vpop.xlane.xlu0 %2539
  %2541 = vadd.xlane.f32.xlu0 %v2453
  %v2542 = vpop.xlane.xlu0 %2541
  %2543 = vadd.xlane.f32.xlu0 %v2454
  %v2544 = vpop.xlane.xlu0 %2543
  %2545 = vadd.xlane.f32.xlu0 %v2455
  %v2546 = vpop.xlane.xlu0 %2545
  %2547 = vadd.xlane.f32.xlu0 %v2456
  %v2548 = vpop.xlane.xlu0 %2547
  %2549 = vadd.xlane.f32.xlu0 %v2457
  %v2550 = vpop.xlane.xlu0 %2549
  %2551 = vadd.xlane.f32.xlu0 %v2458
  %v2552 = vpop.xlane.xlu0 %2551
  %2553 = vadd.xlane.f32.xlu0 %v2459
  %v2554 = vpop.xlane.xlu0 %2553
  %2555 = vadd.xlane.f32.xlu0 %v2460
  %v2556 = vpop.xlane.xlu0 %2555
  %2557 = vadd.xlane.f32.xlu0 %v2461
  %v2558 = vpop.xlane.xlu0 %2557
  %2559 = vadd.xlane.f32.xlu0 %v2462
  %v2560 = vpop.xlane.xlu0 %2559
  %2561 = vadd.xlane.f32.xlu0 %v2463
  %v2562 = vpop.xlane.xlu0 %2561
  %2563 = vadd.xlane.f32.xlu0 %v2464
  %v2564 = vpop.xlane.xlu0 %2563
  %2565 = vadd.xlane.f32.xlu0 %v2465
  %v2566 = vpop.xlane.xlu0 %2565
  %2567 = vadd.xlane.f32.xlu0 %v2466
  %v2568 = vpop.xlane.xlu0 %2567
  %2569 = vadd.xlane.f32.xlu0 %v2467
  %v2570 = vpop.xlane.xlu0 %2569
  %2571 = vadd.xlane.f32.xlu0 %v2468
  %v2572 = vpop.xlane.xlu0 %2571
  %2573 = vadd.xlane.f32.xlu0 %v2469
  %v2574 = vpop.xlane.xlu0 %2573
  %2575 = vadd.xlane.f32.xlu0 %v2470
  %v2576 = vpop.xlane.xlu0 %2575
  %2577 = vadd.xlane.f32.xlu0 %v2471
  %v2578 = vpop.xlane.xlu0 %2577
  %2579 = vadd.xlane.f32.xlu0 %v2472
  %v2580 = vpop.xlane.xlu0 %2579
  %2581 = vadd.xlane.f32.xlu0 %v2473
  %v2582 = vpop.xlane.xlu0 %2581
  %2583 = vadd.xlane.f32.xlu0 %v2474
  %v2584 = vpop.xlane.xlu0 %2583
  %2585 = vadd.xlane.f32.xlu0 %v2475
  %v2586 = vpop.xlane.xlu0 %2585
  %2587 = vadd.xlane.f32.xlu0 %v2476
  %v2588 = vpop.xlane.xlu0 %2587
  %2589 = vadd.xlane.f32.xlu0 %v2477
  %v2590 = vpop.xlane.xlu0 %2589
  %2591 = vadd.xlane.f32.xlu0 %v2478
  %v2592 = vpop.xlane.xlu0 %2591
  %2593 = vadd.xlane.f32.xlu0 %v2479
  %v2594 = vpop.xlane.xlu0 %2593
  %2595 = vadd.xlane.f32.xlu0 %v2480
  %v2596 = vpop.xlane.xlu0 %2595
  %2597 = vadd.xlane.f32.xlu0 %v2481
  %v2598 = vpop.xlane.xlu0 %2597
  %2599 = vadd.xlane.f32.xlu0 %v2482
  %v2600 = vpop.xlane.xlu0 %2599
  %2601 = vadd.xlane.f32.xlu0 %v2483
  %v2602 = vpop.xlane.xlu0 %2601
  %2603 = vadd.xlane.f32.xlu0 %v2484
  %v2604 = vpop.xlane.xlu0 %2603
  %2605 = vadd.xlane.f32.xlu0 %v2485
  %v2606 = vpop.xlane.xlu0 %2605
  %2607 = vadd.xlane.f32.xlu0 %v2486
  %v2608 = vpop.xlane.xlu0 %2607
  %2609 = vadd.xlane.f32.xlu0 %v2487
  %v2610 = vpop.xlane.xlu0 %2609
  %2611 = vadd.xlane.f32.xlu0 %v2488
  %v2612 = vpop.xlane.xlu0 %2611
  %2613 = vadd.xlane.f32.xlu0 %v2489
  %v2614 = vpop.xlane.xlu0 %2613
  %2615 = vadd.xlane.f32.xlu0 %v2490
  %v2616 = vpop.xlane.xlu0 %2615
  %2617 = vadd.xlane.f32.xlu0 %v2491
  %v2618 = vpop.xlane.xlu0 %2617
  %2619 = vadd.xlane.f32.xlu0 %v2492
  %v2620 = vpop.xlane.xlu0 %2619
  %v2621 = vadd.f32 %v357, %v2494
  %v2622 = vadd.f32 %v362, %v2496
  %v2623 = vadd.f32 %v367, %v2498
  %v2624 = vadd.f32 %v372, %v2500
  %v2625 = vadd.f32 %v377, %v2502
  %v2626 = vadd.f32 %v382, %v2504
  %v2627 = vadd.f32 %v387, %v2506
  %v2628 = vadd.f32 %v392, %v2508
  %v2629 = vadd.f32 %v397, %v2510
  %v2630 = vadd.f32 %v402, %v2512
  %v2631 = vadd.f32 %v407, %v2514
  %v2632 = vadd.f32 %v412, %v2516
  %v2633 = vadd.f32 %v417, %v2518
  %v2634 = vadd.f32 %v422, %v2520
  %v2635 = vadd.f32 %v427, %v2522
  %v2636 = vadd.f32 %v432, %v2524
  %v2637 = vadd.f32 %v437, %v2526
  %v2638 = vadd.f32 %v442, %v2528
  %v2639 = vadd.f32 %v447, %v2530
  %v2640 = vadd.f32 %v452, %v2532
  %v2641 = vadd.f32 %v457, %v2534
  %v2642 = vadd.f32 %v462, %v2536
  %v2643 = vadd.f32 %v467, %v2538
  %v2644 = vadd.f32 %v472, %v2540
  %v2645 = vadd.f32 %v477, %v2542
  %v2646 = vadd.f32 %v482, %v2544
  %v2647 = vadd.f32 %v487, %v2546
  %v2648 = vadd.f32 %v492, %v2548
  %v2649 = vadd.f32 %v497, %v2550
  %v2650 = vadd.f32 %v502, %v2552
  %v2651 = vadd.f32 %v507, %v2554
  %v2652 = vadd.f32 %v512, %v2556
  %v2653 = vadd.f32 %v517, %v2558
  %v2654 = vadd.f32 %v522, %v2560
  %v2655 = vadd.f32 %v527, %v2562
  %v2656 = vadd.f32 %v532, %v2564
  %v2657 = vadd.f32 %v537, %v2566
  %v2658 = vadd.f32 %v542, %v2568
  %v2659 = vadd.f32 %v547, %v2570
  %v2660 = vadd.f32 %v552, %v2572
  %v2661 = vadd.f32 %v557, %v2574
  %v2662 = vadd.f32 %v562, %v2576
  %v2663 = vadd.f32 %v567, %v2578
  %v2664 = vadd.f32 %v572, %v2580
  %v2665 = vadd.f32 %v577, %v2582
  %v2666 = vadd.f32 %v582, %v2584
  %v2667 = vadd.f32 %v587, %v2586
  %v2668 = vadd.f32 %v592, %v2588
  %v2669 = vadd.f32 %v597, %v2590
  %v2670 = vadd.f32 %v602, %v2592
  %v2671 = vadd.f32 %v607, %v2594
  %v2672 = vadd.f32 %v612, %v2596
  %v2673 = vadd.f32 %v617, %v2598
  %v2674 = vadd.f32 %v622, %v2600
  %v2675 = vadd.f32 %v627, %v2602
  %v2676 = vadd.f32 %v632, %v2604
  %v2677 = vadd.f32 %v637, %v2606
  %v2678 = vadd.f32 %v642, %v2608
  %v2679 = vadd.f32 %v647, %v2610
  %v2680 = vadd.f32 %v652, %v2612
  %v2681 = vadd.f32 %v657, %v2614
  %v2682 = vadd.f32 %v662, %v2616
  %v2683 = vadd.f32 %v667, %v2618
  %v2684 = vadd.f32 %v672, %v2620
  %s2685 = sld [smem:[#allocation2]]
  %v2686 = vstv %s2685
  %v2687 = vadd.f32 %v2621, %v2686
  %v2688 = vadd.f32 %v2622, %v2686
  %v2689 = vadd.f32 %v2623, %v2686
  %v2690 = vadd.f32 %v2624, %v2686
  %v2691 = vadd.f32 %v2625, %v2686
  %v2692 = vadd.f32 %v2626, %v2686
  %v2693 = vadd.f32 %v2627, %v2686
  %v2694 = vadd.f32 %v2628, %v2686
  %v2695 = vadd.f32 %v2629, %v2686
  %v2696 = vadd.f32 %v2630, %v2686
  %v2697 = vadd.f32 %v2631, %v2686
  %v2698 = vadd.f32 %v2632, %v2686
  %v2699 = vadd.f32 %v2633, %v2686
  %v2700 = vadd.f32 %v2634, %v2686
  %v2701 = vadd.f32 %v2635, %v2686
  %v2702 = vadd.f32 %v2636, %v2686
  %v2703 = vadd.f32 %v2637, %v2686
  %v2704 = vadd.f32 %v2638, %v2686
  %v2705 = vadd.f32 %v2639, %v2686
  %v2706 = vadd.f32 %v2640, %v2686
  %v2707 = vadd.f32 %v2641, %v2686
  %v2708 = vadd.f32 %v2642, %v2686
  %v2709 = vadd.f32 %v2643, %v2686
  %v2710 = vadd.f32 %v2644, %v2686
  %v2711 = vadd.f32 %v2645, %v2686
  %v2712 = vadd.f32 %v2646, %v2686
  %v2713 = vadd.f32 %v2647, %v2686
  %v2714 = vadd.f32 %v2648, %v2686
  %v2715 = vadd.f32 %v2649, %v2686
  %v2716 = vadd.f32 %v2650, %v2686
  %v2717 = vadd.f32 %v2651, %v2686
  %v2718 = vadd.f32 %v2652, %v2686
  %v2719 = vadd.f32 %v2653, %v2686
  %v2720 = vadd.f32 %v2654, %v2686
  %v2721 = vadd.f32 %v2655, %v2686
  %v2722 = vadd.f32 %v2656, %v2686
  %v2723 = vadd.f32 %v2657, %v2686
  %v2724 = vadd.f32 %v2658, %v2686
  %v2725 = vadd.f32 %v2659, %v2686
  %v2726 = vadd.f32 %v2660, %v2686
  %v2727 = vadd.f32 %v2661, %v2686
  %v2728 = vadd.f32 %v2662, %v2686
  %v2729 = vadd.f32 %v2663, %v2686
  %v2730 = vadd.f32 %v2664, %v2686
  %v2731 = vadd.f32 %v2665, %v2686
  %v2732 = vadd.f32 %v2666, %v2686
  %v2733 = vadd.f32 %v2667, %v2686
  %v2734 = vadd.f32 %v2668, %v2686
  %v2735 = vadd.f32 %v2669, %v2686
  %v2736 = vadd.f32 %v2670, %v2686
  %v2737 = vadd.f32 %v2671, %v2686
  %v2738 = vadd.f32 %v2672, %v2686
  %v2739 = vadd.f32 %v2673, %v2686
  %v2740 = vadd.f32 %v2674, %v2686
  %v2741 = vadd.f32 %v2675, %v2686
  %v2742 = vadd.f32 %v2676, %v2686
  %v2743 = vadd.f32 %v2677, %v2686
  %v2744 = vadd.f32 %v2678, %v2686
  %v2745 = vadd.f32 %v2679, %v2686
  %v2746 = vadd.f32 %v2680, %v2686
  %v2747 = vadd.f32 %v2681, %v2686
  %v2748 = vadd.f32 %v2682, %v2686
  %v2749 = vadd.f32 %v2683, %v2686
  %v2750 = vadd.f32 %v2684, %v2686
  %v2751 = vxor.u32 %v2687, 2147483648
  %v2752 = vxor.u32 %v2688, 2147483648
  %v2753 = vxor.u32 %v2689, 2147483648
  %v2754 = vxor.u32 %v2690, 2147483648
  %v2755 = vxor.u32 %v2691, 2147483648
  %v2756 = vxor.u32 %v2692, 2147483648
  %v2757 = vxor.u32 %v2693, 2147483648
  %v2758 = vxor.u32 %v2694, 2147483648
  %v2759 = vxor.u32 %v2695, 2147483648
  %v2760 = vxor.u32 %v2696, 2147483648
  %v2761 = vxor.u32 %v2697, 2147483648
  %v2762 = vxor.u32 %v2698, 2147483648
  %v2763 = vxor.u32 %v2699, 2147483648
  %v2764 = vxor.u32 %v2700, 2147483648
  %v2765 = vxor.u32 %v2701, 2147483648
  %v2766 = vxor.u32 %v2702, 2147483648
  %v2767 = vxor.u32 %v2703, 2147483648
  %v2768 = vxor.u32 %v2704, 2147483648
  %v2769 = vxor.u32 %v2705, 2147483648
  %v2770 = vxor.u32 %v2706, 2147483648
  %v2771 = vxor.u32 %v2707, 2147483648
  %v2772 = vxor.u32 %v2708, 2147483648
  %v2773 = vxor.u32 %v2709, 2147483648
  %v2774 = vxor.u32 %v2710, 2147483648
  %v2775 = vxor.u32 %v2711, 2147483648
  %v2776 = vxor.u32 %v2712, 2147483648
  %v2777 = vxor.u32 %v2713, 2147483648
  %v2778 = vxor.u32 %v2714, 2147483648
  %v2779 = vxor.u32 %v2715, 2147483648
  %v2780 = vxor.u32 %v2716, 2147483648
  %v2781 = vxor.u32 %v2717, 2147483648
  %v2782 = vxor.u32 %v2718, 2147483648
  %v2783 = vxor.u32 %v2719, 2147483648
  %v2784 = vxor.u32 %v2720, 2147483648
  %v2785 = vxor.u32 %v2721, 2147483648
  %v2786 = vxor.u32 %v2722, 2147483648
  %v2787 = vxor.u32 %v2723, 2147483648
  %v2788 = vxor.u32 %v2724, 2147483648
  %v2789 = vxor.u32 %v2725, 2147483648
  %v2790 = vxor.u32 %v2726, 2147483648
  %v2791 = vxor.u32 %v2727, 2147483648
  %v2792 = vxor.u32 %v2728, 2147483648
  %v2793 = vxor.u32 %v2729, 2147483648
  %v2794 = vxor.u32 %v2730, 2147483648
  %v2795 = vxor.u32 %v2731, 2147483648
  %v2796 = vxor.u32 %v2732, 2147483648
  %v2797 = vxor.u32 %v2733, 2147483648
  %v2798 = vxor.u32 %v2734, 2147483648
  %v2799 = vxor.u32 %v2735, 2147483648
  %v2800 = vxor.u32 %v2736, 2147483648
  %v2801 = vxor.u32 %v2737, 2147483648
  %v2802 = vxor.u32 %v2738, 2147483648
  %v2803 = vxor.u32 %v2739, 2147483648
  %v2804 = vxor.u32 %v2740, 2147483648
  %v2805 = vxor.u32 %v2741, 2147483648
  %v2806 = vxor.u32 %v2742, 2147483648
  %v2807 = vxor.u32 %v2743, 2147483648
  %v2808 = vxor.u32 %v2744, 2147483648
  %v2809 = vxor.u32 %v2745, 2147483648
  %v2810 = vxor.u32 %v2746, 2147483648
  %v2811 = vxor.u32 %v2747, 2147483648
  %v2812 = vxor.u32 %v2748, 2147483648
  %v2813 = vxor.u32 %v2749, 2147483648
  %v2814 = vxor.u32 %v2750, 2147483648
  %v2815 = vmul.f32 %v2751, 1.442695
  %v2816 = vpow.pop %v2815
  %v2817 = vmul.f32 %v2752, 1.442695
  %v2818 = vpow.pop %v2817
  %v2819 = vmul.f32 %v2753, 1.442695
  %v2820 = vpow.pop %v2819
  %v2821 = vmul.f32 %v2754, 1.442695
  %v2822 = vpow.pop %v2821
  %v2823 = vmul.f32 %v2755, 1.442695
  %v2824 = vpow.pop %v2823
  %v2825 = vmul.f32 %v2756, 1.442695
  %v2826 = vpow.pop %v2825
  %v2827 = vmul.f32 %v2757, 1.442695
  %v2828 = vpow.pop %v2827
  %v2829 = vmul.f32 %v2758, 1.442695
  %v2830 = vpow.pop %v2829
  %v2831 = vmul.f32 %v2759, 1.442695
  %v2832 = vpow.pop %v2831
  %v2833 = vmul.f32 %v2760, 1.442695
  %v2834 = vpow.pop %v2833
  %v2835 = vmul.f32 %v2761, 1.442695
  %v2836 = vpow.pop %v2835
  %v2837 = vmul.f32 %v2762, 1.442695
  %v2838 = vpow.pop %v2837
  %v2839 = vmul.f32 %v2763, 1.442695
  %v2840 = vpow.pop %v2839
  %v2841 = vmul.f32 %v2764, 1.442695
  %v2842 = vpow.pop %v2841
  %v2843 = vmul.f32 %v2765, 1.442695
  %v2844 = vpow.pop %v2843
  %v2845 = vmul.f32 %v2766, 1.442695
  %v2846 = vpow.pop %v2845
  %v2847 = vmul.f32 %v2767, 1.442695
  %v2848 = vpow.pop %v2847
  %v2849 = vmul.f32 %v2768, 1.442695
  %v2850 = vpow.pop %v2849
  %v2851 = vmul.f32 %v2769, 1.442695
  %v2852 = vpow.pop %v2851
  %v2853 = vmul.f32 %v2770, 1.442695
  %v2854 = vpow.pop %v2853
  %v2855 = vmul.f32 %v2771, 1.442695
  %v2856 = vpow.pop %v2855
  %v2857 = vmul.f32 %v2772, 1.442695
  %v2858 = vpow.pop %v2857
  %v2859 = vmul.f32 %v2773, 1.442695
  %v2860 = vpow.pop %v2859
  %v2861 = vmul.f32 %v2774, 1.442695
  %v2862 = vpow.pop %v2861
  %v2863 = vmul.f32 %v2775, 1.442695
  %v2864 = vpow.pop %v2863
  %v2865 = vmul.f32 %v2776, 1.442695
  %v2866 = vpow.pop %v2865
  %v2867 = vmul.f32 %v2777, 1.442695
  %v2868 = vpow.pop %v2867
  %v2869 = vmul.f32 %v2778, 1.442695
  %v2870 = vpow.pop %v2869
  %v2871 = vmul.f32 %v2779, 1.442695
  %v2872 = vpow.pop %v2871
  %v2873 = vmul.f32 %v2780, 1.442695
  %v2874 = vpow.pop %v2873
  %v2875 = vmul.f32 %v2781, 1.442695
  %v2876 = vpow.pop %v2875
  %v2877 = vmul.f32 %v2782, 1.442695
  %v2878 = vpow.pop %v2877
  %v2879 = vmul.f32 %v2783, 1.442695
  %v2880 = vpow.pop %v2879
  %v2881 = vmul.f32 %v2784, 1.442695
  %v2882 = vpow.pop %v2881
  %v2883 = vmul.f32 %v2785, 1.442695
  %v2884 = vpow.pop %v2883
  %v2885 = vmul.f32 %v2786, 1.442695
  %v2886 = vpow.pop %v2885
  %v2887 = vmul.f32 %v2787, 1.442695
  %v2888 = vpow.pop %v2887
  %v2889 = vmul.f32 %v2788, 1.442695
  %v2890 = vpow.pop %v2889
  %v2891 = vmul.f32 %v2789, 1.442695
  %v2892 = vpow.pop %v2891
  %v2893 = vmul.f32 %v2790, 1.442695
  %v2894 = vpow.pop %v2893
  %v2895 = vmul.f32 %v2791, 1.442695
  %v2896 = vpow.pop %v2895
  %v2897 = vmul.f32 %v2792, 1.442695
  %v2898 = vpow.pop %v2897
  %v2899 = vmul.f32 %v2793, 1.442695
  %v2900 = vpow.pop %v2899
  %v2901 = vmul.f32 %v2794, 1.442695
  %v2902 = vpow.pop %v2901
  %v2903 = vmul.f32 %v2795, 1.442695
  %v2904 = vpow.pop %v2903
  %v2905 = vmul.f32 %v2796, 1.442695
  %v2906 = vpow.pop %v2905
  %v2907 = vmul.f32 %v2797, 1.442695
  %v2908 = vpow.pop %v2907
  %v2909 = vmul.f32 %v2798, 1.442695
  %v2910 = vpow.pop %v2909
  %v2911 = vmul.f32 %v2799, 1.442695
  %v2912 = vpow.pop %v2911
  %v2913 = vmul.f32 %v2800, 1.442695
  %v2914 = vpow.pop %v2913
  %v2915 = vmul.f32 %v2801, 1.442695
  %v2916 = vpow.pop %v2915
  %v2917 = vmul.f32 %v2802, 1.442695
  %v2918 = vpow.pop %v2917
  %v2919 = vmul.f32 %v2803, 1.442695
  %v2920 = vpow.pop %v2919
  %v2921 = vmul.f32 %v2804, 1.442695
  %v2922 = vpow.pop %v2921
  %v2923 = vmul.f32 %v2805, 1.442695
  %v2924 = vpow.pop %v2923
  %v2925 = vmul.f32 %v2806, 1.442695
  %v2926 = vpow.pop %v2925
  %v2927 = vmul.f32 %v2807, 1.442695
  %v2928 = vpow.pop %v2927
  %v2929 = vmul.f32 %v2808, 1.442695
  %v2930 = vpow.pop %v2929
  %v2931 = vmul.f32 %v2809, 1.442695
  %v2932 = vpow.pop %v2931
  %v2933 = vmul.f32 %v2810, 1.442695
  %v2934 = vpow.pop %v2933
  %v2935 = vmul.f32 %v2811, 1.442695
  %v2936 = vpow.pop %v2935
  %v2937 = vmul.f32 %v2812, 1.442695
  %v2938 = vpow.pop %v2937
  %v2939 = vmul.f32 %v2813, 1.442695
  %v2940 = vpow.pop %v2939
  %v2941 = vmul.f32 %v2814, 1.442695
  %v2942 = vpow.pop %v2941
  %v2943 = vadd.f32 %v2816, 1.0
  %v2944 = vadd.f32 %v2818, 1.0
  %v2945 = vadd.f32 %v2820, 1.0
  %v2946 = vadd.f32 %v2822, 1.0
  %v2947 = vadd.f32 %v2824, 1.0
  %v2948 = vadd.f32 %v2826, 1.0
  %v2949 = vadd.f32 %v2828, 1.0
  %v2950 = vadd.f32 %v2830, 1.0
  %v2951 = vadd.f32 %v2832, 1.0
  %v2952 = vadd.f32 %v2834, 1.0
  %v2953 = vadd.f32 %v2836, 1.0
  %v2954 = vadd.f32 %v2838, 1.0
  %v2955 = vadd.f32 %v2840, 1.0
  %v2956 = vadd.f32 %v2842, 1.0
  %v2957 = vadd.f32 %v2844, 1.0
  %v2958 = vadd.f32 %v2846, 1.0
  %v2959 = vadd.f32 %v2848, 1.0
  %v2960 = vadd.f32 %v2850, 1.0
  %v2961 = vadd.f32 %v2852, 1.0
  %v2962 = vadd.f32 %v2854, 1.0
  %v2963 = vadd.f32 %v2856, 1.0
  %v2964 = vadd.f32 %v2858, 1.0
  %v2965 = vadd.f32 %v2860, 1.0
  %v2966 = vadd.f32 %v2862, 1.0
  %v2967 = vadd.f32 %v2864, 1.0
  %v2968 = vadd.f32 %v2866, 1.0
  %v2969 = vadd.f32 %v2868, 1.0
  %v2970 = vadd.f32 %v2870, 1.0
  %v2971 = vadd.f32 %v2872, 1.0
  %v2972 = vadd.f32 %v2874, 1.0
  %v2973 = vadd.f32 %v2876, 1.0
  %v2974 = vadd.f32 %v2878, 1.0
  %v2975 = vadd.f32 %v2880, 1.0
  %v2976 = vadd.f32 %v2882, 1.0
  %v2977 = vadd.f32 %v2884, 1.0
  %v2978 = vadd.f32 %v2886, 1.0
  %v2979 = vadd.f32 %v2888, 1.0
  %v2980 = vadd.f32 %v2890, 1.0
  %v2981 = vadd.f32 %v2892, 1.0
  %v2982 = vadd.f32 %v2894, 1.0
  %v2983 = vadd.f32 %v2896, 1.0
  %v2984 = vadd.f32 %v2898, 1.0
  %v2985 = vadd.f32 %v2900, 1.0
  %v2986 = vadd.f32 %v2902, 1.0
  %v2987 = vadd.f32 %v2904, 1.0
  %v2988 = vadd.f32 %v2906, 1.0
  %v2989 = vadd.f32 %v2908, 1.0
  %v2990 = vadd.f32 %v2910, 1.0
  %v2991 = vadd.f32 %v2912, 1.0
  %v2992 = vadd.f32 %v2914, 1.0
  %v2993 = vadd.f32 %v2916, 1.0
  %v2994 = vadd.f32 %v2918, 1.0
  %v2995 = vadd.f32 %v2920, 1.0
  %v2996 = vadd.f32 %v2922, 1.0
  %v2997 = vadd.f32 %v2924, 1.0
  %v2998 = vadd.f32 %v2926, 1.0
  %v2999 = vadd.f32 %v2928, 1.0
  %v3000 = vadd.f32 %v2930, 1.0
  %v3001 = vadd.f32 %v2932, 1.0
  %v3002 = vadd.f32 %v2934, 1.0
  %v3003 = vadd.f32 %v2936, 1.0
  %v3004 = vadd.f32 %v2938, 1.0
  %v3005 = vadd.f32 %v2940, 1.0
  %v3006 = vadd.f32 %v2942, 1.0
  %v3007 = vrcp.pop %v2943
  %v3008 = vmul.f32 1.0, %v3007
  %v3009 = vrcp.pop %v2944
  %v3010 = vmul.f32 1.0, %v3009
  %v3011 = vrcp.pop %v2945
  %v3012 = vmul.f32 1.0, %v3011
  %v3013 = vrcp.pop %v2946
  %v3014 = vmul.f32 1.0, %v3013
  %v3015 = vrcp.pop %v2947
  %v3016 = vmul.f32 1.0, %v3015
  %v3017 = vrcp.pop %v2948
  %v3018 = vmul.f32 1.0, %v3017
  %v3019 = vrcp.pop %v2949
  %v3020 = vmul.f32 1.0, %v3019
  %v3021 = vrcp.pop %v2950
  %v3022 = vmul.f32 1.0, %v3021
  %v3023 = vrcp.pop %v2951
  %v3024 = vmul.f32 1.0, %v3023
  %v3025 = vrcp.pop %v2952
  %v3026 = vmul.f32 1.0, %v3025
  %v3027 = vrcp.pop %v2953
  %v3028 = vmul.f32 1.0, %v3027
  %v3029 = vrcp.pop %v2954
  %v3030 = vmul.f32 1.0, %v3029
  %v3031 = vrcp.pop %v2955
  %v3032 = vmul.f32 1.0, %v3031
  %v3033 = vrcp.pop %v2956
  %v3034 = vmul.f32 1.0, %v3033
  %v3035 = vrcp.pop %v2957
  %v3036 = vmul.f32 1.0, %v3035
  %v3037 = vrcp.pop %v2958
  %v3038 = vmul.f32 1.0, %v3037
  %v3039 = vrcp.pop %v2959
  %v3040 = vmul.f32 1.0, %v3039
  %v3041 = vrcp.pop %v2960
  %v3042 = vmul.f32 1.0, %v3041
  %v3043 = vrcp.pop %v2961
  %v3044 = vmul.f32 1.0, %v3043
  %v3045 = vrcp.pop %v2962
  %v3046 = vmul.f32 1.0, %v3045
  %v3047 = vrcp.pop %v2963
  %v3048 = vmul.f32 1.0, %v3047
  %v3049 = vrcp.pop %v2964
  %v3050 = vmul.f32 1.0, %v3049
  %v3051 = vrcp.pop %v2965
  %v3052 = vmul.f32 1.0, %v3051
  %v3053 = vrcp.pop %v2966
  %v3054 = vmul.f32 1.0, %v3053
  %v3055 = vrcp.pop %v2967
  %v3056 = vmul.f32 1.0, %v3055
  %v3057 = vrcp.pop %v2968
  %v3058 = vmul.f32 1.0, %v3057
  %v3059 = vrcp.pop %v2969
  %v3060 = vmul.f32 1.0, %v3059
  %v3061 = vrcp.pop %v2970
  %v3062 = vmul.f32 1.0, %v3061
  %v3063 = vrcp.pop %v2971
  %v3064 = vmul.f32 1.0, %v3063
  %v3065 = vrcp.pop %v2972
  %v3066 = vmul.f32 1.0, %v3065
  %v3067 = vrcp.pop %v2973
  %v3068 = vmul.f32 1.0, %v3067
  %v3069 = vrcp.pop %v2974
  %v3070 = vmul.f32 1.0, %v3069
  %v3071 = vrcp.pop %v2975
  %v3072 = vmul.f32 1.0, %v3071
  %v3073 = vrcp.pop %v2976
  %v3074 = vmul.f32 1.0, %v3073
  %v3075 = vrcp.pop %v2977
  %v3076 = vmul.f32 1.0, %v3075
  %v3077 = vrcp.pop %v2978
  %v3078 = vmul.f32 1.0, %v3077
  %v3079 = vrcp.pop %v2979
  %v3080 = vmul.f32 1.0, %v3079
  %v3081 = vrcp.pop %v2980
  %v3082 = vmul.f32 1.0, %v3081
  %v3083 = vrcp.pop %v2981
  %v3084 = vmul.f32 1.0, %v3083
  %v3085 = vrcp.pop %v2982
  %v3086 = vmul.f32 1.0, %v3085
  %v3087 = vrcp.pop %v2983
  %v3088 = vmul.f32 1.0, %v3087
  %v3089 = vrcp.pop %v2984
  %v3090 = vmul.f32 1.0, %v3089
  %v3091 = vrcp.pop %v2985
  %v3092 = vmul.f32 1.0, %v3091
  %v3093 = vrcp.pop %v2986
  %v3094 = vmul.f32 1.0, %v3093
  %v3095 = vrcp.pop %v2987
  %v3096 = vmul.f32 1.0, %v3095
  %v3097 = vrcp.pop %v2988
  %v3098 = vmul.f32 1.0, %v3097
  %v3099 = vrcp.pop %v2989
  %v3100 = vmul.f32 1.0, %v3099
  %v3101 = vrcp.pop %v2990
  %v3102 = vmul.f32 1.0, %v3101
  %v3103 = vrcp.pop %v2991
  %v3104 = vmul.f32 1.0, %v3103
  %v3105 = vrcp.pop %v2992
  %v3106 = vmul.f32 1.0, %v3105
  %v3107 = vrcp.pop %v2993
  %v3108 = vmul.f32 1.0, %v3107
  %v3109 = vrcp.pop %v2994
  %v3110 = vmul.f32 1.0, %v3109
  %v3111 = vrcp.pop %v2995
  %v3112 = vmul.f32 1.0, %v3111
  %v3113 = vrcp.pop %v2996
  %v3114 = vmul.f32 1.0, %v3113
  %v3115 = vrcp.pop %v2997
  %v3116 = vmul.f32 1.0, %v3115
  %v3117 = vrcp.pop %v2998
  %v3118 = vmul.f32 1.0, %v3117
  %v3119 = vrcp.pop %v2999
  %v3120 = vmul.f32 1.0, %v3119
  %v3121 = vrcp.pop %v3000
  %v3122 = vmul.f32 1.0, %v3121
  %v3123 = vrcp.pop %v3001
  %v3124 = vmul.f32 1.0, %v3123
  %v3125 = vrcp.pop %v3002
  %v3126 = vmul.f32 1.0, %v3125
  %v3127 = vrcp.pop %v3003
  %v3128 = vmul.f32 1.0, %v3127
  %v3129 = vrcp.pop %v3004
  %v3130 = vmul.f32 1.0, %v3129
  %v3131 = vrcp.pop %v3005
  %v3132 = vmul.f32 1.0, %v3131
  %v3133 = vrcp.pop %v3006
  %v3134 = vmul.f32 1.0, %v3133
  %3199 = vrot.lane.b32.xlu0 %v3008, 118
  %v3200 = vpop.permute.xlu0 %3199
  %3201 = vrot.lane.b32.xlu0 %v3010, 118
  %v3202 = vpop.permute.xlu0 %3201
  %3203 = vrot.lane.b32.xlu0 %v3012, 118
  %v3204 = vpop.permute.xlu0 %3203
  %3205 = vrot.lane.b32.xlu0 %v3014, 118
  %v3206 = vpop.permute.xlu0 %3205
  %3207 = vrot.lane.b32.xlu0 %v3016, 118
  %v3208 = vpop.permute.xlu0 %3207
  %3209 = vrot.lane.b32.xlu0 %v3018, 118
  %v3210 = vpop.permute.xlu0 %3209
  %3211 = vrot.lane.b32.xlu0 %v3020, 118
  %v3212 = vpop.permute.xlu0 %3211
  %3213 = vrot.lane.b32.xlu0 %v3022, 118
  %v3214 = vpop.permute.xlu0 %3213
  %3215 = vrot.lane.b32.xlu0 %v3024, 118
  %v3216 = vpop.permute.xlu0 %3215
  %3217 = vrot.lane.b32.xlu0 %v3026, 118
  %v3218 = vpop.permute.xlu0 %3217
  %3219 = vrot.lane.b32.xlu0 %v3028, 118
  %v3220 = vpop.permute.xlu0 %3219
  %3221 = vrot.lane.b32.xlu0 %v3030, 118
  %v3222 = vpop.permute.xlu0 %3221
  %3223 = vrot.lane.b32.xlu0 %v3032, 118
  %v3224 = vpop.permute.xlu0 %3223
  %3225 = vrot.lane.b32.xlu0 %v3034, 118
  %v3226 = vpop.permute.xlu0 %3225
  %3227 = vrot.lane.b32.xlu0 %v3036, 118
  %v3228 = vpop.permute.xlu0 %3227
  %3229 = vrot.lane.b32.xlu0 %v3038, 118
  %v3230 = vpop.permute.xlu0 %3229
  %3231 = vrot.lane.b32.xlu0 %v3040, 118
  %v3232 = vpop.permute.xlu0 %3231
  %3233 = vrot.lane.b32.xlu0 %v3042, 118
  %v3234 = vpop.permute.xlu0 %3233
  %3235 = vrot.lane.b32.xlu0 %v3044, 118
  %v3236 = vpop.permute.xlu0 %3235
  %3237 = vrot.lane.b32.xlu0 %v3046, 118
  %v3238 = vpop.permute.xlu0 %3237
  %3239 = vrot.lane.b32.xlu0 %v3048, 118
  %v3240 = vpop.permute.xlu0 %3239
  %3241 = vrot.lane.b32.xlu0 %v3050, 118
  %v3242 = vpop.permute.xlu0 %3241
  %3243 = vrot.lane.b32.xlu0 %v3052, 118
  %v3244 = vpop.permute.xlu0 %3243
  %3245 = vrot.lane.b32.xlu0 %v3054, 118
  %v3246 = vpop.permute.xlu0 %3245
  %3247 = vrot.lane.b32.xlu0 %v3056, 118
  %v3248 = vpop.permute.xlu0 %3247
  %3249 = vrot.lane.b32.xlu0 %v3058, 118
  %v3250 = vpop.permute.xlu0 %3249
  %3251 = vrot.lane.b32.xlu0 %v3060, 118
  %v3252 = vpop.permute.xlu0 %3251
  %3253 = vrot.lane.b32.xlu0 %v3062, 118
  %v3254 = vpop.permute.xlu0 %3253
  %3255 = vrot.lane.b32.xlu0 %v3064, 118
  %v3256 = vpop.permute.xlu0 %3255
  %3257 = vrot.lane.b32.xlu0 %v3066, 118
  %v3258 = vpop.permute.xlu0 %3257
  %3259 = vrot.lane.b32.xlu0 %v3068, 118
  %v3260 = vpop.permute.xlu0 %3259
  %3261 = vrot.lane.b32.xlu0 %v3070, 118
  %v3262 = vpop.permute.xlu0 %3261
  %3263 = vrot.lane.b32.xlu0 %v3072, 118
  %v3264 = vpop.permute.xlu0 %3263
  %3265 = vrot.lane.b32.xlu0 %v3074, 118
  %v3266 = vpop.permute.xlu0 %3265
  %3267 = vrot.lane.b32.xlu0 %v3076, 118
  %v3268 = vpop.permute.xlu0 %3267
  %3269 = vrot.lane.b32.xlu0 %v3078, 118
  %v3270 = vpop.permute.xlu0 %3269
  %3271 = vrot.lane.b32.xlu0 %v3080, 118
  %v3272 = vpop.permute.xlu0 %3271
  %3273 = vrot.lane.b32.xlu0 %v3082, 118
  %v3274 = vpop.permute.xlu0 %3273
  %3275 = vrot.lane.b32.xlu0 %v3084, 118
  %v3276 = vpop.permute.xlu0 %3275
  %3277 = vrot.lane.b32.xlu0 %v3086, 118
  %v3278 = vpop.permute.xlu0 %3277
  %3279 = vrot.lane.b32.xlu0 %v3088, 118
  %v3280 = vpop.permute.xlu0 %3279
  %3281 = vrot.lane.b32.xlu0 %v3090, 118
  %v3282 = vpop.permute.xlu0 %3281
  %3283 = vrot.lane.b32.xlu0 %v3092, 118
  %v3284 = vpop.permute.xlu0 %3283
  %3285 = vrot.lane.b32.xlu0 %v3094, 118
  %v3286 = vpop.permute.xlu0 %3285
  %3287 = vrot.lane.b32.xlu0 %v3096, 118
  %v3288 = vpop.permute.xlu0 %3287
  %3289 = vrot.lane.b32.xlu0 %v3098, 118
  %v3290 = vpop.permute.xlu0 %3289
  %3291 = vrot.lane.b32.xlu0 %v3100, 118
  %v3292 = vpop.permute.xlu0 %3291
  %3293 = vrot.lane.b32.xlu0 %v3102, 118
  %v3294 = vpop.permute.xlu0 %3293
  %3295 = vrot.lane.b32.xlu0 %v3104, 118
  %v3296 = vpop.permute.xlu0 %3295
  %3297 = vrot.lane.b32.xlu0 %v3106, 118
  %v3298 = vpop.permute.xlu0 %3297
  %3299 = vrot.lane.b32.xlu0 %v3108, 118
  %v3300 = vpop.permute.xlu0 %3299
  %3301 = vrot.lane.b32.xlu0 %v3110, 118
  %v3302 = vpop.permute.xlu0 %3301
  %3303 = vrot.lane.b32.xlu0 %v3112, 118
  %v3304 = vpop.permute.xlu0 %3303
  %3305 = vrot.lane.b32.xlu0 %v3114, 118
  %v3306 = vpop.permute.xlu0 %3305
  %3307 = vrot.lane.b32.xlu0 %v3116, 118
  %v3308 = vpop.permute.xlu0 %3307
  %3309 = vrot.lane.b32.xlu0 %v3118, 118
  %v3310 = vpop.permute.xlu0 %3309
  %3311 = vrot.lane.b32.xlu0 %v3120, 118
  %v3312 = vpop.permute.xlu0 %3311
  %3313 = vrot.lane.b32.xlu0 %v3122, 118
  %v3314 = vpop.permute.xlu0 %3313
  %3315 = vrot.lane.b32.xlu0 %v3124, 118
  %v3316 = vpop.permute.xlu0 %3315
  %3317 = vrot.lane.b32.xlu0 %v3126, 118
  %v3318 = vpop.permute.xlu0 %3317
  %3319 = vrot.lane.b32.xlu0 %v3128, 118
  %v3320 = vpop.permute.xlu0 %3319
  %3321 = vrot.lane.b32.xlu0 %v3130, 118
  %v3322 = vpop.permute.xlu0 %3321
  %3323 = vrot.lane.b32.xlu0 %v3132, 118
  %v3324 = vpop.permute.xlu0 %3323
  %3325 = vrot.lane.b32.xlu0 %v3134, 118
  %v3326 = vpop.permute.xlu0 %3325
  %vm3391 = vcmask 7168
  %3392 = vst.msk [vmem:[%s8] sm:$0xff] %vm3391, %v3200
  %3393 = vst.msk [vmem:[%s8 + $0x8] sm:$0xff] %vm3391, %v3202
  %3394 = vst.msk [vmem:[%s8 + $0x10] sm:$0xff] %vm3391, %v3204
  %3395 = vst.msk [vmem:[%s8 + $0x18] sm:$0xff] %vm3391, %v3206
  %3396 = vst.msk [vmem:[%s8 + $0x20] sm:$0xff] %vm3391, %v3208
  %3397 = vst.msk [vmem:[%s8 + $0x28] sm:$0xff] %vm3391, %v3210
  %3398 = vst.msk [vmem:[%s8 + $0x30] sm:$0xff] %vm3391, %v3212
  %3399 = vst.msk [vmem:[%s8 + $0x38] sm:$0xff] %vm3391, %v3214
  %3400 = vst.msk [vmem:[%s8 + $0x40] sm:$0xff] %vm3391, %v3216
  %3401 = vst.msk [vmem:[%s8 + $0x48] sm:$0xff] %vm3391, %v3218
  %3402 = vst.msk [vmem:[%s8 + $0x50] sm:$0xff] %vm3391, %v3220
  %3403 = vst.msk [vmem:[%s8 + $0x58] sm:$0xff] %vm3391, %v3222
  %3404 = vst.msk [vmem:[%s8 + $0x60] sm:$0xff] %vm3391, %v3224
  %3405 = vst.msk [vmem:[%s8 + $0x68] sm:$0xff] %vm3391, %v3226
  %3406 = vst.msk [vmem:[%s8 + $0x70] sm:$0xff] %vm3391, %v3228
  %3407 = vst.msk [vmem:[%s8 + $0x78] sm:$0xff] %vm3391, %v3230
  %3408 = vst.msk [vmem:[%s8 + $0x80] sm:$0xff] %vm3391, %v3232
  %3409 = vst.msk [vmem:[%s8 + $0x88] sm:$0xff] %vm3391, %v3234
  %3410 = vst.msk [vmem:[%s8 + $0x90] sm:$0xff] %vm3391, %v3236
  %3411 = vst.msk [vmem:[%s8 + $0x98] sm:$0xff] %vm3391, %v3238
  %3412 = vst.msk [vmem:[%s8 + $0xa0] sm:$0xff] %vm3391, %v3240
  %3413 = vst.msk [vmem:[%s8 + $0xa8] sm:$0xff] %vm3391, %v3242
  %3414 = vst.msk [vmem:[%s8 + $0xb0] sm:$0xff] %vm3391, %v3244
  %3415 = vst.msk [vmem:[%s8 + $0xb8] sm:$0xff] %vm3391, %v3246
  %3416 = vst.msk [vmem:[%s8 + $0xc0] sm:$0xff] %vm3391, %v3248
  %3417 = vst.msk [vmem:[%s8 + $0xc8] sm:$0xff] %vm3391, %v3250
  %3418 = vst.msk [vmem:[%s8 + $0xd0] sm:$0xff] %vm3391, %v3252
  %3419 = vst.msk [vmem:[%s8 + $0xd8] sm:$0xff] %vm3391, %v3254
  %3420 = vst.msk [vmem:[%s8 + $0xe0] sm:$0xff] %vm3391, %v3256
  %3421 = vst.msk [vmem:[%s8 + $0xe8] sm:$0xff] %vm3391, %v3258
  %3422 = vst.msk [vmem:[%s8 + $0xf0] sm:$0xff] %vm3391, %v3260
  %3423 = vst.msk [vmem:[%s8 + $0xf8] sm:$0xff] %vm3391, %v3262
  %3424 = vst.msk [vmem:[%s8 + $0x100] sm:$0xff] %vm3391, %v3264
  %3425 = vst.msk [vmem:[%s8 + $0x108] sm:$0xff] %vm3391, %v3266
  %3426 = vst.msk [vmem:[%s8 + $0x110] sm:$0xff] %vm3391, %v3268
  %3427 = vst.msk [vmem:[%s8 + $0x118] sm:$0xff] %vm3391, %v3270
  %3428 = vst.msk [vmem:[%s8 + $0x120] sm:$0xff] %vm3391, %v3272
  %3429 = vst.msk [vmem:[%s8 + $0x128] sm:$0xff] %vm3391, %v3274
  %3430 = vst.msk [vmem:[%s8 + $0x130] sm:$0xff] %vm3391, %v3276
  %3431 = vst.msk [vmem:[%s8 + $0x138] sm:$0xff] %vm3391, %v3278
  %3432 = vst.msk [vmem:[%s8 + $0x140] sm:$0xff] %vm3391, %v3280
  %3433 = vst.msk [vmem:[%s8 + $0x148] sm:$0xff] %vm3391, %v3282
  %3434 = vst.msk [vmem:[%s8 + $0x150] sm:$0xff] %vm3391, %v3284
  %3435 = vst.msk [vmem:[%s8 + $0x158] sm:$0xff] %vm3391, %v3286
  %3436 = vst.msk [vmem:[%s8 + $0x160] sm:$0xff] %vm3391, %v3288
  %3437 = vst.msk [vmem:[%s8 + $0x168] sm:$0xff] %vm3391, %v3290
  %3438 = vst.msk [vmem:[%s8 + $0x170] sm:$0xff] %vm3391, %v3292
  %3439 = vst.msk [vmem:[%s8 + $0x178] sm:$0xff] %vm3391, %v3294
  %3440 = vst.msk [vmem:[%s8 + $0x180] sm:$0xff] %vm3391, %v3296
  %3441 = vst.msk [vmem:[%s8 + $0x188] sm:$0xff] %vm3391, %v3298
  %3442 = vst.msk [vmem:[%s8 + $0x190] sm:$0xff] %vm3391, %v3300
  %3443 = vst.msk [vmem:[%s8 + $0x198] sm:$0xff] %vm3391, %v3302
  %3444 = vst.msk [vmem:[%s8 + $0x1a0] sm:$0xff] %vm3391, %v3304
  %3445 = vst.msk [vmem:[%s8 + $0x1a8] sm:$0xff] %vm3391, %v3306
  %3446 = vst.msk [vmem:[%s8 + $0x1b0] sm:$0xff] %vm3391, %v3308
  %3447 = vst.msk [vmem:[%s8 + $0x1b8] sm:$0xff] %vm3391, %v3310
  %3448 = vst.msk [vmem:[%s8 + $0x1c0] sm:$0xff] %vm3391, %v3312
  %3449 = vst.msk [vmem:[%s8 + $0x1c8] sm:$0xff] %vm3391, %v3314
  %3450 = vst.msk [vmem:[%s8 + $0x1d0] sm:$0xff] %vm3391, %v3316
  %3451 = vst.msk [vmem:[%s8 + $0x1d8] sm:$0xff] %vm3391, %v3318
  %3452 = vst.msk [vmem:[%s8 + $0x1e0] sm:$0xff] %vm3391, %v3320
  %3453 = vst.msk [vmem:[%s8 + $0x1e8] sm:$0xff] %vm3391, %v3322
  %3454 = vst.msk [vmem:[%s8 + $0x1f0] sm:$0xff] %vm3391, %v3324
  %3455 = vst.msk [vmem:[%s8 + $0x1f8] sm:$0xff] %vm3391, %v3326
  // Predicated region
  $region34: #{nfm_forward.1} parent=0 // pred_check
    _
  $region35: #{nfm_forward.1} parent=0 // pred_check_branch
    %3457 = sbr.rel (0) target = $region37
  $region36: #{nfm_forward.1} parent=0 // pred_region
    _
  $region37: #{nfm_forward.1} parent=0 // pred_fallthru
    _
  // Predicated region
  $region38: #{nfm_forward.1} parent=0 // pred_check
    _
  $region39: #{nfm_forward.1} parent=0 // pred_check_branch
    %3459 = sbr.rel (0) target = $region41
  $region40: #{nfm_forward.1} parent=0 // pred_region
    _
  $region41: #{nfm_forward.1} parent=0 // pred_fallthru
    _

</llo_original>
